<compile_context>
chip_gen: v7x
topology: tpu7x:2x2x1
jax: 0.10.0
libtpu: 0.0.40
codegen_flags: <defaults>
</compile_context>

<pallas_src>
import jax
import jax.numpy as jnp
from jax.experimental import pallas as pl
from jax.experimental.pallas import tpu as pltpu


# ----------------------------- Pallas kernels ------------------------------


def _conv_pool_relu_kernel(col_ref, w_ref, b_ref, o_ref):
    """Fused 3x3 conv (phase-major im2col matmul) + bias + 2x2 maxpool + ReLU.

    col_ref: (4, TM, 9*Cin) bf16  -- one im2col block per 2x2 pool phase
    w_ref  : (9*Cin, Cout)  bf16
    b_ref  : (1, Cout)      f32
    o_ref  : (TM, Cout)     bf16  -- pooled + ReLU'd activation
    """
    w = w_ref[...]
    acc = jnp.dot(col_ref[0], w, preferred_element_type=jnp.float32)
    for p in range(1, 4):  # static unroll over the 4 pool phases
        acc = jnp.maximum(
            acc, jnp.dot(col_ref[p], w, preferred_element_type=jnp.float32)
        )
    # Bias is constant across a pooling window, so adding it after the max is
    # exactly relu(maxpool(conv(x) + b)).  Epilogue stays in f32.
    acc = acc + b_ref[...]
    o_ref[...] = jnp.maximum(acc, 0.0).astype(o_ref.dtype)


def _fc_stack_kernel(x_ref, w1_ref, b1_ref, w2_ref, b2_ref, w3_ref, b3_ref, o_ref):
    """Fused fc1+ReLU -> fc2+ReLU -> fc3 -> log_softmax (weights VMEM-resident)."""
    h = jnp.dot(x_ref[...], w1_ref[...], preferred_element_type=jnp.float32)
    h = jnp.maximum(h + b1_ref[...], 0.0).astype(jnp.bfloat16)
    h = jnp.dot(h, w2_ref[...], preferred_element_type=jnp.float32)
    h = jnp.maximum(h + b2_ref[...], 0.0).astype(jnp.bfloat16)
    z = jnp.dot(h, w3_ref[...], preferred_element_type=jnp.float32) + b3_ref[...]
    m = jnp.max(z, axis=-1, keepdims=True)
    s = z - m
    lse = jnp.log(jnp.sum(jnp.exp(s), axis=-1, keepdims=True))
    o_ref[...] = s - lse


# ------------------------------- helpers ------------------------------------


def _pick_tile(m, cap=512):
    """Largest row-tile <= cap that divides m (multiple of 8 when tiling)."""
    if m <= cap:
        return m
    t = cap - (cap % 8)
    while t >= 8:
        if m % t == 0:
            return t
        t -= 8
    return m


def _phase_cols(x_nhwc):
    """Phase-major im2col for a 3x3/pad-1 conv followed by 2x2 max-pool.

    Returns (4, B*Ho*Wo, 9*Cin) bf16.  Phase p=(dy,dx) row (b,ho,wo) holds the
    9*Cin patch feeding conv output pixel (2*ho+dy, 2*wo+dx).
    """
    B, H, W, Cin = x_nhwc.shape
    Ho, Wo = H // 2, W // 2
    xp = jnp.pad(x_nhwc, ((0, 0), (1, 1), (1, 1), (0, 0)))
    cols = []
    for dy in range(2):
        for dx in range(2):
            patches = [
                xp[:, dy + ky : dy + ky + H : 2, dx + kx : dx + kx + W : 2, :]
                for ky in range(3)
                for kx in range(3)
            ]
            col = jnp.concatenate(patches, axis=-1).reshape(B * Ho * Wo, 9 * Cin)
            cols.append(col)
    return jnp.stack(cols, axis=0).astype(jnp.bfloat16)


# --------------------------- fused layer wrappers ----------------------------


def conv3x3_pool_relu(x_nhwc, w_col, b):
    """relu(max_pool2d(conv3x3_pad1(x), 2)) as one fused Pallas call.

    w_col: (9*Cin, Cout) bf16 in (ky, kx, cin) K-order
           (PyTorch (Cout,Cin,3,3) -> w.transpose(2,3,1,0).reshape(9*Cin,Cout)).
    """
    B, H, W, Cin = x_nhwc.shape
    assert H % 2 == 0 and W % 2 == 0, "maxpool2 requires even spatial dims"
    Cout = w_col.shape[1]
    Ho, Wo = H // 2, W // 2
    M, K = B * Ho * Wo, 9 * Cin
    cols = _phase_cols(x_nhwc)  # (4, M, K) bf16
    TM = _pick_tile(M)
    b2 = b.reshape(1, Cout).astype(jnp.float32)
    out = pl.pallas_call(
        _conv_pool_relu_kernel,
        out_shape=jax.ShapeDtypeStruct((M, Cout), jnp.bfloat16),
        grid=(M // TM,),
        in_specs=[
            pl.BlockSpec((4, TM, K), lambda i: (0, i, 0)),
            pl.BlockSpec((K, Cout), lambda i: (0, 0)),
            pl.BlockSpec((1, Cout), lambda i: (0, 0)),
        ],
        out_specs=pl.BlockSpec((TM, Cout), lambda i: (i, 0)),
        compiler_params=pltpu.CompilerParams(dimension_semantics=("parallel",)),
    )(cols, w_col, b2)
    return out.reshape(B, Ho, Wo, Cout)


def fc_stack_log_softmax(x, params):
    """log_softmax(fc3(relu(fc2(relu(fc1(x)))))) as one fused Pallas call."""
    B, D = x.shape
    w1, w2, w3 = params["fc1_w"], params["fc2_w"], params["fc3_w"]
    b1 = params["fc1_b"].reshape(1, -1)
    b2 = params["fc2_b"].reshape(1, -1)
    b3 = params["fc3_b"].reshape(1, -1)
    N = w3.shape[1]
    TB = _pick_tile(B)
    return pl.pallas_call(
        _fc_stack_kernel,
        out_shape=jax.ShapeDtypeStruct((B, N), jnp.float32),
        grid=(B // TB,),
        in_specs=[
            pl.BlockSpec((TB, D), lambda i: (i, 0)),
            pl.BlockSpec(w1.shape, lambda i: (0, 0)),
            pl.BlockSpec(b1.shape, lambda i: (0, 0)),
            pl.BlockSpec(w2.shape, lambda i: (0, 0)),
            pl.BlockSpec(b2.shape, lambda i: (0, 0)),
            pl.BlockSpec(w3.shape, lambda i: (0, 0)),
            pl.BlockSpec(b3.shape, lambda i: (0, 0)),
        ],
        out_specs=pl.BlockSpec((TB, N), lambda i: (i, 0)),
        compiler_params=pltpu.CompilerParams(dimension_semantics=("parallel",)),
    )(x.astype(jnp.bfloat16), w1, b1, w2, b2, w3, b3)


# ------------------------------- parameters ---------------------------------


def init_params(key):
    params = {}
    conv_dims = [(1, 32), (32, 64), (64, 128), (128, 256)]
    fc_dims = [(256, 512), (512, 128), (128, 10)]
    keys = jax.random.split(key, len(conv_dims) + len(fc_dims))
    for i, (cin, cout) in enumerate(conv_dims):
        k = keys[i]
        fan_in = 9 * cin
        # weight stored directly in im2col layout (ky, kx, cin) x cout, bf16
        w = jax.random.normal(k, (fan_in, cout), jnp.float32) * (1.0 / fan_in) ** 0.5
        params[f"conv{i+1}_w"] = w.astype(jnp.bfloat16)
        params[f"conv{i+1}_b"] = jnp.zeros((cout,), jnp.float32)
    for j, (din, dout) in enumerate(fc_dims):
        k = keys[len(conv_dims) + j]
        w = jax.random.normal(k, (din, dout), jnp.float32) * (1.0 / din) ** 0.5
        params[f"fc{j+1}_w"] = w.astype(jnp.bfloat16)
        params[f"fc{j+1}_b"] = jnp.zeros((dout,), jnp.float32)
    return params


# --------------------------------- forward ----------------------------------


def complex_cnn_forward(x_nchw, params):
    # NCHW -> NHWC (channels-last -> lane axis), bf16 for MXU/DMA.
    x = jnp.transpose(x_nchw, (0, 2, 3, 1)).astype(jnp.bfloat16)
    for i in range(1, 5):
        x = conv3x3_pool_relu(x, params[f"conv{i}_w"], params[f"conv{i}_b"])
    B, Hh, Ww, C = x.shape
    # PyTorch's x.view(-1, 256) only matches the NHWC flatten because spatial
    # has collapsed to 1x1 for a 16x16 input; guard it explicitly.
    assert Hh == 1 and Ww == 1 and C == 256, (Hh, Ww, C)
    x = x.reshape(B, C)
    return fc_stack_log_softmax(x, params)


# ----------------------------------- main ------------------------------------

if __name__ == "__main__":
    key = jax.random.PRNGKey(0)
    k_param, k_input = jax.random.split(key)
    params = init_params(k_param)

    # fc1 expects 256*1*1 features => input spatial must be 16x16, 1 channel.
    x = jax.random.normal(k_input, (2, 1, 16, 16), jnp.float32)

    fwd = jax.jit(complex_cnn_forward)
    out = jax.block_until_ready(fwd(x, params))
    assert out.shape == (2, 10), out.shape
    # rows of log_softmax should (approximately) exp-sum to 1
    assert bool(jnp.allclose(jnp.exp(out).sum(axis=1), 1.0, atol=1e-4))
    print("KERNEL_OK")
</pallas_src>

<mosaic_0001>
module attributes {stable_mosaic.version = 11 : i64} {
  func.func @_conv_pool_relu_kernel(%arg0: i32, %arg1: memref<4x128x9xbf16, #tpu.memory_space<vmem>>, %arg2: memref<9x32xbf16, #tpu.memory_space<vmem>>, %arg3: memref<1x32xf32, #tpu.memory_space<vmem>>, %arg4: memref<128x32xbf16, #tpu.memory_space<vmem>>) attributes {dimension_semantics = [#tpu.dimension_semantics<parallel>], iteration_bounds = array<i64: 1>, scalar_prefetch = 0 : i64, scratch_operands = 0 : i64, tpu.core_type = #tpu.core_type<tc>, window_params = [{transform_indices = @transform_0, window_bounds = array<i64: 4, 128, 9>}, {pipeline_mode = #tpu.pipeline_mode<synchronous>, transform_indices = @transform_1, window_bounds = array<i64: 9, 32>}, {pipeline_mode = #tpu.pipeline_mode<synchronous>, transform_indices = @transform_2, window_bounds = array<i64: 1, 32>}, {transform_indices = @transform_3, window_bounds = array<i64: 128, 32>}]} {
    %c0 = arith.constant 0 : index
    %c0_0 = arith.constant 0 : index
    %0 = vector.load %arg2[%c0, %c0_0] : memref<9x32xbf16, #tpu.memory_space<vmem>>, vector<9x32xbf16>
    %c0_1 = arith.constant 0 : index
    %c0_2 = arith.constant 0 : index
    %c0_3 = arith.constant 0 : index
    %1 = vector.load %arg1[%c0_1, %c0_2, %c0_3] : memref<4x128x9xbf16, #tpu.memory_space<vmem>>, vector<1x128x9xbf16>
    %2 = vector.shape_cast %1 : vector<1x128x9xbf16> to vector<128x9xbf16>
    %cst = arith.constant dense<0.000000e+00> : vector<128x32xf32>
    %3 = tpu.matmul %2, %0, %cst {dimension_numbers = #tpu.dot_dimension_numbers<[1], [0], [0], [1], [0, 0, 1, 1], [], []>} : vector<128x9xbf16>, vector<9x32xbf16>, vector<128x32xf32> -> vector<128x32xf32>
    %c1 = arith.constant 1 : index
    %c0_4 = arith.constant 0 : index
    %c0_5 = arith.constant 0 : index
    %4 = vector.load %arg1[%c1, %c0_4, %c0_5] : memref<4x128x9xbf16, #tpu.memory_space<vmem>>, vector<1x128x9xbf16>
    %5 = vector.shape_cast %4 : vector<1x128x9xbf16> to vector<128x9xbf16>
    %cst_6 = arith.constant dense<0.000000e+00> : vector<128x32xf32>
    %6 = tpu.matmul %5, %0, %cst_6 {dimension_numbers = #tpu.dot_dimension_numbers<[1], [0], [0], [1], [0, 0, 1, 1], [], []>} : vector<128x9xbf16>, vector<9x32xbf16>, vector<128x32xf32> -> vector<128x32xf32>
    %7 = arith.maximumf %3, %6 : vector<128x32xf32>
    %c2 = arith.constant 2 : index
    %c0_7 = arith.constant 0 : index
    %c0_8 = arith.constant 0 : index
    %8 = vector.load %arg1[%c2, %c0_7, %c0_8] : memref<4x128x9xbf16, #tpu.memory_space<vmem>>, vector<1x128x9xbf16>
    %9 = vector.shape_cast %8 : vector<1x128x9xbf16> to vector<128x9xbf16>
    %cst_9 = arith.constant dense<0.000000e+00> : vector<128x32xf32>
    %10 = tpu.matmul %9, %0, %cst_9 {dimension_numbers = #tpu.dot_dimension_numbers<[1], [0], [0], [1], [0, 0, 1, 1], [], []>} : vector<128x9xbf16>, vector<9x32xbf16>, vector<128x32xf32> -> vector<128x32xf32>
    %11 = arith.maximumf %7, %10 : vector<128x32xf32>
    %c3 = arith.constant 3 : index
    %c0_10 = arith.constant 0 : index
    %c0_11 = arith.constant 0 : index
    %12 = vector.load %arg1[%c3, %c0_10, %c0_11] : memref<4x128x9xbf16, #tpu.memory_space<vmem>>, vector<1x128x9xbf16>
    %13 = vector.shape_cast %12 : vector<1x128x9xbf16> to vector<128x9xbf16>
    %cst_12 = arith.constant dense<0.000000e+00> : vector<128x32xf32>
    %14 = tpu.matmul %13, %0, %cst_12 {dimension_numbers = #tpu.dot_dimension_numbers<[1], [0], [0], [1], [0, 0, 1, 1], [], []>} : vector<128x9xbf16>, vector<9x32xbf16>, vector<128x32xf32> -> vector<128x32xf32>
    %15 = arith.maximumf %11, %14 : vector<128x32xf32>
    %c0_13 = arith.constant 0 : index
    %c0_14 = arith.constant 0 : index
    %16 = vector.load %arg3[%c0_13, %c0_14] : memref<1x32xf32, #tpu.memory_space<vmem>>, vector<1x32xf32>
    %17 = vector.broadcast %16 : vector<1x32xf32> to vector<128x32xf32>
    %18 = arith.addf %15, %17 : vector<128x32xf32>
    %cst_15 = arith.constant 0.000000e+00 : f32
    %19 = vector.broadcast %cst_15 : f32 to vector<128x32xf32>
    %20 = arith.maximumf %18, %19 : vector<128x32xf32>
    %21 = arith.truncf %20 : vector<128x32xf32> to vector<128x32xbf16>
    %c0_16 = arith.constant 0 : index
    %c0_17 = arith.constant 0 : index
    %22 = vector.load %arg4[%c0_16, %c0_17] : memref<128x32xbf16, #tpu.memory_space<vmem>>, vector<128x32xbf16>
    tpu.vector_store %arg4[%c0_16, %c0_17], %21 {strides = array<i32>} : memref<128x32xbf16, #tpu.memory_space<vmem>>, vector<128x32xbf16>,
    return
  }
  func.func @transform_0(%arg0: i32) -> (i32, i32, i32) {
    %c0_i32 = arith.constant 0 : i32
    %c0_i32_0 = arith.constant 0 : i32
    %c0_i32_1 = arith.constant 0 : i32
    return %c0_i32, %arg0, %c0_i32_0 : i32, i32, i32
  }
  func.func @transform_1(%arg0: i32) -> (i32, i32) {
    %c0_i32 = arith.constant 0 : i32
    %c0_i32_0 = arith.constant 0 : i32
    %c0_i32_1 = arith.constant 0 : i32
    return %c0_i32, %c0_i32_0 : i32, i32
  }
  func.func @transform_2(%arg0: i32) -> (i32, i32) {
    %c0_i32 = arith.constant 0 : i32
    %c0_i32_0 = arith.constant 0 : i32
    %c0_i32_1 = arith.constant 0 : i32
    return %c0_i32, %c0_i32_0 : i32, i32
  }
  func.func @transform_3(%arg0: i32) -> (i32, i32) {
    %c0_i32 = arith.constant 0 : i32
    %c0_i32_0 = arith.constant 0 : i32
    return %arg0, %c0_i32 : i32, i32
  }
}

module attributes {stable_mosaic.version = 11 : i64} {
  func.func @_conv_pool_relu_kernel(%arg0: i32, %arg1: memref<4x32x288xbf16, #tpu.memory_space<vmem>>, %arg2: memref<288x64xbf16, #tpu.memory_space<vmem>>, %arg3: memref<1x64xf32, #tpu.memory_space<vmem>>, %arg4: memref<32x64xbf16, #tpu.memory_space<vmem>>) attributes {dimension_semantics = [#tpu.dimension_semantics<parallel>], iteration_bounds = array<i64: 1>, scalar_prefetch = 0 : i64, scratch_operands = 0 : i64, tpu.core_type = #tpu.core_type<tc>, window_params = [{transform_indices = @transform_0, window_bounds = array<i64: 4, 32, 288>}, {pipeline_mode = #tpu.pipeline_mode<synchronous>, transform_indices = @transform_1, window_bounds = array<i64: 288, 64>}, {pipeline_mode = #tpu.pipeline_mode<synchronous>, transform_indices = @transform_2, window_bounds = array<i64: 1, 64>}, {transform_indices = @transform_3, window_bounds = array<i64: 32, 64>}]} {
    %c0 = arith.constant 0 : index
    %c0_0 = arith.constant 0 : index
    %0 = vector.load %arg2[%c0, %c0_0] : memref<288x64xbf16, #tpu.memory_space<vmem>>, vector<288x64xbf16>
    %c0_1 = arith.constant 0 : index
    %c0_2 = arith.constant 0 : index
    %c0_3 = arith.constant 0 : index
    %1 = vector.load %arg1[%c0_1, %c0_2, %c0_3] : memref<4x32x288xbf16, #tpu.memory_space<vmem>>, vector<1x32x288xbf16>
    %2 = vector.shape_cast %1 : vector<1x32x288xbf16> to vector<32x288xbf16>
    %cst = arith.constant dense<0.000000e+00> : vector<32x64xf32>
    %3 = tpu.matmul %2, %0, %cst {dimension_numbers = #tpu.dot_dimension_numbers<[1], [0], [0], [1], [0, 0, 1, 1], [], []>} : vector<32x288xbf16>, vector<288x64xbf16>, vector<32x64xf32> -> vector<32x64xf32>
    %c1 = arith.constant 1 : index
    %c0_4 = arith.constant 0 : index
    %c0_5 = arith.constant 0 : index
    %4 = vector.load %arg1[%c1, %c0_4, %c0_5] : memref<4x32x288xbf16, #tpu.memory_space<vmem>>, vector<1x32x288xbf16>
    %5 = vector.shape_cast %4 : vector<1x32x288xbf16> to vector<32x288xbf16>
    %cst_6 = arith.constant dense<0.000000e+00> : vector<32x64xf32>
    %6 = tpu.matmul %5, %0, %cst_6 {dimension_numbers = #tpu.dot_dimension_numbers<[1], [0], [0], [1], [0, 0, 1, 1], [], []>} : vector<32x288xbf16>, vector<288x64xbf16>, vector<32x64xf32> -> vector<32x64xf32>
    %7 = arith.maximumf %3, %6 : vector<32x64xf32>
    %c2 = arith.constant 2 : index
    %c0_7 = arith.constant 0 : index
    %c0_8 = arith.constant 0 : index
    %8 = vector.load %arg1[%c2, %c0_7, %c0_8] : memref<4x32x288xbf16, #tpu.memory_space<vmem>>, vector<1x32x288xbf16>
    %9 = vector.shape_cast %8 : vector<1x32x288xbf16> to vector<32x288xbf16>
    %cst_9 = arith.constant dense<0.000000e+00> : vector<32x64xf32>
    %10 = tpu.matmul %9, %0, %cst_9 {dimension_numbers = #tpu.dot_dimension_numbers<[1], [0], [0], [1], [0, 0, 1, 1], [], []>} : vector<32x288xbf16>, vector<288x64xbf16>, vector<32x64xf32> -> vector<32x64xf32>
    %11 = arith.maximumf %7, %10 : vector<32x64xf32>
    %c3 = arith.constant 3 : index
    %c0_10 = arith.constant 0 : index
    %c0_11 = arith.constant 0 : index
    %12 = vector.load %arg1[%c3, %c0_10, %c0_11] : memref<4x32x288xbf16, #tpu.memory_space<vmem>>, vector<1x32x288xbf16>
    %13 = vector.shape_cast %12 : vector<1x32x288xbf16> to vector<32x288xbf16>
    %cst_12 = arith.constant dense<0.000000e+00> : vector<32x64xf32>
    %14 = tpu.matmul %13, %0, %cst_12 {dimension_numbers = #tpu.dot_dimension_numbers<[1], [0], [0], [1], [0, 0, 1, 1], [], []>} : vector<32x288xbf16>, vector<288x64xbf16>, vector<32x64xf32> -> vector<32x64xf32>
    %15 = arith.maximumf %11, %14 : vector<32x64xf32>
    %c0_13 = arith.constant 0 : index
    %c0_14 = arith.constant 0 : index
    %16 = vector.load %arg3[%c0_13, %c0_14] : memref<1x64xf32, #tpu.memory_space<vmem>>, vector<1x64xf32>
    %17 = vector.broadcast %16 : vector<1x64xf32> to vector<32x64xf32>
    %18 = arith.addf %15, %17 : vector<32x64xf32>
    %cst_15 = arith.constant 0.000000e+00 : f32
    %19 = vector.broadcast %cst_15 : f32 to vector<32x64xf32>
    %20 = arith.maximumf %18, %19 : vector<32x64xf32>
    %21 = arith.truncf %20 : vector<32x64xf32> to vector<32x64xbf16>
    %c0_16 = arith.constant 0 : index
    %c0_17 = arith.constant 0 : index
    %22 = vector.load %arg4[%c0_16, %c0_17] : memref<32x64xbf16, #tpu.memory_space<vmem>>, vector<32x64xbf16>
    tpu.vector_store %arg4[%c0_16, %c0_17], %21 {strides = array<i32>} : memref<32x64xbf16, #tpu.memory_space<vmem>>, vector<32x64xbf16>,
    return
  }
  func.func @transform_0(%arg0: i32) -> (i32, i32, i32) {
    %c0_i32 = arith.constant 0 : i32
    %c0_i32_0 = arith.constant 0 : i32
    %c0_i32_1 = arith.constant 0 : i32
    return %c0_i32, %arg0, %c0_i32_0 : i32, i32, i32
  }
  func.func @transform_1(%arg0: i32) -> (i32, i32) {
    %c0_i32 = arith.constant 0 : i32
    %c0_i32_0 = arith.constant 0 : i32
    %c0_i32_1 = arith.constant 0 : i32
    return %c0_i32, %c0_i32_0 : i32, i32
  }
  func.func @transform_2(%arg0: i32) -> (i32, i32) {
    %c0_i32 = arith.constant 0 : i32
    %c0_i32_0 = arith.constant 0 : i32
    %c0_i32_1 = arith.constant 0 : i32
    return %c0_i32, %c0_i32_0 : i32, i32
  }
  func.func @transform_3(%arg0: i32) -> (i32, i32) {
    %c0_i32 = arith.constant 0 : i32
    %c0_i32_0 = arith.constant 0 : i32
    return %arg0, %c0_i32 : i32, i32
  }
}

module attributes {stable_mosaic.version = 11 : i64} {
  func.func @_conv_pool_relu_kernel(%arg0: i32, %arg1: memref<4x8x576xbf16, #tpu.memory_space<vmem>>, %arg2: memref<576x128xbf16, #tpu.memory_space<vmem>>, %arg3: memref<1x128xf32, #tpu.memory_space<vmem>>, %arg4: memref<8x128xbf16, #tpu.memory_space<vmem>>) attributes {dimension_semantics = [#tpu.dimension_semantics<parallel>], iteration_bounds = array<i64: 1>, scalar_prefetch = 0 : i64, scratch_operands = 0 : i64, tpu.core_type = #tpu.core_type<tc>, window_params = [{transform_indices = @transform_0, window_bounds = array<i64: 4, 8, 576>}, {pipeline_mode = #tpu.pipeline_mode<synchronous>, transform_indices = @transform_1, window_bounds = array<i64: 576, 128>}, {pipeline_mode = #tpu.pipeline_mode<synchronous>, transform_indices = @transform_2, window_bounds = array<i64: 1, 128>}, {transform_indices = @transform_3, window_bounds = array<i64: 8, 128>}]} {
    %c0 = arith.constant 0 : index
    %c0_0 = arith.constant 0 : index
    %0 = vector.load %arg2[%c0, %c0_0] : memref<576x128xbf16, #tpu.memory_space<vmem>>, vector<576x128xbf16>
    %c0_1 = arith.constant 0 : index
    %c0_2 = arith.constant 0 : index
    %c0_3 = arith.constant 0 : index
    %1 = vector.load %arg1[%c0_1, %c0_2, %c0_3] : memref<4x8x576xbf16, #tpu.memory_space<vmem>>, vector<1x8x576xbf16>
    %2 = vector.shape_cast %1 : vector<1x8x576xbf16> to vector<8x576xbf16>
    %cst = arith.constant dense<0.000000e+00> : vector<8x128xf32>
    %3 = tpu.matmul %2, %0, %cst {dimension_numbers = #tpu.dot_dimension_numbers<[1], [0], [0], [1], [0, 0, 1, 1], [], []>} : vector<8x576xbf16>, vector<576x128xbf16>, vector<8x128xf32> -> vector<8x128xf32>
    %c1 = arith.constant 1 : index
    %c0_4 = arith.constant 0 : index
    %c0_5 = arith.constant 0 : index
    %4 = vector.load %arg1[%c1, %c0_4, %c0_5] : memref<4x8x576xbf16, #tpu.memory_space<vmem>>, vector<1x8x576xbf16>
    %5 = vector.shape_cast %4 : vector<1x8x576xbf16> to vector<8x576xbf16>
    %cst_6 = arith.constant dense<0.000000e+00> : vector<8x128xf32>
    %6 = tpu.matmul %5, %0, %cst_6 {dimension_numbers = #tpu.dot_dimension_numbers<[1], [0], [0], [1], [0, 0, 1, 1], [], []>} : vector<8x576xbf16>, vector<576x128xbf16>, vector<8x128xf32> -> vector<8x128xf32>
    %7 = arith.maximumf %3, %6 : vector<8x128xf32>
    %c2 = arith.constant 2 : index
    %c0_7 = arith.constant 0 : index
    %c0_8 = arith.constant 0 : index
    %8 = vector.load %arg1[%c2, %c0_7, %c0_8] : memref<4x8x576xbf16, #tpu.memory_space<vmem>>, vector<1x8x576xbf16>
    %9 = vector.shape_cast %8 : vector<1x8x576xbf16> to vector<8x576xbf16>
    %cst_9 = arith.constant dense<0.000000e+00> : vector<8x128xf32>
    %10 = tpu.matmul %9, %0, %cst_9 {dimension_numbers = #tpu.dot_dimension_numbers<[1], [0], [0], [1], [0, 0, 1, 1], [], []>} : vector<8x576xbf16>, vector<576x128xbf16>, vector<8x128xf32> -> vector<8x128xf32>
    %11 = arith.maximumf %7, %10 : vector<8x128xf32>
    %c3 = arith.constant 3 : index
    %c0_10 = arith.constant 0 : index
    %c0_11 = arith.constant 0 : index
    %12 = vector.load %arg1[%c3, %c0_10, %c0_11] : memref<4x8x576xbf16, #tpu.memory_space<vmem>>, vector<1x8x576xbf16>
    %13 = vector.shape_cast %12 : vector<1x8x576xbf16> to vector<8x576xbf16>
    %cst_12 = arith.constant dense<0.000000e+00> : vector<8x128xf32>
    %14 = tpu.matmul %13, %0, %cst_12 {dimension_numbers = #tpu.dot_dimension_numbers<[1], [0], [0], [1], [0, 0, 1, 1], [], []>} : vector<8x576xbf16>, vector<576x128xbf16>, vector<8x128xf32> -> vector<8x128xf32>
    %15 = arith.maximumf %11, %14 : vector<8x128xf32>
    %c0_13 = arith.constant 0 : index
    %c0_14 = arith.constant 0 : index
    %16 = vector.load %arg3[%c0_13, %c0_14] : memref<1x128xf32, #tpu.memory_space<vmem>>, vector<1x128xf32>
    %17 = vector.broadcast %16 : vector<1x128xf32> to vector<8x128xf32>
    %18 = arith.addf %15, %17 : vector<8x128xf32>
    %cst_15 = arith.constant 0.000000e+00 : f32
    %19 = vector.broadcast %cst_15 : f32 to vector<8x128xf32>
    %20 = arith.maximumf %18, %19 : vector<8x128xf32>
    %21 = arith.truncf %20 : vector<8x128xf32> to vector<8x128xbf16>
    %c0_16 = arith.constant 0 : index
    %c0_17 = arith.constant 0 : index
    %22 = vector.load %arg4[%c0_16, %c0_17] : memref<8x128xbf16, #tpu.memory_space<vmem>>, vector<8x128xbf16>
    tpu.vector_store %arg4[%c0_16, %c0_17], %21 {strides = array<i32>} : memref<8x128xbf16, #tpu.memory_space<vmem>>, vector<8x128xbf16>,
    return
  }
  func.func @transform_0(%arg0: i32) -> (i32, i32, i32) {
    %c0_i32 = arith.constant 0 : i32
    %c0_i32_0 = arith.constant 0 : i32
    %c0_i32_1 = arith.constant 0 : i32
    return %c0_i32, %arg0, %c0_i32_0 : i32, i32, i32
  }
  func.func @transform_1(%arg0: i32) -> (i32, i32) {
    %c0_i32 = arith.constant 0 : i32
    %c0_i32_0 = arith.constant 0 : i32
    %c0_i32_1 = arith.constant 0 : i32
    return %c0_i32, %c0_i32_0 : i32, i32
  }
  func.func @transform_2(%arg0: i32) -> (i32, i32) {
    %c0_i32 = arith.constant 0 : i32
    %c0_i32_0 = arith.constant 0 : i32
    %c0_i32_1 = arith.constant 0 : i32
    return %c0_i32, %c0_i32_0 : i32, i32
  }
  func.func @transform_3(%arg0: i32) -> (i32, i32) {
    %c0_i32 = arith.constant 0 : i32
    %c0_i32_0 = arith.constant 0 : i32
    return %arg0, %c0_i32 : i32, i32
  }
}

module attributes {stable_mosaic.version = 11 : i64} {
  func.func @_conv_pool_relu_kernel(%arg0: i32, %arg1: memref<4x2x1152xbf16, #tpu.memory_space<vmem>>, %arg2: memref<1152x256xbf16, #tpu.memory_space<vmem>>, %arg3: memref<1x256xf32, #tpu.memory_space<vmem>>, %arg4: memref<2x256xbf16, #tpu.memory_space<vmem>>) attributes {dimension_semantics = [#tpu.dimension_semantics<parallel>], iteration_bounds = array<i64: 1>, scalar_prefetch = 0 : i64, scratch_operands = 0 : i64, tpu.core_type = #tpu.core_type<tc>, window_params = [{transform_indices = @transform_0, window_bounds = array<i64: 4, 2, 1152>}, {pipeline_mode = #tpu.pipeline_mode<synchronous>, transform_indices = @transform_1, window_bounds = array<i64: 1152, 256>}, {pipeline_mode = #tpu.pipeline_mode<synchronous>, transform_indices = @transform_2, window_bounds = array<i64: 1, 256>}, {transform_indices = @transform_3, window_bounds = array<i64: 2, 256>}]} {
    %c0 = arith.constant 0 : index
    %c0_0 = arith.constant 0 : index
    %0 = vector.load %arg2[%c0, %c0_0] : memref<1152x256xbf16, #tpu.memory_space<vmem>>, vector<1152x256xbf16>
    %c0_1 = arith.constant 0 : index
    %c0_2 = arith.constant 0 : index
    %c0_3 = arith.constant 0 : index
    %1 = vector.load %arg1[%c0_1, %c0_2, %c0_3] : memref<4x2x1152xbf16, #tpu.memory_space<vmem>>, vector<1x2x1152xbf16>
    %2 = vector.shape_cast %1 : vector<1x2x1152xbf16> to vector<2x1152xbf16>
    %cst = arith.constant dense<0.000000e+00> : vector<2x256xf32>
    %3 = tpu.matmul %2, %0, %cst {dimension_numbers = #tpu.dot_dimension_numbers<[1], [0], [0], [1], [0, 0, 1, 1], [], []>} : vector<2x1152xbf16>, vector<1152x256xbf16>, vector<2x256xf32> -> vector<2x256xf32>
    %c1 = arith.constant 1 : index
    %c0_4 = arith.constant 0 : index
    %c0_5 = arith.constant 0 : index
    %4 = vector.load %arg1[%c1, %c0_4, %c0_5] : memref<4x2x1152xbf16, #tpu.memory_space<vmem>>, vector<1x2x1152xbf16>
    %5 = vector.shape_cast %4 : vector<1x2x1152xbf16> to vector<2x1152xbf16>
    %cst_6 = arith.constant dense<0.000000e+00> : vector<2x256xf32>
    %6 = tpu.matmul %5, %0, %cst_6 {dimension_numbers = #tpu.dot_dimension_numbers<[1], [0], [0], [1], [0, 0, 1, 1], [], []>} : vector<2x1152xbf16>, vector<1152x256xbf16>, vector<2x256xf32> -> vector<2x256xf32>
    %7 = arith.maximumf %3, %6 : vector<2x256xf32>
    %c2 = arith.constant 2 : index
    %c0_7 = arith.constant 0 : index
    %c0_8 = arith.constant 0 : index
    %8 = vector.load %arg1[%c2, %c0_7, %c0_8] : memref<4x2x1152xbf16, #tpu.memory_space<vmem>>, vector<1x2x1152xbf16>
    %9 = vector.shape_cast %8 : vector<1x2x1152xbf16> to vector<2x1152xbf16>
    %cst_9 = arith.constant dense<0.000000e+00> : vector<2x256xf32>
    %10 = tpu.matmul %9, %0, %cst_9 {dimension_numbers = #tpu.dot_dimension_numbers<[1], [0], [0], [1], [0, 0, 1, 1], [], []>} : vector<2x1152xbf16>, vector<1152x256xbf16>, vector<2x256xf32> -> vector<2x256xf32>
    %11 = arith.maximumf %7, %10 : vector<2x256xf32>
    %c3 = arith.constant 3 : index
    %c0_10 = arith.constant 0 : index
    %c0_11 = arith.constant 0 : index
    %12 = vector.load %arg1[%c3, %c0_10, %c0_11] : memref<4x2x1152xbf16, #tpu.memory_space<vmem>>, vector<1x2x1152xbf16>
    %13 = vector.shape_cast %12 : vector<1x2x1152xbf16> to vector<2x1152xbf16>
    %cst_12 = arith.constant dense<0.000000e+00> : vector<2x256xf32>
    %14 = tpu.matmul %13, %0, %cst_12 {dimension_numbers = #tpu.dot_dimension_numbers<[1], [0], [0], [1], [0, 0, 1, 1], [], []>} : vector<2x1152xbf16>, vector<1152x256xbf16>, vector<2x256xf32> -> vector<2x256xf32>
    %15 = arith.maximumf %11, %14 : vector<2x256xf32>
    %c0_13 = arith.constant 0 : index
    %c0_14 = arith.constant 0 : index
    %16 = vector.load %arg3[%c0_13, %c0_14] : memref<1x256xf32, #tpu.memory_space<vmem>>, vector<1x256xf32>
    %17 = vector.broadcast %16 : vector<1x256xf32> to vector<2x256xf32>
    %18 = arith.addf %15, %17 : vector<2x256xf32>
    %cst_15 = arith.constant 0.000000e+00 : f32
    %19 = vector.broadcast %cst_15 : f32 to vector<2x256xf32>
    %20 = arith.maximumf %18, %19 : vector<2x256xf32>
    %21 = arith.truncf %20 : vector<2x256xf32> to vector<2x256xbf16>
    %c0_16 = arith.constant 0 : index
    %c0_17 = arith.constant 0 : index
    %22 = vector.load %arg4[%c0_16, %c0_17] : memref<2x256xbf16, #tpu.memory_space<vmem>>, vector<2x256xbf16>
    tpu.vector_store %arg4[%c0_16, %c0_17], %21 {strides = array<i32>} : memref<2x256xbf16, #tpu.memory_space<vmem>>, vector<2x256xbf16>,
    return
  }
  func.func @transform_0(%arg0: i32) -> (i32, i32, i32) {
    %c0_i32 = arith.constant 0 : i32
    %c0_i32_0 = arith.constant 0 : i32
    %c0_i32_1 = arith.constant 0 : i32
    return %c0_i32, %arg0, %c0_i32_0 : i32, i32, i32
  }
  func.func @transform_1(%arg0: i32) -> (i32, i32) {
    %c0_i32 = arith.constant 0 : i32
    %c0_i32_0 = arith.constant 0 : i32
    %c0_i32_1 = arith.constant 0 : i32
    return %c0_i32, %c0_i32_0 : i32, i32
  }
  func.func @transform_2(%arg0: i32) -> (i32, i32) {
    %c0_i32 = arith.constant 0 : i32
    %c0_i32_0 = arith.constant 0 : i32
    %c0_i32_1 = arith.constant 0 : i32
    return %c0_i32, %c0_i32_0 : i32, i32
  }
  func.func @transform_3(%arg0: i32) -> (i32, i32) {
    %c0_i32 = arith.constant 0 : i32
    %c0_i32_0 = arith.constant 0 : i32
    return %arg0, %c0_i32 : i32, i32
  }
}

module attributes {stable_mosaic.version = 11 : i64} {
  func.func @_fc_stack_kernel(%arg0: i32, %arg1: memref<2x256xbf16, #tpu.memory_space<vmem>>, %arg2: memref<256x512xbf16, #tpu.memory_space<vmem>>, %arg3: memref<1x512xf32, #tpu.memory_space<vmem>>, %arg4: memref<512x128xbf16, #tpu.memory_space<vmem>>, %arg5: memref<1x128xf32, #tpu.memory_space<vmem>>, %arg6: memref<128x10xbf16, #tpu.memory_space<vmem>>, %arg7: memref<1x10xf32, #tpu.memory_space<vmem>>, %arg8: memref<2x10xf32, #tpu.memory_space<vmem>>) attributes {dimension_semantics = [#tpu.dimension_semantics<parallel>], iteration_bounds = array<i64: 1>, scalar_prefetch = 0 : i64, scratch_operands = 0 : i64, tpu.core_type = #tpu.core_type<tc>, window_params = [{transform_indices = @transform_0, window_bounds = array<i64: 2, 256>}, {pipeline_mode = #tpu.pipeline_mode<synchronous>, transform_indices = @transform_1, window_bounds = array<i64: 256, 512>}, {pipeline_mode = #tpu.pipeline_mode<synchronous>, transform_indices = @transform_2, window_bounds = array<i64: 1, 512>}, {pipeline_mode = #tpu.pipeline_mode<synchronous>, transform_indices = @transform_3, window_bounds = array<i64: 512, 128>}, {pipeline_mode = #tpu.pipeline_mode<synchronous>, transform_indices = @transform_4, window_bounds = array<i64: 1, 128>}, {pipeline_mode = #tpu.pipeline_mode<synchronous>, transform_indices = @transform_5, window_bounds = array<i64: 128, 10>}, {pipeline_mode = #tpu.pipeline_mode<synchronous>, transform_indices = @transform_6, window_bounds = array<i64: 1, 10>}, {transform_indices = @transform_7, window_bounds = array<i64: 2, 10>}]} {
    %c0 = arith.constant 0 : index
    %c0_0 = arith.constant 0 : index
    %0 = vector.load %arg1[%c0, %c0_0] : memref<2x256xbf16, #tpu.memory_space<vmem>>, vector<2x256xbf16>
    %c0_1 = arith.constant 0 : index
    %c0_2 = arith.constant 0 : index
    %1 = vector.load %arg2[%c0_1, %c0_2] : memref<256x512xbf16, #tpu.memory_space<vmem>>, vector<256x512xbf16>
    %cst = arith.constant dense<0.000000e+00> : vector<2x512xf32>
    %2 = tpu.matmul %0, %1, %cst {dimension_numbers = #tpu.dot_dimension_numbers<[1], [0], [0], [1], [0, 0, 1, 1], [], []>} : vector<2x256xbf16>, vector<256x512xbf16>, vector<2x512xf32> -> vector<2x512xf32>
    %c0_3 = arith.constant 0 : index
    %c0_4 = arith.constant 0 : index
    %3 = vector.load %arg3[%c0_3, %c0_4] : memref<1x512xf32, #tpu.memory_space<vmem>>, vector<1x512xf32>
    %4 = vector.broadcast %3 : vector<1x512xf32> to vector<2x512xf32>
    %5 = arith.addf %2, %4 : vector<2x512xf32>
    %cst_5 = arith.constant 0.000000e+00 : f32
    %6 = vector.broadcast %cst_5 : f32 to vector<2x512xf32>
    %7 = arith.maximumf %5, %6 : vector<2x512xf32>
    %8 = arith.truncf %7 : vector<2x512xf32> to vector<2x512xbf16>
    %c0_6 = arith.constant 0 : index
    %c0_7 = arith.constant 0 : index
    %9 = vector.load %arg4[%c0_6, %c0_7] : memref<512x128xbf16, #tpu.memory_space<vmem>>, vector<512x128xbf16>
    %cst_8 = arith.constant dense<0.000000e+00> : vector<2x128xf32>
    %10 = tpu.matmul %8, %9, %cst_8 {dimension_numbers = #tpu.dot_dimension_numbers<[1], [0], [0], [1], [0, 0, 1, 1], [], []>} : vector<2x512xbf16>, vector<512x128xbf16>, vector<2x128xf32> -> vector<2x128xf32>
    %c0_9 = arith.constant 0 : index
    %c0_10 = arith.constant 0 : index
    %11 = vector.load %arg5[%c0_9, %c0_10] : memref<1x128xf32, #tpu.memory_space<vmem>>, vector<1x128xf32>
    %12 = vector.broadcast %11 : vector<1x128xf32> to vector<2x128xf32>
    %13 = arith.addf %10, %12 : vector<2x128xf32>
    %cst_11 = arith.constant 0.000000e+00 : f32
    %14 = vector.broadcast %cst_11 : f32 to vector<2x128xf32>
    %15 = arith.maximumf %13, %14 : vector<2x128xf32>
    %16 = arith.truncf %15 : vector<2x128xf32> to vector<2x128xbf16>
    %c0_12 = arith.constant 0 : index
    %c0_13 = arith.constant 0 : index
    %17 = vector.load %arg6[%c0_12, %c0_13] : memref<128x10xbf16, #tpu.memory_space<vmem>>, vector<128x10xbf16>
    %cst_14 = arith.constant dense<0.000000e+00> : vector<2x10xf32>
    %18 = tpu.matmul %16, %17, %cst_14 {dimension_numbers = #tpu.dot_dimension_numbers<[1], [0], [0], [1], [0, 0, 1, 1], [], []>} : vector<2x128xbf16>, vector<128x10xbf16>, vector<2x10xf32> -> vector<2x10xf32>
    %c0_15 = arith.constant 0 : index
    %c0_16 = arith.constant 0 : index
    %19 = vector.load %arg7[%c0_15, %c0_16] : memref<1x10xf32, #tpu.memory_space<vmem>>, vector<1x10xf32>
    %20 = vector.broadcast %19 : vector<1x10xf32> to vector<2x10xf32>
    %21 = arith.addf %18, %20 : vector<2x10xf32>
    %cst_17 = arith.constant dense<0xFF800000> : vector<2xf32>
    %22 = vector.multi_reduction <maximumf>, %21, %cst_17 [1] : vector<2x10xf32> to vector<2xf32>
    %23 = vector.shape_cast %22 : vector<2xf32> to vector<2x1xf32>
    %24 = vector.broadcast %23 : vector<2x1xf32> to vector<2x10xf32>
    %25 = arith.subf %21, %24 : vector<2x10xf32>
    %26 = math.exp %25 : vector<2x10xf32>
    %cst_18 = arith.constant dense<0.000000e+00> : vector<2xf32>
    %27 = vector.multi_reduction <add>, %26, %cst_18 [1] : vector<2x10xf32> to vector<2xf32>
    %28 = vector.shape_cast %27 : vector<2xf32> to vector<2x1xf32>
    %29 = math.log %28 : vector<2x1xf32>
    %30 = vector.broadcast %29 : vector<2x1xf32> to vector<2x10xf32>
    %31 = arith.subf %25, %30 : vector<2x10xf32>
    %c0_19 = arith.constant 0 : index
    %c0_20 = arith.constant 0 : index
    %32 = vector.load %arg8[%c0_19, %c0_20] : memref<2x10xf32, #tpu.memory_space<vmem>>, vector<2x10xf32>
    tpu.vector_store %arg8[%c0_19, %c0_20], %31 {strides = array<i32>} : memref<2x10xf32, #tpu.memory_space<vmem>>, vector<2x10xf32>,
    return
  }
  func.func @transform_0(%arg0: i32) -> (i32, i32) {
    %c0_i32 = arith.constant 0 : i32
    %c0_i32_0 = arith.constant 0 : i32
    return %arg0, %c0_i32 : i32, i32
  }
  func.func @transform_1(%arg0: i32) -> (i32, i32) {
    %c0_i32 = arith.constant 0 : i32
    %c0_i32_0 = arith.constant 0 : i32
    %c0_i32_1 = arith.constant 0 : i32
    return %c0_i32, %c0_i32_0 : i32, i32
  }
  func.func @transform_2(%arg0: i32) -> (i32, i32) {
    %c0_i32 = arith.constant 0 : i32
    %c0_i32_0 = arith.constant 0 : i32
    %c0_i32_1 = arith.constant 0 : i32
    return %c0_i32, %c0_i32_0 : i32, i32
  }
  func.func @transform_3(%arg0: i32) -> (i32, i32) {
    %c0_i32 = arith.constant 0 : i32
    %c0_i32_0 = arith.constant 0 : i32
    %c0_i32_1 = arith.constant 0 : i32
    return %c0_i32, %c0_i32_0 : i32, i32
  }
  func.func @transform_4(%arg0: i32) -> (i32, i32) {
    %c0_i32 = arith.constant 0 : i32
    %c0_i32_0 = arith.constant 0 : i32
    %c0_i32_1 = arith.constant 0 : i32
    return %c0_i32, %c0_i32_0 : i32, i32
  }
  func.func @transform_5(%arg0: i32) -> (i32, i32) {
    %c0_i32 = arith.constant 0 : i32
    %c0_i32_0 = arith.constant 0 : i32
    %c0_i32_1 = arith.constant 0 : i32
    return %c0_i32, %c0_i32_0 : i32, i32
  }
  func.func @transform_6(%arg0: i32) -> (i32, i32) {
    %c0_i32 = arith.constant 0 : i32
    %c0_i32_0 = arith.constant 0 : i32
    %c0_i32_1 = arith.constant 0 : i32
    return %c0_i32, %c0_i32_0 : i32, i32
  }
  func.func @transform_7(%arg0: i32) -> (i32, i32) {
    %c0_i32 = arith.constant 0 : i32
    %c0_i32_0 = arith.constant 0 : i32
    return %arg0, %c0_i32 : i32, i32
  }
}

</mosaic_0001>

<llo_original>
// kernel: complex_cnn_forward.5
$region0: #{complex_cnn_forward.5}
  #allocation0 [shape = 'u32[]', space=smem, size = 0x4, offset = 0x4, fixed_abs, tag = 'smem constant byte address 0x4 - core index']
  #allocation1 [shape = 'u32[144,128]{1,0:T(1,128)}', space=vmem, size = 0x12000, scoped, tag = 'internal scratch']
  %s0 = inlined_call_operand.vmem [shape: bf16[4,128,9], index: 0, kind: input, shape index: {}]
  %s1 = inlined_call_operand.vmem [shape: bf16[9,32], index: 1, kind: input, shape index: {}]
  %s2 = inlined_call_operand.vmem [shape: f32[1,32], index: 2, kind: input, shape index: {}]
  %s3 = inlined_call_operand.vmem [shape: bf16[128,32], index: 3, kind: output, shape index: {}]
  %s4 = sld [smem:[#allocation0]]
  $region22: #{complex_cnn_forward.5} parent=0
    _
  %s6 = ssub.s32 1, %s4
  %s7 = scalar_select 0, %s6, %s4
  // Predicated region
  $region2: #{complex_cnn_forward.5} parent=0 // pred_check
    _
  $region3: #{complex_cnn_forward.5} parent=0 // pred_check_branch
    %9 = sbr.rel (0) target = $region5
  $region4: #{complex_cnn_forward.5} parent=0 // pred_region
    _
  $region5: #{complex_cnn_forward.5} parent=0 // pred_fallthru
    _
  // Predicated region
  $region6: #{complex_cnn_forward.5} parent=0 // pred_check
    _
  $region7: #{complex_cnn_forward.5} parent=0 // pred_check_branch
    %11 = sbr.rel (0) target = $region9
  $region8: #{complex_cnn_forward.5} parent=0 // pred_region
    _
  $region9: #{complex_cnn_forward.5} parent=0 // pred_fallthru
    _
  // Predicated region
  $region10: #{complex_cnn_forward.5} parent=0 // pred_check
    _
  $region11: #{complex_cnn_forward.5} parent=0 // pred_check_branch
    %13 = sbr.rel (0) target = $region13
  $region12: #{complex_cnn_forward.5} parent=0 // pred_region
    _
  $region13: #{complex_cnn_forward.5} parent=0 // pred_fallthru
    _
  %v15 = vld [vmem:[%s1] sm:$0xf]
  %v16 = vld [vmem:[%s1 + $0x4] sm:$0x1]
  %v17 = vld [vmem:[%s0] sm:$0xf]
  %v18 = vld [vmem:[%s0 + $0x4] sm:$0xf]
  %v19 = vld [vmem:[%s0 + $0x8] sm:$0xf]
  %v20 = vld [vmem:[%s0 + $0xc] sm:$0xf]
  %v21 = vld [vmem:[%s0 + $0x10] sm:$0xf]
  %v22 = vld [vmem:[%s0 + $0x14] sm:$0xf]
  %v23 = vld [vmem:[%s0 + $0x18] sm:$0xf]
  %v24 = vld [vmem:[%s0 + $0x1c] sm:$0xf]
  %v25 = vld [vmem:[%s0 + $0x20] sm:$0xf]
  %v26 = vld [vmem:[%s0 + $0x24] sm:$0xf]
  %v27 = vld [vmem:[%s0 + $0x28] sm:$0xf]
  %v28 = vld [vmem:[%s0 + $0x2c] sm:$0xf]
  %v29 = vld [vmem:[%s0 + $0x30] sm:$0xf]
  %v30 = vld [vmem:[%s0 + $0x34] sm:$0xf]
  %v31 = vld [vmem:[%s0 + $0x38] sm:$0xf]
  %v32 = vld [vmem:[%s0 + $0x3c] sm:$0xf]
  %v49 = vunpack.c.l.b16 %v17
  %v50 = vunpack.c.l.b16 %v18
  %v51 = vunpack.c.l.b16 %v19
  %v52 = vunpack.c.l.b16 %v20
  %v53 = vunpack.c.l.b16 %v21
  %v54 = vunpack.c.l.b16 %v22
  %v55 = vunpack.c.l.b16 %v23
  %v56 = vunpack.c.l.b16 %v24
  %v57 = vunpack.c.l.b16 %v25
  %v58 = vunpack.c.l.b16 %v26
  %v59 = vunpack.c.l.b16 %v27
  %v60 = vunpack.c.l.b16 %v28
  %v61 = vunpack.c.l.b16 %v29
  %v62 = vunpack.c.l.b16 %v30
  %v63 = vunpack.c.l.b16 %v31
  %v64 = vunpack.c.l.b16 %v32
  %v65 = vpack.c.b16 %v50, %v49
  %v66 = vpack.c.b16 %v52, %v51
  %v67 = vpack.c.b16 %v54, %v53
  %v68 = vpack.c.b16 %v56, %v55
  %v69 = vpack.c.b16 %v58, %v57
  %v70 = vpack.c.b16 %v60, %v59
  %v71 = vpack.c.b16 %v62, %v61
  %v72 = vpack.c.b16 %v64, %v63
  %v75 = vunpack.c.l.b16 %v15
  %v76 = vunpack.c.l.b16 %v16
  %v77 = vpack.c.b16 %v76, %v75
  %vm78 = vcmask 72704
  %v80 = vsel %vm78, %v65, 0
  %v83 = vsel %vm78, %v66, 0
  %v86 = vsel %vm78, %v67, 0
  %v89 = vsel %vm78, %v68, 0
  %v92 = vsel %vm78, %v69, 0
  %v95 = vsel %vm78, %v70, 0
  %v98 = vsel %vm78, %v71, 0
  %v101 = vsel %vm78, %v72, 0
  %vm103 = vcmask 1043456
  %vm104 = vcmask 1044480
  %v105 = vsel %vm103, 4294967295, 65535
  %v106 = vsel %vm104, %v105, 0
  %v108 = vand.u32 %v77, %v106
  %110 = vmatprep.subr.bf16.mxu0 0
  %111 = vmatpush1.bf16.msra.mxu0 %v108
  %112 = vmatprep.subr.bf16.mxu0 0
  %113 = vmatpush1.bf16.msra.mxu0 0
  %114 = vmatprep.subr.bf16.mxu0 0
  %115 = vmatpush1.bf16.msra.mxu0 0
  %116 = vmatprep.subr.bf16.mxu0 0
  %117 = vmatpush1.bf16.msra.mxu0 0
  %118 = vmatprep.subr.bf16.mxu0 0
  %119 = vmatpush1.bf16.msra.mxu0 0
  %120 = vmatprep.subr.bf16.mxu0 0
  %121 = vmatpush1.bf16.msra.mxu0 0
  %122 = vmatprep.subr.bf16.mxu0 0
  %123 = vmatpush1.bf16.msra.mxu0 0
  %124 = vmatprep.subr.bf16.mxu0 0
  %125 = vmatpush1.bf16.msra.mxu0 0
  %126 = vmatprep.subr.bf16.mxu0 0
  %127 = vmatpush1.bf16.msra.mxu0 0
  %128 = vmatprep.subr.bf16.mxu0 0
  %129 = vmatpush1.bf16.msra.mxu0 0
  %130 = vmatprep.subr.bf16.mxu0 0
  %131 = vmatpush1.bf16.msra.mxu0 0
  %132 = vmatprep.subr.bf16.mxu0 0
  %133 = vmatpush1.bf16.msra.mxu0 0
  %134 = vmatprep.subr.bf16.mxu0 0
  %135 = vmatpush1.bf16.msra.mxu0 0
  %136 = vmatprep.subr.bf16.mxu0 0
  %137 = vmatpush1.bf16.msra.mxu0 0
  %138 = vmatprep.subr.bf16.mxu0 0
  %139 = vmatpush1.bf16.msra.mxu0 0
  %140 = vmatprep.subr.bf16.mxu0 0
  %141 = vmatpush1.bf16.msra.mxu0 0
  %142 = vmatprep.mubr.bf16.mxu0 0
  %143 = vmatmul.mubr.bf16.gmra.mrb[0].mxu0 %v80
  %v144 = vpop.f32.mrb[0].mxu0
  %v145 = vadd.f32 0.0, %v144
  %v146 = vpop.f32.mrb[0].mxu0
  %v147 = vpop.f32.mrb[0].mxu0
  %v148 = vadd.f32 0.0, %v147
  %v149 = vpop.f32.mrb[0].mxu0
  %150 = vmatprep.mubr.bf16.mxu0 0
  %151 = vmatmul.mubr.bf16.gmra.mrb[0].mxu0 %v83
  %v152 = vpop.f32.mrb[0].mxu0
  %v153 = vadd.f32 0.0, %v152
  %v154 = vpop.f32.mrb[0].mxu0
  %v155 = vpop.f32.mrb[0].mxu0
  %v156 = vadd.f32 0.0, %v155
  %v157 = vpop.f32.mrb[0].mxu0
  %158 = vmatprep.mubr.bf16.mxu0 0
  %159 = vmatmul.mubr.bf16.gmra.mrb[0].mxu0 %v86
  %v160 = vpop.f32.mrb[0].mxu0
  %v161 = vadd.f32 0.0, %v160
  %v162 = vpop.f32.mrb[0].mxu0
  %v163 = vpop.f32.mrb[0].mxu0
  %v164 = vadd.f32 0.0, %v163
  %v165 = vpop.f32.mrb[0].mxu0
  %166 = vmatprep.mubr.bf16.mxu0 0
  %167 = vmatmul.mubr.bf16.gmra.mrb[0].mxu0 %v89
  %v168 = vpop.f32.mrb[0].mxu0
  %v169 = vadd.f32 0.0, %v168
  %v170 = vpop.f32.mrb[0].mxu0
  %v171 = vpop.f32.mrb[0].mxu0
  %v172 = vadd.f32 0.0, %v171
  %v173 = vpop.f32.mrb[0].mxu0
  %174 = vmatprep.mubr.bf16.mxu0 0
  %175 = vmatmul.mubr.bf16.gmra.mrb[0].mxu0 %v92
  %v176 = vpop.f32.mrb[0].mxu0
  %v177 = vadd.f32 0.0, %v176
  %v178 = vpop.f32.mrb[0].mxu0
  %v179 = vpop.f32.mrb[0].mxu0
  %v180 = vadd.f32 0.0, %v179
  %v181 = vpop.f32.mrb[0].mxu0
  %182 = vmatprep.mubr.bf16.mxu0 0
  %183 = vmatmul.mubr.bf16.gmra.mrb[0].mxu0 %v95
  %v184 = vpop.f32.mrb[0].mxu0
  %v185 = vadd.f32 0.0, %v184
  %v186 = vpop.f32.mrb[0].mxu0
  %v187 = vpop.f32.mrb[0].mxu0
  %v188 = vadd.f32 0.0, %v187
  %v189 = vpop.f32.mrb[0].mxu0
  %190 = vmatprep.mubr.bf16.mxu0 0
  %191 = vmatmul.mubr.bf16.gmra.mrb[0].mxu0 %v98
  %v192 = vpop.f32.mrb[0].mxu0
  %v193 = vadd.f32 0.0, %v192
  %v194 = vpop.f32.mrb[0].mxu0
  %v195 = vpop.f32.mrb[0].mxu0
  %v196 = vadd.f32 0.0, %v195
  %v197 = vpop.f32.mrb[0].mxu0
  %198 = vmatprep.mubr.bf16.mxu0 0
  %199 = vmatmul.mubr.bf16.gmra.mrb[0].mxu0 %v101
  %v200 = vpop.f32.mrb[0].mxu0
  %v201 = vadd.f32 0.0, %v200
  %v202 = vpop.f32.mrb[0].mxu0
  %v203 = vpop.f32.mrb[0].mxu0
  %v204 = vadd.f32 0.0, %v203
  %v205 = vpop.f32.mrb[0].mxu0
  %206 = vdwg.mxu0
  %s207 = scalar_lea.vmem %s0, 64
  %v208 = vld [vmem:[%s207] sm:$0xf]
  %v209 = vld [vmem:[%s207 + $0x4] sm:$0xf]
  %v210 = vld [vmem:[%s207 + $0x8] sm:$0xf]
  %v211 = vld [vmem:[%s207 + $0xc] sm:$0xf]
  %v212 = vld [vmem:[%s207 + $0x10] sm:$0xf]
  %v213 = vld [vmem:[%s207 + $0x14] sm:$0xf]
  %v214 = vld [vmem:[%s207 + $0x18] sm:$0xf]
  %v215 = vld [vmem:[%s207 + $0x1c] sm:$0xf]
  %v216 = vld [vmem:[%s207 + $0x20] sm:$0xf]
  %v217 = vld [vmem:[%s207 + $0x24] sm:$0xf]
  %v218 = vld [vmem:[%s207 + $0x28] sm:$0xf]
  %v219 = vld [vmem:[%s207 + $0x2c] sm:$0xf]
  %v220 = vld [vmem:[%s207 + $0x30] sm:$0xf]
  %v221 = vld [vmem:[%s207 + $0x34] sm:$0xf]
  %v222 = vld [vmem:[%s207 + $0x38] sm:$0xf]
  %v223 = vld [vmem:[%s207 + $0x3c] sm:$0xf]
  %v240 = vunpack.c.l.b16 %v208
  %v241 = vunpack.c.l.b16 %v209
  %v242 = vunpack.c.l.b16 %v210
  %v243 = vunpack.c.l.b16 %v211
  %v244 = vunpack.c.l.b16 %v212
  %v245 = vunpack.c.l.b16 %v213
  %v246 = vunpack.c.l.b16 %v214
  %v247 = vunpack.c.l.b16 %v215
  %v248 = vunpack.c.l.b16 %v216
  %v249 = vunpack.c.l.b16 %v217
  %v250 = vunpack.c.l.b16 %v218
  %v251 = vunpack.c.l.b16 %v219
  %v252 = vunpack.c.l.b16 %v220
  %v253 = vunpack.c.l.b16 %v221
  %v254 = vunpack.c.l.b16 %v222
  %v255 = vunpack.c.l.b16 %v223
  %v256 = vpack.c.b16 %v241, %v240
  %v257 = vpack.c.b16 %v243, %v242
  %v258 = vpack.c.b16 %v245, %v244
  %v259 = vpack.c.b16 %v247, %v246
  %v260 = vpack.c.b16 %v249, %v248
  %v261 = vpack.c.b16 %v251, %v250
  %v262 = vpack.c.b16 %v253, %v252
  %v263 = vpack.c.b16 %v255, %v254
  %v265 = vsel %vm78, %v256, 0
  %v268 = vsel %vm78, %v257, 0
  %v271 = vsel %vm78, %v258, 0
  %v274 = vsel %vm78, %v259, 0
  %v277 = vsel %vm78, %v260, 0
  %v280 = vsel %vm78, %v261, 0
  %v283 = vsel %vm78, %v262, 0
  %v286 = vsel %vm78, %v263, 0
  %288 = vmatprep.subr.bf16.mxu0 0
  %289 = vmatpush1.bf16.msra.mxu0 %v108
  %290 = vmatprep.subr.bf16.mxu0 0
  %291 = vmatpush1.bf16.msra.mxu0 0
  %292 = vmatprep.subr.bf16.mxu0 0
  %293 = vmatpush1.bf16.msra.mxu0 0
  %294 = vmatprep.subr.bf16.mxu0 0
  %295 = vmatpush1.bf16.msra.mxu0 0
  %296 = vmatprep.subr.bf16.mxu0 0
  %297 = vmatpush1.bf16.msra.mxu0 0
  %298 = vmatprep.subr.bf16.mxu0 0
  %299 = vmatpush1.bf16.msra.mxu0 0
  %300 = vmatprep.subr.bf16.mxu0 0
  %301 = vmatpush1.bf16.msra.mxu0 0
  %302 = vmatprep.subr.bf16.mxu0 0
  %303 = vmatpush1.bf16.msra.mxu0 0
  %304 = vmatprep.subr.bf16.mxu0 0
  %305 = vmatpush1.bf16.msra.mxu0 0
  %306 = vmatprep.subr.bf16.mxu0 0
  %307 = vmatpush1.bf16.msra.mxu0 0
  %308 = vmatprep.subr.bf16.mxu0 0
  %309 = vmatpush1.bf16.msra.mxu0 0
  %310 = vmatprep.subr.bf16.mxu0 0
  %311 = vmatpush1.bf16.msra.mxu0 0
  %312 = vmatprep.subr.bf16.mxu0 0
  %313 = vmatpush1.bf16.msra.mxu0 0
  %314 = vmatprep.subr.bf16.mxu0 0
  %315 = vmatpush1.bf16.msra.mxu0 0
  %316 = vmatprep.subr.bf16.mxu0 0
  %317 = vmatpush1.bf16.msra.mxu0 0
  %318 = vmatprep.subr.bf16.mxu0 0
  %319 = vmatpush1.bf16.msra.mxu0 0
  %320 = vmatprep.mubr.bf16.mxu0 0
  %321 = vmatmul.mubr.bf16.gmra.mrb[0].mxu0 %v265
  %v322 = vpop.f32.mrb[0].mxu0
  %v323 = vadd.f32 0.0, %v322
  %v324 = vpop.f32.mrb[0].mxu0
  %v325 = vpop.f32.mrb[0].mxu0
  %v326 = vadd.f32 0.0, %v325
  %v327 = vpop.f32.mrb[0].mxu0
  %328 = vmatprep.mubr.bf16.mxu0 0
  %329 = vmatmul.mubr.bf16.gmra.mrb[0].mxu0 %v268
  %v330 = vpop.f32.mrb[0].mxu0
  %v331 = vadd.f32 0.0, %v330
  %v332 = vpop.f32.mrb[0].mxu0
  %v333 = vpop.f32.mrb[0].mxu0
  %v334 = vadd.f32 0.0, %v333
  %v335 = vpop.f32.mrb[0].mxu0
  %336 = vmatprep.mubr.bf16.mxu0 0
  %337 = vmatmul.mubr.bf16.gmra.mrb[0].mxu0 %v271
  %v338 = vpop.f32.mrb[0].mxu0
  %v339 = vadd.f32 0.0, %v338
  %v340 = vpop.f32.mrb[0].mxu0
  %v341 = vpop.f32.mrb[0].mxu0
  %v342 = vadd.f32 0.0, %v341
  %v343 = vpop.f32.mrb[0].mxu0
  %344 = vmatprep.mubr.bf16.mxu0 0
  %345 = vmatmul.mubr.bf16.gmra.mrb[0].mxu0 %v274
  %v346 = vpop.f32.mrb[0].mxu0
  %v347 = vadd.f32 0.0, %v346
  %v348 = vpop.f32.mrb[0].mxu0
  %v349 = vpop.f32.mrb[0].mxu0
  %v350 = vadd.f32 0.0, %v349
  %v351 = vpop.f32.mrb[0].mxu0
  %352 = vmatprep.mubr.bf16.mxu0 0
  %353 = vmatmul.mubr.bf16.gmra.mrb[0].mxu0 %v277
  %v354 = vpop.f32.mrb[0].mxu0
  %v355 = vadd.f32 0.0, %v354
  %v356 = vpop.f32.mrb[0].mxu0
  %v357 = vpop.f32.mrb[0].mxu0
  %v358 = vadd.f32 0.0, %v357
  %v359 = vpop.f32.mrb[0].mxu0
  %360 = vmatprep.mubr.bf16.mxu0 0
  %361 = vmatmul.mubr.bf16.gmra.mrb[0].mxu0 %v280
  %v362 = vpop.f32.mrb[0].mxu0
  %v363 = vadd.f32 0.0, %v362
  %v364 = vpop.f32.mrb[0].mxu0
  %v365 = vpop.f32.mrb[0].mxu0
  %v366 = vadd.f32 0.0, %v365
  %v367 = vpop.f32.mrb[0].mxu0
  %368 = vmatprep.mubr.bf16.mxu0 0
  %369 = vmatmul.mubr.bf16.gmra.mrb[0].mxu0 %v283
  %v370 = vpop.f32.mrb[0].mxu0
  %v371 = vadd.f32 0.0, %v370
  %v372 = vpop.f32.mrb[0].mxu0
  %v373 = vpop.f32.mrb[0].mxu0
  %v374 = vadd.f32 0.0, %v373
  %v375 = vpop.f32.mrb[0].mxu0
  %376 = vmatprep.mubr.bf16.mxu0 0
  %377 = vmatmul.mubr.bf16.gmra.mrb[0].mxu0 %v286
  %v378 = vpop.f32.mrb[0].mxu0
  %v379 = vadd.f32 0.0, %v378
  %v380 = vpop.f32.mrb[0].mxu0
  %v381 = vpop.f32.mrb[0].mxu0
  %v382 = vadd.f32 0.0, %v381
  %v383 = vpop.f32.mrb[0].mxu0
  %384 = vdwg.mxu0
  %v385 = vmax.f32 %v145, %v323
  %v386 = vmax.f32 %v148, %v326
  %v387 = vmax.f32 %v153, %v331
  %v388 = vmax.f32 %v156, %v334
  %v389 = vmax.f32 %v161, %v339
  %v390 = vmax.f32 %v164, %v342
  %v391 = vmax.f32 %v169, %v347
  %v392 = vmax.f32 %v172, %v350
  %v393 = vmax.f32 %v177, %v355
  %v394 = vmax.f32 %v180, %v358
  %v395 = vmax.f32 %v185, %v363
  %v396 = vmax.f32 %v188, %v366
  %v397 = vmax.f32 %v193, %v371
  %v398 = vmax.f32 %v196, %v374
  %v399 = vmax.f32 %v201, %v379
  %v400 = vmax.f32 %v204, %v382
  %s401 = scalar_lea.vmem %s0, 128
  %v402 = vld [vmem:[%s401] sm:$0xf]
  %v403 = vld [vmem:[%s401 + $0x4] sm:$0xf]
  %v404 = vld [vmem:[%s401 + $0x8] sm:$0xf]
  %v405 = vld [vmem:[%s401 + $0xc] sm:$0xf]
  %v406 = vld [vmem:[%s401 + $0x10] sm:$0xf]
  %v407 = vld [vmem:[%s401 + $0x14] sm:$0xf]
  %v408 = vld [vmem:[%s401 + $0x18] sm:$0xf]
  %v409 = vld [vmem:[%s401 + $0x1c] sm:$0xf]
  %v410 = vld [vmem:[%s401 + $0x20] sm:$0xf]
  %v411 = vld [vmem:[%s401 + $0x24] sm:$0xf]
  %v412 = vld [vmem:[%s401 + $0x28] sm:$0xf]
  %v413 = vld [vmem:[%s401 + $0x2c] sm:$0xf]
  %v414 = vld [vmem:[%s401 + $0x30] sm:$0xf]
  %v415 = vld [vmem:[%s401 + $0x34] sm:$0xf]
  %v416 = vld [vmem:[%s401 + $0x38] sm:$0xf]
  %v417 = vld [vmem:[%s401 + $0x3c] sm:$0xf]
  %v434 = vunpack.c.l.b16 %v402
  %v435 = vunpack.c.l.b16 %v403
  %v436 = vunpack.c.l.b16 %v404
  %v437 = vunpack.c.l.b16 %v405
  %v438 = vunpack.c.l.b16 %v406
  %v439 = vunpack.c.l.b16 %v407
  %v440 = vunpack.c.l.b16 %v408
  %v441 = vunpack.c.l.b16 %v409
  %v442 = vunpack.c.l.b16 %v410
  %v443 = vunpack.c.l.b16 %v411
  %v444 = vunpack.c.l.b16 %v412
  %v445 = vunpack.c.l.b16 %v413
  %v446 = vunpack.c.l.b16 %v414
  %v447 = vunpack.c.l.b16 %v415
  %v448 = vunpack.c.l.b16 %v416
  %v449 = vunpack.c.l.b16 %v417
  %v450 = vpack.c.b16 %v435, %v434
  %v451 = vpack.c.b16 %v437, %v436
  %v452 = vpack.c.b16 %v439, %v438
  %v453 = vpack.c.b16 %v441, %v440
  %v454 = vpack.c.b16 %v443, %v442
  %v455 = vpack.c.b16 %v445, %v444
  %v456 = vpack.c.b16 %v447, %v446
  %v457 = vpack.c.b16 %v449, %v448
  %v459 = vsel %vm78, %v450, 0
  %v462 = vsel %vm78, %v451, 0
  %v465 = vsel %vm78, %v452, 0
  %v468 = vsel %vm78, %v453, 0
  %v471 = vsel %vm78, %v454, 0
  %v474 = vsel %vm78, %v455, 0
  %v477 = vsel %vm78, %v456, 0
  %v480 = vsel %vm78, %v457, 0
  %482 = vmatprep.subr.bf16.mxu0 0
  %483 = vmatpush1.bf16.msra.mxu0 %v108
  %484 = vmatprep.subr.bf16.mxu0 0
  %485 = vmatpush1.bf16.msra.mxu0 0
  %486 = vmatprep.subr.bf16.mxu0 0
  %487 = vmatpush1.bf16.msra.mxu0 0
  %488 = vmatprep.subr.bf16.mxu0 0
  %489 = vmatpush1.bf16.msra.mxu0 0
  %490 = vmatprep.subr.bf16.mxu0 0
  %491 = vmatpush1.bf16.msra.mxu0 0
  %492 = vmatprep.subr.bf16.mxu0 0
  %493 = vmatpush1.bf16.msra.mxu0 0
  %494 = vmatprep.subr.bf16.mxu0 0
  %495 = vmatpush1.bf16.msra.mxu0 0
  %496 = vmatprep.subr.bf16.mxu0 0
  %497 = vmatpush1.bf16.msra.mxu0 0
  %498 = vmatprep.subr.bf16.mxu0 0
  %499 = vmatpush1.bf16.msra.mxu0 0
  %500 = vmatprep.subr.bf16.mxu0 0
  %501 = vmatpush1.bf16.msra.mxu0 0
  %502 = vmatprep.subr.bf16.mxu0 0
  %503 = vmatpush1.bf16.msra.mxu0 0
  %504 = vmatprep.subr.bf16.mxu0 0
  %505 = vmatpush1.bf16.msra.mxu0 0
  %506 = vmatprep.subr.bf16.mxu0 0
  %507 = vmatpush1.bf16.msra.mxu0 0
  %508 = vmatprep.subr.bf16.mxu0 0
  %509 = vmatpush1.bf16.msra.mxu0 0
  %510 = vmatprep.subr.bf16.mxu0 0
  %511 = vmatpush1.bf16.msra.mxu0 0
  %512 = vmatprep.subr.bf16.mxu0 0
  %513 = vmatpush1.bf16.msra.mxu0 0
  %514 = vmatprep.mubr.bf16.mxu0 0
  %515 = vmatmul.mubr.bf16.gmra.mrb[0].mxu0 %v459
  %v516 = vpop.f32.mrb[0].mxu0
  %v517 = vadd.f32 0.0, %v516
  %v518 = vpop.f32.mrb[0].mxu0
  %v519 = vpop.f32.mrb[0].mxu0
  %v520 = vadd.f32 0.0, %v519
  %v521 = vpop.f32.mrb[0].mxu0
  %522 = vmatprep.mubr.bf16.mxu0 0
  %523 = vmatmul.mubr.bf16.gmra.mrb[0].mxu0 %v462
  %v524 = vpop.f32.mrb[0].mxu0
  %v525 = vadd.f32 0.0, %v524
  %v526 = vpop.f32.mrb[0].mxu0
  %v527 = vpop.f32.mrb[0].mxu0
  %v528 = vadd.f32 0.0, %v527
  %v529 = vpop.f32.mrb[0].mxu0
  %530 = vmatprep.mubr.bf16.mxu0 0
  %531 = vmatmul.mubr.bf16.gmra.mrb[0].mxu0 %v465
  %v532 = vpop.f32.mrb[0].mxu0
  %v533 = vadd.f32 0.0, %v532
  %v534 = vpop.f32.mrb[0].mxu0
  %v535 = vpop.f32.mrb[0].mxu0
  %v536 = vadd.f32 0.0, %v535
  %v537 = vpop.f32.mrb[0].mxu0
  %538 = vmatprep.mubr.bf16.mxu0 0
  %539 = vmatmul.mubr.bf16.gmra.mrb[0].mxu0 %v468
  %v540 = vpop.f32.mrb[0].mxu0
  %v541 = vadd.f32 0.0, %v540
  %v542 = vpop.f32.mrb[0].mxu0
  %v543 = vpop.f32.mrb[0].mxu0
  %v544 = vadd.f32 0.0, %v543
  %v545 = vpop.f32.mrb[0].mxu0
  %546 = vmatprep.mubr.bf16.mxu0 0
  %547 = vmatmul.mubr.bf16.gmra.mrb[0].mxu0 %v471
  %v548 = vpop.f32.mrb[0].mxu0
  %v549 = vadd.f32 0.0, %v548
  %v550 = vpop.f32.mrb[0].mxu0
  %v551 = vpop.f32.mrb[0].mxu0
  %v552 = vadd.f32 0.0, %v551
  %v553 = vpop.f32.mrb[0].mxu0
  %554 = vmatprep.mubr.bf16.mxu0 0
  %555 = vmatmul.mubr.bf16.gmra.mrb[0].mxu0 %v474
  %v556 = vpop.f32.mrb[0].mxu0
  %v557 = vadd.f32 0.0, %v556
  %v558 = vpop.f32.mrb[0].mxu0
  %v559 = vpop.f32.mrb[0].mxu0
  %v560 = vadd.f32 0.0, %v559
  %v561 = vpop.f32.mrb[0].mxu0
  %562 = vmatprep.mubr.bf16.mxu0 0
  %563 = vmatmul.mubr.bf16.gmra.mrb[0].mxu0 %v477
  %v564 = vpop.f32.mrb[0].mxu0
  %v565 = vadd.f32 0.0, %v564
  %v566 = vpop.f32.mrb[0].mxu0
  %v567 = vpop.f32.mrb[0].mxu0
  %v568 = vadd.f32 0.0, %v567
  %v569 = vpop.f32.mrb[0].mxu0
  %570 = vmatprep.mubr.bf16.mxu0 0
  %571 = vmatmul.mubr.bf16.gmra.mrb[0].mxu0 %v480
  %v572 = vpop.f32.mrb[0].mxu0
  %v573 = vadd.f32 0.0, %v572
  %v574 = vpop.f32.mrb[0].mxu0
  %v575 = vpop.f32.mrb[0].mxu0
  %v576 = vadd.f32 0.0, %v575
  %v577 = vpop.f32.mrb[0].mxu0
  %578 = vdwg.mxu0
  %v579 = vmax.f32 %v385, %v517
  %v580 = vmax.f32 %v386, %v520
  %v581 = vmax.f32 %v387, %v525
  %v582 = vmax.f32 %v388, %v528
  %v583 = vmax.f32 %v389, %v533
  %v584 = vmax.f32 %v390, %v536
  %v585 = vmax.f32 %v391, %v541
  %v586 = vmax.f32 %v392, %v544
  %v587 = vmax.f32 %v393, %v549
  %v588 = vmax.f32 %v394, %v552
  %v589 = vmax.f32 %v395, %v557
  %v590 = vmax.f32 %v396, %v560
  %v591 = vmax.f32 %v397, %v565
  %v592 = vmax.f32 %v398, %v568
  %v593 = vmax.f32 %v399, %v573
  %v594 = vmax.f32 %v400, %v576
  %s595 = scalar_lea.vmem %s0, 192
  %v596 = vld [vmem:[%s595] sm:$0xf]
  %v597 = vld [vmem:[%s595 + $0x4] sm:$0xf]
  %v598 = vld [vmem:[%s595 + $0x8] sm:$0xf]
  %v599 = vld [vmem:[%s595 + $0xc] sm:$0xf]
  %v600 = vld [vmem:[%s595 + $0x10] sm:$0xf]
  %v601 = vld [vmem:[%s595 + $0x14] sm:$0xf]
  %v602 = vld [vmem:[%s595 + $0x18] sm:$0xf]
  %v603 = vld [vmem:[%s595 + $0x1c] sm:$0xf]
  %v604 = vld [vmem:[%s595 + $0x20] sm:$0xf]
  %v605 = vld [vmem:[%s595 + $0x24] sm:$0xf]
  %v606 = vld [vmem:[%s595 + $0x28] sm:$0xf]
  %v607 = vld [vmem:[%s595 + $0x2c] sm:$0xf]
  %v608 = vld [vmem:[%s595 + $0x30] sm:$0xf]
  %v609 = vld [vmem:[%s595 + $0x34] sm:$0xf]
  %v610 = vld [vmem:[%s595 + $0x38] sm:$0xf]
  %v611 = vld [vmem:[%s595 + $0x3c] sm:$0xf]
  %v628 = vunpack.c.l.b16 %v596
  %v629 = vunpack.c.l.b16 %v597
  %v630 = vunpack.c.l.b16 %v598
  %v631 = vunpack.c.l.b16 %v599
  %v632 = vunpack.c.l.b16 %v600
  %v633 = vunpack.c.l.b16 %v601
  %v634 = vunpack.c.l.b16 %v602
  %v635 = vunpack.c.l.b16 %v603
  %v636 = vunpack.c.l.b16 %v604
  %v637 = vunpack.c.l.b16 %v605
  %v638 = vunpack.c.l.b16 %v606
  %v639 = vunpack.c.l.b16 %v607
  %v640 = vunpack.c.l.b16 %v608
  %v641 = vunpack.c.l.b16 %v609
  %v642 = vunpack.c.l.b16 %v610
  %v643 = vunpack.c.l.b16 %v611
  %v644 = vpack.c.b16 %v629, %v628
  %v645 = vpack.c.b16 %v631, %v630
  %v646 = vpack.c.b16 %v633, %v632
  %v647 = vpack.c.b16 %v635, %v634
  %v648 = vpack.c.b16 %v637, %v636
  %v649 = vpack.c.b16 %v639, %v638
  %v650 = vpack.c.b16 %v641, %v640
  %v651 = vpack.c.b16 %v643, %v642
  %v653 = vsel %vm78, %v644, 0
  %v656 = vsel %vm78, %v645, 0
  %v659 = vsel %vm78, %v646, 0
  %v662 = vsel %vm78, %v647, 0
  %v665 = vsel %vm78, %v648, 0
  %v668 = vsel %vm78, %v649, 0
  %v671 = vsel %vm78, %v650, 0
  %v674 = vsel %vm78, %v651, 0
  %676 = vmatprep.subr.bf16.mxu0 0
  %677 = vmatpush1.bf16.msra.mxu0 %v108
  %678 = vmatprep.subr.bf16.mxu0 0
  %679 = vmatpush1.bf16.msra.mxu0 0
  %680 = vmatprep.subr.bf16.mxu0 0
  %681 = vmatpush1.bf16.msra.mxu0 0
  %682 = vmatprep.subr.bf16.mxu0 0
  %683 = vmatpush1.bf16.msra.mxu0 0
  %684 = vmatprep.subr.bf16.mxu0 0
  %685 = vmatpush1.bf16.msra.mxu0 0
  %686 = vmatprep.subr.bf16.mxu0 0
  %687 = vmatpush1.bf16.msra.mxu0 0
  %688 = vmatprep.subr.bf16.mxu0 0
  %689 = vmatpush1.bf16.msra.mxu0 0
  %690 = vmatprep.subr.bf16.mxu0 0
  %691 = vmatpush1.bf16.msra.mxu0 0
  %692 = vmatprep.subr.bf16.mxu0 0
  %693 = vmatpush1.bf16.msra.mxu0 0
  %694 = vmatprep.subr.bf16.mxu0 0
  %695 = vmatpush1.bf16.msra.mxu0 0
  %696 = vmatprep.subr.bf16.mxu0 0
  %697 = vmatpush1.bf16.msra.mxu0 0
  %698 = vmatprep.subr.bf16.mxu0 0
  %699 = vmatpush1.bf16.msra.mxu0 0
  %700 = vmatprep.subr.bf16.mxu0 0
  %701 = vmatpush1.bf16.msra.mxu0 0
  %702 = vmatprep.subr.bf16.mxu0 0
  %703 = vmatpush1.bf16.msra.mxu0 0
  %704 = vmatprep.subr.bf16.mxu0 0
  %705 = vmatpush1.bf16.msra.mxu0 0
  %706 = vmatprep.subr.bf16.mxu0 0
  %707 = vmatpush1.bf16.msra.mxu0 0
  %708 = vmatprep.mubr.bf16.mxu0 0
  %709 = vmatmul.mubr.bf16.gmra.mrb[0].mxu0 %v653
  %v710 = vpop.f32.mrb[0].mxu0
  %v711 = vadd.f32 0.0, %v710
  %v712 = vpop.f32.mrb[0].mxu0
  %v713 = vpop.f32.mrb[0].mxu0
  %v714 = vadd.f32 0.0, %v713
  %v715 = vpop.f32.mrb[0].mxu0
  %716 = vmatprep.mubr.bf16.mxu0 0
  %717 = vmatmul.mubr.bf16.gmra.mrb[0].mxu0 %v656
  %v718 = vpop.f32.mrb[0].mxu0
  %v719 = vadd.f32 0.0, %v718
  %v720 = vpop.f32.mrb[0].mxu0
  %v721 = vpop.f32.mrb[0].mxu0
  %v722 = vadd.f32 0.0, %v721
  %v723 = vpop.f32.mrb[0].mxu0
  %724 = vmatprep.mubr.bf16.mxu0 0
  %725 = vmatmul.mubr.bf16.gmra.mrb[0].mxu0 %v659
  %v726 = vpop.f32.mrb[0].mxu0
  %v727 = vadd.f32 0.0, %v726
  %v728 = vpop.f32.mrb[0].mxu0
  %v729 = vpop.f32.mrb[0].mxu0
  %v730 = vadd.f32 0.0, %v729
  %v731 = vpop.f32.mrb[0].mxu0
  %732 = vmatprep.mubr.bf16.mxu0 0
  %733 = vmatmul.mubr.bf16.gmra.mrb[0].mxu0 %v662
  %v734 = vpop.f32.mrb[0].mxu0
  %v735 = vadd.f32 0.0, %v734
  %v736 = vpop.f32.mrb[0].mxu0
  %v737 = vpop.f32.mrb[0].mxu0
  %v738 = vadd.f32 0.0, %v737
  %v739 = vpop.f32.mrb[0].mxu0
  %740 = vmatprep.mubr.bf16.mxu0 0
  %741 = vmatmul.mubr.bf16.gmra.mrb[0].mxu0 %v665
  %v742 = vpop.f32.mrb[0].mxu0
  %v743 = vadd.f32 0.0, %v742
  %v744 = vpop.f32.mrb[0].mxu0
  %v745 = vpop.f32.mrb[0].mxu0
  %v746 = vadd.f32 0.0, %v745
  %v747 = vpop.f32.mrb[0].mxu0
  %748 = vmatprep.mubr.bf16.mxu0 0
  %749 = vmatmul.mubr.bf16.gmra.mrb[0].mxu0 %v668
  %v750 = vpop.f32.mrb[0].mxu0
  %v751 = vadd.f32 0.0, %v750
  %v752 = vpop.f32.mrb[0].mxu0
  %v753 = vpop.f32.mrb[0].mxu0
  %v754 = vadd.f32 0.0, %v753
  %v755 = vpop.f32.mrb[0].mxu0
  %756 = vmatprep.mubr.bf16.mxu0 0
  %757 = vmatmul.mubr.bf16.gmra.mrb[0].mxu0 %v671
  %v758 = vpop.f32.mrb[0].mxu0
  %v759 = vadd.f32 0.0, %v758
  %v760 = vpop.f32.mrb[0].mxu0
  %v761 = vpop.f32.mrb[0].mxu0
  %v762 = vadd.f32 0.0, %v761
  %v763 = vpop.f32.mrb[0].mxu0
  %764 = vmatprep.mubr.bf16.mxu0 0
  %765 = vmatmul.mubr.bf16.gmra.mrb[0].mxu0 %v674
  %v766 = vpop.f32.mrb[0].mxu0
  %v767 = vadd.f32 0.0, %v766
  %v768 = vpop.f32.mrb[0].mxu0
  %v769 = vpop.f32.mrb[0].mxu0
  %v770 = vadd.f32 0.0, %v769
  %v771 = vpop.f32.mrb[0].mxu0
  %772 = vdwg.mxu0
  %v773 = vmax.f32 %v579, %v711
  %v774 = vmax.f32 %v580, %v714
  %v775 = vmax.f32 %v581, %v719
  %v776 = vmax.f32 %v582, %v722
  %v777 = vmax.f32 %v583, %v727
  %v778 = vmax.f32 %v584, %v730
  %v779 = vmax.f32 %v585, %v735
  %v780 = vmax.f32 %v586, %v738
  %v781 = vmax.f32 %v587, %v743
  %v782 = vmax.f32 %v588, %v746
  %v783 = vmax.f32 %v589, %v751
  %v784 = vmax.f32 %v590, %v754
  %v785 = vmax.f32 %v591, %v759
  %v786 = vmax.f32 %v592, %v762
  %v787 = vmax.f32 %v593, %v767
  %v788 = vmax.f32 %v594, %v770
  %v789 = vld [vmem:[%s2] sm:$0x1]
  %v791 = vlaneseq
  %v792 = vshrl.u32 %v791, 7
  %v793 = vsub.s32 0, %v792
  %v794 = vrot.slane %v789, %v793
  %v796 = vadd.f32 %v773, %v794
  %v797 = vadd.f32 %v774, %v794
  %v798 = vadd.f32 %v775, %v794
  %v799 = vadd.f32 %v776, %v794
  %v800 = vadd.f32 %v777, %v794
  %v801 = vadd.f32 %v778, %v794
  %v802 = vadd.f32 %v779, %v794
  %v803 = vadd.f32 %v780, %v794
  %v804 = vadd.f32 %v781, %v794
  %v805 = vadd.f32 %v782, %v794
  %v806 = vadd.f32 %v783, %v794
  %v807 = vadd.f32 %v784, %v794
  %v808 = vadd.f32 %v785, %v794
  %v809 = vadd.f32 %v786, %v794
  %v810 = vadd.f32 %v787, %v794
  %v811 = vadd.f32 %v788, %v794
  %v812 = vmax.f32 %v796, 0.0
  %v813 = vmax.f32 %v797, 0.0
  %v814 = vmax.f32 %v798, 0.0
  %v815 = vmax.f32 %v799, 0.0
  %v816 = vmax.f32 %v800, 0.0
  %v817 = vmax.f32 %v801, 0.0
  %v818 = vmax.f32 %v802, 0.0
  %v819 = vmax.f32 %v803, 0.0
  %v820 = vmax.f32 %v804, 0.0
  %v821 = vmax.f32 %v805, 0.0
  %v822 = vmax.f32 %v806, 0.0
  %v823 = vmax.f32 %v807, 0.0
  %v824 = vmax.f32 %v808, 0.0
  %v825 = vmax.f32 %v809, 0.0
  %v826 = vmax.f32 %v810, 0.0
  %v827 = vmax.f32 %v811, 0.0
  %v828 = vpack.c.bf16 %v813, %v812
  %v829 = vpack.c.bf16 %v815, %v814
  %v830 = vpack.c.bf16 %v817, %v816
  %v831 = vpack.c.bf16 %v819, %v818
  %v832 = vpack.c.bf16 %v821, %v820
  %v833 = vpack.c.bf16 %v823, %v822
  %v834 = vpack.c.bf16 %v825, %v824
  %v835 = vpack.c.bf16 %v827, %v826
  %v844 = vunpack.c.l.b16 %v828
  %v845 = vunpack.c.h.b16 %v828
  %v846 = vunpack.c.l.b16 %v829
  %v847 = vunpack.c.h.b16 %v829
  %v848 = vunpack.c.l.b16 %v830
  %v849 = vunpack.c.h.b16 %v830
  %v850 = vunpack.c.l.b16 %v831
  %v851 = vunpack.c.h.b16 %v831
  %v852 = vunpack.c.l.b16 %v832
  %v853 = vunpack.c.h.b16 %v832
  %v854 = vunpack.c.l.b16 %v833
  %v855 = vunpack.c.h.b16 %v833
  %v856 = vunpack.c.l.b16 %v834
  %v857 = vunpack.c.h.b16 %v834
  %v858 = vunpack.c.l.b16 %v835
  %v859 = vunpack.c.h.b16 %v835
  %v860 = vpack.c.b16 %v844, %v844
  %v861 = vpack.c.b16 %v845, %v845
  %v862 = vpack.c.b16 %v846, %v846
  %v863 = vpack.c.b16 %v847, %v847
  %v864 = vpack.c.b16 %v848, %v848
  %v865 = vpack.c.b16 %v849, %v849
  %v866 = vpack.c.b16 %v850, %v850
  %v867 = vpack.c.b16 %v851, %v851
  %v868 = vpack.c.b16 %v852, %v852
  %v869 = vpack.c.b16 %v853, %v853
  %v870 = vpack.c.b16 %v854, %v854
  %v871 = vpack.c.b16 %v855, %v855
  %v872 = vpack.c.b16 %v856, %v856
  %v873 = vpack.c.b16 %v857, %v857
  %v874 = vpack.c.b16 %v858, %v858
  %v875 = vpack.c.b16 %v859, %v859
  %vm892 = vcmask 257024
  %893 = vst.msk [vmem:[%s3] sm:$0xf] %vm892, %v860
  %894 = vst.msk [vmem:[%s3 + $0x4] sm:$0xf] %vm892, %v861
  %895 = vst.msk [vmem:[%s3 + $0x8] sm:$0xf] %vm892, %v862
  %896 = vst.msk [vmem:[%s3 + $0xc] sm:$0xf] %vm892, %v863
  %897 = vst.msk [vmem:[%s3 + $0x10] sm:$0xf] %vm892, %v864
  %898 = vst.msk [vmem:[%s3 + $0x14] sm:$0xf] %vm892, %v865
  %899 = vst.msk [vmem:[%s3 + $0x18] sm:$0xf] %vm892, %v866
  %900 = vst.msk [vmem:[%s3 + $0x1c] sm:$0xf] %vm892, %v867
  %901 = vst.msk [vmem:[%s3 + $0x20] sm:$0xf] %vm892, %v868
  %902 = vst.msk [vmem:[%s3 + $0x24] sm:$0xf] %vm892, %v869
  %903 = vst.msk [vmem:[%s3 + $0x28] sm:$0xf] %vm892, %v870
  %904 = vst.msk [vmem:[%s3 + $0x2c] sm:$0xf] %vm892, %v871
  %905 = vst.msk [vmem:[%s3 + $0x30] sm:$0xf] %vm892, %v872
  %906 = vst.msk [vmem:[%s3 + $0x34] sm:$0xf] %vm892, %v873
  %907 = vst.msk [vmem:[%s3 + $0x38] sm:$0xf] %vm892, %v874
  %908 = vst.msk [vmem:[%s3 + $0x3c] sm:$0xf] %vm892, %v875
  // Predicated region
  $region14: #{complex_cnn_forward.5} parent=0 // pred_check
    _
  $region15: #{complex_cnn_forward.5} parent=0 // pred_check_branch
    %910 = sbr.rel (0) target = $region17
  $region16: #{complex_cnn_forward.5} parent=0 // pred_region
    _
  $region17: #{complex_cnn_forward.5} parent=0 // pred_fallthru
    _
  // Predicated region
  $region18: #{complex_cnn_forward.5} parent=0 // pred_check
    _
  $region19: #{complex_cnn_forward.5} parent=0 // pred_check_branch
    %912 = sbr.rel (0) target = $region21
  $region20: #{complex_cnn_forward.5} parent=0 // pred_region
    _
  $region21: #{complex_cnn_forward.5} parent=0 // pred_fallthru
    _

// kernel: complex_cnn_forward.6
$region0: #{complex_cnn_forward.6}
  #allocation0 [shape = 'u32[]', space=smem, size = 0x4, offset = 0x4, fixed_abs, tag = 'smem constant byte address 0x4 - core index']
  #allocation1 [shape = 'u32[144,128]{1,0:T(1,128)}', space=vmem, size = 0x12000, scoped, tag = 'internal scratch']
  %s0 = inlined_call_operand.vmem [shape: bf16[4,32,288], index: 0, kind: input, shape index: {}]
  %s1 = inlined_call_operand.vmem [shape: bf16[288,64], index: 1, kind: input, shape index: {}]
  %s2 = inlined_call_operand.vmem [shape: f32[1,64], index: 2, kind: input, shape index: {}]
  %s3 = inlined_call_operand.vmem [shape: bf16[32,64], index: 3, kind: output, shape index: {}]
  %s4 = sld [smem:[#allocation0]]
  $region22: #{complex_cnn_forward.6} parent=0
    _
  %s6 = ssub.s32 1, %s4
  %s7 = scalar_select 0, %s6, %s4
  // Predicated region
  $region2: #{complex_cnn_forward.6} parent=0 // pred_check
    _
  $region3: #{complex_cnn_forward.6} parent=0 // pred_check_branch
    %9 = sbr.rel (0) target = $region5
  $region4: #{complex_cnn_forward.6} parent=0 // pred_region
    _
  $region5: #{complex_cnn_forward.6} parent=0 // pred_fallthru
    _
  // Predicated region
  $region6: #{complex_cnn_forward.6} parent=0 // pred_check
    _
  $region7: #{complex_cnn_forward.6} parent=0 // pred_check_branch
    %11 = sbr.rel (0) target = $region9
  $region8: #{complex_cnn_forward.6} parent=0 // pred_region
    _
  $region9: #{complex_cnn_forward.6} parent=0 // pred_fallthru
    _
  // Predicated region
  $region10: #{complex_cnn_forward.6} parent=0 // pred_check
    _
  $region11: #{complex_cnn_forward.6} parent=0 // pred_check_branch
    %13 = sbr.rel (0) target = $region13
  $region12: #{complex_cnn_forward.6} parent=0 // pred_region
    _
  $region13: #{complex_cnn_forward.6} parent=0 // pred_fallthru
    _
  %v15 = vld [vmem:[%s1] sm:$0xf]
  %v16 = vld [vmem:[%s1 + $0x4] sm:$0xf]
  %v17 = vld [vmem:[%s1 + $0x8] sm:$0xf]
  %v18 = vld [vmem:[%s1 + $0xc] sm:$0xf]
  %v19 = vld [vmem:[%s1 + $0x10] sm:$0xf]
  %v20 = vld [vmem:[%s1 + $0x14] sm:$0xf]
  %v21 = vld [vmem:[%s1 + $0x18] sm:$0xf]
  %v22 = vld [vmem:[%s1 + $0x1c] sm:$0xf]
  %v23 = vld [vmem:[%s1 + $0x20] sm:$0xf]
  %v24 = vld [vmem:[%s1 + $0x24] sm:$0xf]
  %v25 = vld [vmem:[%s1 + $0x28] sm:$0xf]
  %v26 = vld [vmem:[%s1 + $0x2c] sm:$0xf]
  %v27 = vld [vmem:[%s1 + $0x30] sm:$0xf]
  %v28 = vld [vmem:[%s1 + $0x34] sm:$0xf]
  %v29 = vld [vmem:[%s1 + $0x38] sm:$0xf]
  %v30 = vld [vmem:[%s1 + $0x3c] sm:$0xf]
  %v31 = vld [vmem:[%s1 + $0x40] sm:$0xf]
  %v32 = vld [vmem:[%s1 + $0x44] sm:$0xf]
  %v33 = vld [vmem:[%s1 + $0x48] sm:$0xf]
  %v34 = vld [vmem:[%s1 + $0x4c] sm:$0xf]
  %v35 = vld [vmem:[%s1 + $0x50] sm:$0xf]
  %v36 = vld [vmem:[%s1 + $0x54] sm:$0xf]
  %v37 = vld [vmem:[%s1 + $0x58] sm:$0xf]
  %v38 = vld [vmem:[%s1 + $0x5c] sm:$0xf]
  %v39 = vld [vmem:[%s1 + $0x60] sm:$0xf]
  %v40 = vld [vmem:[%s1 + $0x64] sm:$0xf]
  %v41 = vld [vmem:[%s1 + $0x68] sm:$0xf]
  %v42 = vld [vmem:[%s1 + $0x6c] sm:$0xf]
  %v43 = vld [vmem:[%s1 + $0x70] sm:$0xf]
  %v44 = vld [vmem:[%s1 + $0x74] sm:$0xf]
  %v45 = vld [vmem:[%s1 + $0x78] sm:$0xf]
  %v46 = vld [vmem:[%s1 + $0x7c] sm:$0xf]
  %v47 = vld [vmem:[%s1 + $0x80] sm:$0xf]
  %v48 = vld [vmem:[%s1 + $0x84] sm:$0xf]
  %v49 = vld [vmem:[%s1 + $0x88] sm:$0xf]
  %v50 = vld [vmem:[%s1 + $0x8c] sm:$0xf]
  %v51 = vld [vmem:[%s0] sm:$0xff]
  %v52 = vld [vmem:[%s0 + $0x8] sm:$0xf]
  %v53 = vld [vmem:[%s0 + $0xc] sm:$0xff]
  %v54 = vld [vmem:[%s0 + $0x14] sm:$0xf]
  %v55 = vld [vmem:[%s0 + $0x18] sm:$0xff]
  %v56 = vld [vmem:[%s0 + $0x20] sm:$0xf]
  %v57 = vld [vmem:[%s0 + $0x24] sm:$0xff]
  %v58 = vld [vmem:[%s0 + $0x2c] sm:$0xf]
  %v67 = vunpack.c.l.b16 %v51
  %v68 = vunpack.c.h.b16 %v51
  %v69 = vunpack.c.l.b16 %v52
  %v70 = vunpack.c.l.b16 %v53
  %v71 = vunpack.c.h.b16 %v53
  %v72 = vunpack.c.l.b16 %v54
  %v73 = vunpack.c.l.b16 %v55
  %v74 = vunpack.c.h.b16 %v55
  %v75 = vunpack.c.l.b16 %v56
  %v76 = vunpack.c.l.b16 %v57
  %v77 = vunpack.c.h.b16 %v57
  %v78 = vunpack.c.l.b16 %v58
  %v79 = vpack.c.b16 %v70, %v67
  %v80 = vpack.c.b16 %v71, %v68
  %v81 = vpack.c.b16 %v72, %v69
  %v82 = vpack.c.b16 %v76, %v73
  %v83 = vpack.c.b16 %v77, %v74
  %v84 = vpack.c.b16 %v78, %v75
  %v125 = vunpack.c.l.b16 %v15
  %v126 = vunpack.c.l.b16 %v16
  %v127 = vunpack.c.l.b16 %v17
  %v128 = vunpack.c.l.b16 %v18
  %v129 = vunpack.c.l.b16 %v19
  %v130 = vunpack.c.l.b16 %v20
  %v131 = vunpack.c.l.b16 %v21
  %v132 = vunpack.c.l.b16 %v22
  %v133 = vunpack.c.l.b16 %v23
  %v134 = vunpack.c.l.b16 %v24
  %v135 = vunpack.c.l.b16 %v25
  %v136 = vunpack.c.l.b16 %v26
  %v137 = vunpack.c.l.b16 %v27
  %v138 = vunpack.c.l.b16 %v28
  %v139 = vunpack.c.l.b16 %v29
  %v140 = vunpack.c.l.b16 %v30
  %v141 = vunpack.c.l.b16 %v31
  %v142 = vunpack.c.l.b16 %v32
  %v143 = vunpack.c.l.b16 %v33
  %v144 = vunpack.c.l.b16 %v34
  %v145 = vunpack.c.l.b16 %v35
  %v146 = vunpack.c.l.b16 %v36
  %v147 = vunpack.c.l.b16 %v37
  %v148 = vunpack.c.l.b16 %v38
  %v149 = vunpack.c.l.b16 %v39
  %v150 = vunpack.c.l.b16 %v40
  %v151 = vunpack.c.l.b16 %v41
  %v152 = vunpack.c.l.b16 %v42
  %v153 = vunpack.c.l.b16 %v43
  %v154 = vunpack.c.l.b16 %v44
  %v155 = vunpack.c.l.b16 %v45
  %v156 = vunpack.c.l.b16 %v46
  %v157 = vunpack.c.l.b16 %v47
  %v158 = vunpack.c.l.b16 %v48
  %v159 = vunpack.c.l.b16 %v49
  %v160 = vunpack.c.l.b16 %v50
  %v161 = vpack.c.b16 %v126, %v125
  %v162 = vpack.c.b16 %v128, %v127
  %v163 = vpack.c.b16 %v130, %v129
  %v164 = vpack.c.b16 %v132, %v131
  %v165 = vpack.c.b16 %v134, %v133
  %v166 = vpack.c.b16 %v136, %v135
  %v167 = vpack.c.b16 %v138, %v137
  %v168 = vpack.c.b16 %v140, %v139
  %v169 = vpack.c.b16 %v142, %v141
  %v170 = vpack.c.b16 %v144, %v143
  %v171 = vpack.c.b16 %v146, %v145
  %v172 = vpack.c.b16 %v148, %v147
  %v173 = vpack.c.b16 %v150, %v149
  %v174 = vpack.c.b16 %v152, %v151
  %v175 = vpack.c.b16 %v154, %v153
  %v176 = vpack.c.b16 %v156, %v155
  %v177 = vpack.c.b16 %v158, %v157
  %v178 = vpack.c.b16 %v160, %v159
  %vm197 = vcmask 261120
  %v199 = vsel %vm197, %v81, 0
  %v202 = vsel %vm197, %v84, 0
  %204 = vmatprep.subr.bf16.mxu0 0
  %205 = vmatpush1.bf16.msra.mxu0 %v161
  %206 = vmatprep.subr.bf16.mxu0 0
  %207 = vmatpush1.bf16.msra.mxu0 %v162
  %208 = vmatprep.subr.bf16.mxu0 0
  %209 = vmatpush1.bf16.msra.mxu0 %v163
  %210 = vmatprep.subr.bf16.mxu0 0
  %211 = vmatpush1.bf16.msra.mxu0 %v164
  %212 = vmatprep.subr.bf16.mxu0 0
  %213 = vmatpush1.bf16.msra.mxu0 %v165
  %214 = vmatprep.subr.bf16.mxu0 0
  %215 = vmatpush1.bf16.msra.mxu0 %v166
  %216 = vmatprep.subr.bf16.mxu0 0
  %217 = vmatpush1.bf16.msra.mxu0 %v167
  %218 = vmatprep.subr.bf16.mxu0 0
  %219 = vmatpush1.bf16.msra.mxu0 %v168
  %220 = vmatprep.subr.bf16.mxu0 0
  %221 = vmatpush1.bf16.msra.mxu0 %v169
  %222 = vmatprep.subr.bf16.mxu0 0
  %223 = vmatpush1.bf16.msra.mxu0 %v170
  %224 = vmatprep.subr.bf16.mxu0 0
  %225 = vmatpush1.bf16.msra.mxu0 %v171
  %226 = vmatprep.subr.bf16.mxu0 0
  %227 = vmatpush1.bf16.msra.mxu0 %v172
  %228 = vmatprep.subr.bf16.mxu0 0
  %229 = vmatpush1.bf16.msra.mxu0 %v173
  %230 = vmatprep.subr.bf16.mxu0 0
  %231 = vmatpush1.bf16.msra.mxu0 %v174
  %232 = vmatprep.subr.bf16.mxu0 0
  %233 = vmatpush1.bf16.msra.mxu0 %v175
  %234 = vmatprep.subr.bf16.mxu0 0
  %235 = vmatpush1.bf16.msra.mxu0 %v176
  %236 = vmatprep.mubr.bf16.mxu0 %v80
  %237 = vmatmul.mubr.bf16.gmra.mrb[0].mxu0 %v79
  %v238 = vpop.f32.mrb[0].mxu0
  %v239 = vadd.f32 0.0, %v238
  %v240 = vpop.f32.mrb[0].mxu0
  %v241 = vpop.f32.mrb[0].mxu0
  %v242 = vadd.f32 0.0, %v241
  %v243 = vpop.f32.mrb[0].mxu0
  %244 = vmatprep.mubr.bf16.mxu0 %v83
  %245 = vmatmul.mubr.bf16.gmra.mrb[0].mxu0 %v82
  %v246 = vpop.f32.mrb[0].mxu0
  %v247 = vadd.f32 0.0, %v246
  %v248 = vpop.f32.mrb[0].mxu0
  %v249 = vpop.f32.mrb[0].mxu0
  %v250 = vadd.f32 0.0, %v249
  %v251 = vpop.f32.mrb[0].mxu0
  %252 = vdwg.mxu0
  %253 = vmatprep.subr.bf16.mxu0 0
  %254 = vmatpush1.bf16.msra.mxu0 %v177
  %255 = vmatprep.subr.bf16.mxu0 0
  %256 = vmatpush1.bf16.msra.mxu0 %v178
  %257 = vmatprep.subr.bf16.mxu0 0
  %258 = vmatpush1.bf16.msra.mxu0 0
  %259 = vmatprep.subr.bf16.mxu0 0
  %260 = vmatpush1.bf16.msra.mxu0 0
  %261 = vmatprep.subr.bf16.mxu0 0
  %262 = vmatpush1.bf16.msra.mxu0 0
  %263 = vmatprep.subr.bf16.mxu0 0
  %264 = vmatpush1.bf16.msra.mxu0 0
  %265 = vmatprep.subr.bf16.mxu0 0
  %266 = vmatpush1.bf16.msra.mxu0 0
  %267 = vmatprep.subr.bf16.mxu0 0
  %268 = vmatpush1.bf16.msra.mxu0 0
  %269 = vmatprep.subr.bf16.mxu0 0
  %270 = vmatpush1.bf16.msra.mxu0 0
  %271 = vmatprep.subr.bf16.mxu0 0
  %272 = vmatpush1.bf16.msra.mxu0 0
  %273 = vmatprep.subr.bf16.mxu0 0
  %274 = vmatpush1.bf16.msra.mxu0 0
  %275 = vmatprep.subr.bf16.mxu0 0
  %276 = vmatpush1.bf16.msra.mxu0 0
  %277 = vmatprep.subr.bf16.mxu0 0
  %278 = vmatpush1.bf16.msra.mxu0 0
  %279 = vmatprep.subr.bf16.mxu0 0
  %280 = vmatpush1.bf16.msra.mxu0 0
  %281 = vmatprep.subr.bf16.mxu0 0
  %282 = vmatpush1.bf16.msra.mxu0 0
  %283 = vmatprep.subr.bf16.mxu0 0
  %284 = vmatpush1.bf16.msra.mxu0 0
  %285 = vmatprep.mubr.bf16.mxu0 0
  %286 = vmatmul.mubr.bf16.gmra.mrb[0].mxu0 %v199
  %v287 = vpop.f32.mrb[0].mxu0
  %v288 = vadd.f32 %v239, %v287
  %v289 = vpop.f32.mrb[0].mxu0
  %v290 = vpop.f32.mrb[0].mxu0
  %v291 = vadd.f32 %v242, %v290
  %v292 = vpop.f32.mrb[0].mxu0
  %293 = vmatprep.mubr.bf16.mxu0 0
  %294 = vmatmul.mubr.bf16.gmra.mrb[0].mxu0 %v202
  %v295 = vpop.f32.mrb[0].mxu0
  %v296 = vadd.f32 %v247, %v295
  %v297 = vpop.f32.mrb[0].mxu0
  %v298 = vpop.f32.mrb[0].mxu0
  %v299 = vadd.f32 %v250, %v298
  %v300 = vpop.f32.mrb[0].mxu0
  %301 = vdwg.mxu0
  %s302 = scalar_lea.vmem %s0, 48
  %v303 = vld [vmem:[%s302] sm:$0xff]
  %v304 = vld [vmem:[%s302 + $0x8] sm:$0xf]
  %v305 = vld [vmem:[%s302 + $0xc] sm:$0xff]
  %v306 = vld [vmem:[%s302 + $0x14] sm:$0xf]
  %v307 = vld [vmem:[%s302 + $0x18] sm:$0xff]
  %v308 = vld [vmem:[%s302 + $0x20] sm:$0xf]
  %v309 = vld [vmem:[%s302 + $0x24] sm:$0xff]
  %v310 = vld [vmem:[%s302 + $0x2c] sm:$0xf]
  %v319 = vunpack.c.l.b16 %v303
  %v320 = vunpack.c.h.b16 %v303
  %v321 = vunpack.c.l.b16 %v304
  %v322 = vunpack.c.l.b16 %v305
  %v323 = vunpack.c.h.b16 %v305
  %v324 = vunpack.c.l.b16 %v306
  %v325 = vunpack.c.l.b16 %v307
  %v326 = vunpack.c.h.b16 %v307
  %v327 = vunpack.c.l.b16 %v308
  %v328 = vunpack.c.l.b16 %v309
  %v329 = vunpack.c.h.b16 %v309
  %v330 = vunpack.c.l.b16 %v310
  %v331 = vpack.c.b16 %v322, %v319
  %v332 = vpack.c.b16 %v323, %v320
  %v333 = vpack.c.b16 %v324, %v321
  %v334 = vpack.c.b16 %v328, %v325
  %v335 = vpack.c.b16 %v329, %v326
  %v336 = vpack.c.b16 %v330, %v327
  %v342 = vsel %vm197, %v333, 0
  %v345 = vsel %vm197, %v336, 0
  %347 = vmatprep.subr.bf16.mxu0 0
  %348 = vmatpush1.bf16.msra.mxu0 %v161
  %349 = vmatprep.subr.bf16.mxu0 0
  %350 = vmatpush1.bf16.msra.mxu0 %v162
  %351 = vmatprep.subr.bf16.mxu0 0
  %352 = vmatpush1.bf16.msra.mxu0 %v163
  %353 = vmatprep.subr.bf16.mxu0 0
  %354 = vmatpush1.bf16.msra.mxu0 %v164
  %355 = vmatprep.subr.bf16.mxu0 0
  %356 = vmatpush1.bf16.msra.mxu0 %v165
  %357 = vmatprep.subr.bf16.mxu0 0
  %358 = vmatpush1.bf16.msra.mxu0 %v166
  %359 = vmatprep.subr.bf16.mxu0 0
  %360 = vmatpush1.bf16.msra.mxu0 %v167
  %361 = vmatprep.subr.bf16.mxu0 0
  %362 = vmatpush1.bf16.msra.mxu0 %v168
  %363 = vmatprep.subr.bf16.mxu0 0
  %364 = vmatpush1.bf16.msra.mxu0 %v169
  %365 = vmatprep.subr.bf16.mxu0 0
  %366 = vmatpush1.bf16.msra.mxu0 %v170
  %367 = vmatprep.subr.bf16.mxu0 0
  %368 = vmatpush1.bf16.msra.mxu0 %v171
  %369 = vmatprep.subr.bf16.mxu0 0
  %370 = vmatpush1.bf16.msra.mxu0 %v172
  %371 = vmatprep.subr.bf16.mxu0 0
  %372 = vmatpush1.bf16.msra.mxu0 %v173
  %373 = vmatprep.subr.bf16.mxu0 0
  %374 = vmatpush1.bf16.msra.mxu0 %v174
  %375 = vmatprep.subr.bf16.mxu0 0
  %376 = vmatpush1.bf16.msra.mxu0 %v175
  %377 = vmatprep.subr.bf16.mxu0 0
  %378 = vmatpush1.bf16.msra.mxu0 %v176
  %379 = vmatprep.mubr.bf16.mxu0 %v332
  %380 = vmatmul.mubr.bf16.gmra.mrb[0].mxu0 %v331
  %v381 = vpop.f32.mrb[0].mxu0
  %v382 = vadd.f32 0.0, %v381
  %v383 = vpop.f32.mrb[0].mxu0
  %v384 = vpop.f32.mrb[0].mxu0
  %v385 = vadd.f32 0.0, %v384
  %v386 = vpop.f32.mrb[0].mxu0
  %387 = vmatprep.mubr.bf16.mxu0 %v335
  %388 = vmatmul.mubr.bf16.gmra.mrb[0].mxu0 %v334
  %v389 = vpop.f32.mrb[0].mxu0
  %v390 = vadd.f32 0.0, %v389
  %v391 = vpop.f32.mrb[0].mxu0
  %v392 = vpop.f32.mrb[0].mxu0
  %v393 = vadd.f32 0.0, %v392
  %v394 = vpop.f32.mrb[0].mxu0
  %395 = vdwg.mxu0
  %396 = vmatprep.subr.bf16.mxu0 0
  %397 = vmatpush1.bf16.msra.mxu0 %v177
  %398 = vmatprep.subr.bf16.mxu0 0
  %399 = vmatpush1.bf16.msra.mxu0 %v178
  %400 = vmatprep.subr.bf16.mxu0 0
  %401 = vmatpush1.bf16.msra.mxu0 0
  %402 = vmatprep.subr.bf16.mxu0 0
  %403 = vmatpush1.bf16.msra.mxu0 0
  %404 = vmatprep.subr.bf16.mxu0 0
  %405 = vmatpush1.bf16.msra.mxu0 0
  %406 = vmatprep.subr.bf16.mxu0 0
  %407 = vmatpush1.bf16.msra.mxu0 0
  %408 = vmatprep.subr.bf16.mxu0 0
  %409 = vmatpush1.bf16.msra.mxu0 0
  %410 = vmatprep.subr.bf16.mxu0 0
  %411 = vmatpush1.bf16.msra.mxu0 0
  %412 = vmatprep.subr.bf16.mxu0 0
  %413 = vmatpush1.bf16.msra.mxu0 0
  %414 = vmatprep.subr.bf16.mxu0 0
  %415 = vmatpush1.bf16.msra.mxu0 0
  %416 = vmatprep.subr.bf16.mxu0 0
  %417 = vmatpush1.bf16.msra.mxu0 0
  %418 = vmatprep.subr.bf16.mxu0 0
  %419 = vmatpush1.bf16.msra.mxu0 0
  %420 = vmatprep.subr.bf16.mxu0 0
  %421 = vmatpush1.bf16.msra.mxu0 0
  %422 = vmatprep.subr.bf16.mxu0 0
  %423 = vmatpush1.bf16.msra.mxu0 0
  %424 = vmatprep.subr.bf16.mxu0 0
  %425 = vmatpush1.bf16.msra.mxu0 0
  %426 = vmatprep.subr.bf16.mxu0 0
  %427 = vmatpush1.bf16.msra.mxu0 0
  %428 = vmatprep.mubr.bf16.mxu0 0
  %429 = vmatmul.mubr.bf16.gmra.mrb[0].mxu0 %v342
  %v430 = vpop.f32.mrb[0].mxu0
  %v431 = vadd.f32 %v382, %v430
  %v432 = vpop.f32.mrb[0].mxu0
  %v433 = vpop.f32.mrb[0].mxu0
  %v434 = vadd.f32 %v385, %v433
  %v435 = vpop.f32.mrb[0].mxu0
  %436 = vmatprep.mubr.bf16.mxu0 0
  %437 = vmatmul.mubr.bf16.gmra.mrb[0].mxu0 %v345
  %v438 = vpop.f32.mrb[0].mxu0
  %v439 = vadd.f32 %v390, %v438
  %v440 = vpop.f32.mrb[0].mxu0
  %v441 = vpop.f32.mrb[0].mxu0
  %v442 = vadd.f32 %v393, %v441
  %v443 = vpop.f32.mrb[0].mxu0
  %444 = vdwg.mxu0
  %v445 = vmax.f32 %v288, %v431
  %v446 = vmax.f32 %v291, %v434
  %v447 = vmax.f32 %v296, %v439
  %v448 = vmax.f32 %v299, %v442
  %s449 = scalar_lea.vmem %s0, 96
  %v450 = vld [vmem:[%s449] sm:$0xff]
  %v451 = vld [vmem:[%s449 + $0x8] sm:$0xf]
  %v452 = vld [vmem:[%s449 + $0xc] sm:$0xff]
  %v453 = vld [vmem:[%s449 + $0x14] sm:$0xf]
  %v454 = vld [vmem:[%s449 + $0x18] sm:$0xff]
  %v455 = vld [vmem:[%s449 + $0x20] sm:$0xf]
  %v456 = vld [vmem:[%s449 + $0x24] sm:$0xff]
  %v457 = vld [vmem:[%s449 + $0x2c] sm:$0xf]
  %v466 = vunpack.c.l.b16 %v450
  %v467 = vunpack.c.h.b16 %v450
  %v468 = vunpack.c.l.b16 %v451
  %v469 = vunpack.c.l.b16 %v452
  %v470 = vunpack.c.h.b16 %v452
  %v471 = vunpack.c.l.b16 %v453
  %v472 = vunpack.c.l.b16 %v454
  %v473 = vunpack.c.h.b16 %v454
  %v474 = vunpack.c.l.b16 %v455
  %v475 = vunpack.c.l.b16 %v456
  %v476 = vunpack.c.h.b16 %v456
  %v477 = vunpack.c.l.b16 %v457
  %v478 = vpack.c.b16 %v469, %v466
  %v479 = vpack.c.b16 %v470, %v467
  %v480 = vpack.c.b16 %v471, %v468
  %v481 = vpack.c.b16 %v475, %v472
  %v482 = vpack.c.b16 %v476, %v473
  %v483 = vpack.c.b16 %v477, %v474
  %v489 = vsel %vm197, %v480, 0
  %v492 = vsel %vm197, %v483, 0
  %494 = vmatprep.subr.bf16.mxu0 0
  %495 = vmatpush1.bf16.msra.mxu0 %v161
  %496 = vmatprep.subr.bf16.mxu0 0
  %497 = vmatpush1.bf16.msra.mxu0 %v162
  %498 = vmatprep.subr.bf16.mxu0 0
  %499 = vmatpush1.bf16.msra.mxu0 %v163
  %500 = vmatprep.subr.bf16.mxu0 0
  %501 = vmatpush1.bf16.msra.mxu0 %v164
  %502 = vmatprep.subr.bf16.mxu0 0
  %503 = vmatpush1.bf16.msra.mxu0 %v165
  %504 = vmatprep.subr.bf16.mxu0 0
  %505 = vmatpush1.bf16.msra.mxu0 %v166
  %506 = vmatprep.subr.bf16.mxu0 0
  %507 = vmatpush1.bf16.msra.mxu0 %v167
  %508 = vmatprep.subr.bf16.mxu0 0
  %509 = vmatpush1.bf16.msra.mxu0 %v168
  %510 = vmatprep.subr.bf16.mxu0 0
  %511 = vmatpush1.bf16.msra.mxu0 %v169
  %512 = vmatprep.subr.bf16.mxu0 0
  %513 = vmatpush1.bf16.msra.mxu0 %v170
  %514 = vmatprep.subr.bf16.mxu0 0
  %515 = vmatpush1.bf16.msra.mxu0 %v171
  %516 = vmatprep.subr.bf16.mxu0 0
  %517 = vmatpush1.bf16.msra.mxu0 %v172
  %518 = vmatprep.subr.bf16.mxu0 0
  %519 = vmatpush1.bf16.msra.mxu0 %v173
  %520 = vmatprep.subr.bf16.mxu0 0
  %521 = vmatpush1.bf16.msra.mxu0 %v174
  %522 = vmatprep.subr.bf16.mxu0 0
  %523 = vmatpush1.bf16.msra.mxu0 %v175
  %524 = vmatprep.subr.bf16.mxu0 0
  %525 = vmatpush1.bf16.msra.mxu0 %v176
  %526 = vmatprep.mubr.bf16.mxu0 %v479
  %527 = vmatmul.mubr.bf16.gmra.mrb[0].mxu0 %v478
  %v528 = vpop.f32.mrb[0].mxu0
  %v529 = vadd.f32 0.0, %v528
  %v530 = vpop.f32.mrb[0].mxu0
  %v531 = vpop.f32.mrb[0].mxu0
  %v532 = vadd.f32 0.0, %v531
  %v533 = vpop.f32.mrb[0].mxu0
  %534 = vmatprep.mubr.bf16.mxu0 %v482
  %535 = vmatmul.mubr.bf16.gmra.mrb[0].mxu0 %v481
  %v536 = vpop.f32.mrb[0].mxu0
  %v537 = vadd.f32 0.0, %v536
  %v538 = vpop.f32.mrb[0].mxu0
  %v539 = vpop.f32.mrb[0].mxu0
  %v540 = vadd.f32 0.0, %v539
  %v541 = vpop.f32.mrb[0].mxu0
  %542 = vdwg.mxu0
  %543 = vmatprep.subr.bf16.mxu0 0
  %544 = vmatpush1.bf16.msra.mxu0 %v177
  %545 = vmatprep.subr.bf16.mxu0 0
  %546 = vmatpush1.bf16.msra.mxu0 %v178
  %547 = vmatprep.subr.bf16.mxu0 0
  %548 = vmatpush1.bf16.msra.mxu0 0
  %549 = vmatprep.subr.bf16.mxu0 0
  %550 = vmatpush1.bf16.msra.mxu0 0
  %551 = vmatprep.subr.bf16.mxu0 0
  %552 = vmatpush1.bf16.msra.mxu0 0
  %553 = vmatprep.subr.bf16.mxu0 0
  %554 = vmatpush1.bf16.msra.mxu0 0
  %555 = vmatprep.subr.bf16.mxu0 0
  %556 = vmatpush1.bf16.msra.mxu0 0
  %557 = vmatprep.subr.bf16.mxu0 0
  %558 = vmatpush1.bf16.msra.mxu0 0
  %559 = vmatprep.subr.bf16.mxu0 0
  %560 = vmatpush1.bf16.msra.mxu0 0
  %561 = vmatprep.subr.bf16.mxu0 0
  %562 = vmatpush1.bf16.msra.mxu0 0
  %563 = vmatprep.subr.bf16.mxu0 0
  %564 = vmatpush1.bf16.msra.mxu0 0
  %565 = vmatprep.subr.bf16.mxu0 0
  %566 = vmatpush1.bf16.msra.mxu0 0
  %567 = vmatprep.subr.bf16.mxu0 0
  %568 = vmatpush1.bf16.msra.mxu0 0
  %569 = vmatprep.subr.bf16.mxu0 0
  %570 = vmatpush1.bf16.msra.mxu0 0
  %571 = vmatprep.subr.bf16.mxu0 0
  %572 = vmatpush1.bf16.msra.mxu0 0
  %573 = vmatprep.subr.bf16.mxu0 0
  %574 = vmatpush1.bf16.msra.mxu0 0
  %575 = vmatprep.mubr.bf16.mxu0 0
  %576 = vmatmul.mubr.bf16.gmra.mrb[0].mxu0 %v489
  %v577 = vpop.f32.mrb[0].mxu0
  %v578 = vadd.f32 %v529, %v577
  %v579 = vpop.f32.mrb[0].mxu0
  %v580 = vpop.f32.mrb[0].mxu0
  %v581 = vadd.f32 %v532, %v580
  %v582 = vpop.f32.mrb[0].mxu0
  %583 = vmatprep.mubr.bf16.mxu0 0
  %584 = vmatmul.mubr.bf16.gmra.mrb[0].mxu0 %v492
  %v585 = vpop.f32.mrb[0].mxu0
  %v586 = vadd.f32 %v537, %v585
  %v587 = vpop.f32.mrb[0].mxu0
  %v588 = vpop.f32.mrb[0].mxu0
  %v589 = vadd.f32 %v540, %v588
  %v590 = vpop.f32.mrb[0].mxu0
  %591 = vdwg.mxu0
  %v592 = vmax.f32 %v445, %v578
  %v593 = vmax.f32 %v446, %v581
  %v594 = vmax.f32 %v447, %v586
  %v595 = vmax.f32 %v448, %v589
  %s596 = scalar_lea.vmem %s0, 144
  %v597 = vld [vmem:[%s596] sm:$0xff]
  %v598 = vld [vmem:[%s596 + $0x8] sm:$0xf]
  %v599 = vld [vmem:[%s596 + $0xc] sm:$0xff]
  %v600 = vld [vmem:[%s596 + $0x14] sm:$0xf]
  %v601 = vld [vmem:[%s596 + $0x18] sm:$0xff]
  %v602 = vld [vmem:[%s596 + $0x20] sm:$0xf]
  %v603 = vld [vmem:[%s596 + $0x24] sm:$0xff]
  %v604 = vld [vmem:[%s596 + $0x2c] sm:$0xf]
  %v613 = vunpack.c.l.b16 %v597
  %v614 = vunpack.c.h.b16 %v597
  %v615 = vunpack.c.l.b16 %v598
  %v616 = vunpack.c.l.b16 %v599
  %v617 = vunpack.c.h.b16 %v599
  %v618 = vunpack.c.l.b16 %v600
  %v619 = vunpack.c.l.b16 %v601
  %v620 = vunpack.c.h.b16 %v601
  %v621 = vunpack.c.l.b16 %v602
  %v622 = vunpack.c.l.b16 %v603
  %v623 = vunpack.c.h.b16 %v603
  %v624 = vunpack.c.l.b16 %v604
  %v625 = vpack.c.b16 %v616, %v613
  %v626 = vpack.c.b16 %v617, %v614
  %v627 = vpack.c.b16 %v618, %v615
  %v628 = vpack.c.b16 %v622, %v619
  %v629 = vpack.c.b16 %v623, %v620
  %v630 = vpack.c.b16 %v624, %v621
  %v636 = vsel %vm197, %v627, 0
  %v639 = vsel %vm197, %v630, 0
  %641 = vmatprep.subr.bf16.mxu0 0
  %642 = vmatpush1.bf16.msra.mxu0 %v161
  %643 = vmatprep.subr.bf16.mxu0 0
  %644 = vmatpush1.bf16.msra.mxu0 %v162
  %645 = vmatprep.subr.bf16.mxu0 0
  %646 = vmatpush1.bf16.msra.mxu0 %v163
  %647 = vmatprep.subr.bf16.mxu0 0
  %648 = vmatpush1.bf16.msra.mxu0 %v164
  %649 = vmatprep.subr.bf16.mxu0 0
  %650 = vmatpush1.bf16.msra.mxu0 %v165
  %651 = vmatprep.subr.bf16.mxu0 0
  %652 = vmatpush1.bf16.msra.mxu0 %v166
  %653 = vmatprep.subr.bf16.mxu0 0
  %654 = vmatpush1.bf16.msra.mxu0 %v167
  %655 = vmatprep.subr.bf16.mxu0 0
  %656 = vmatpush1.bf16.msra.mxu0 %v168
  %657 = vmatprep.subr.bf16.mxu0 0
  %658 = vmatpush1.bf16.msra.mxu0 %v169
  %659 = vmatprep.subr.bf16.mxu0 0
  %660 = vmatpush1.bf16.msra.mxu0 %v170
  %661 = vmatprep.subr.bf16.mxu0 0
  %662 = vmatpush1.bf16.msra.mxu0 %v171
  %663 = vmatprep.subr.bf16.mxu0 0
  %664 = vmatpush1.bf16.msra.mxu0 %v172
  %665 = vmatprep.subr.bf16.mxu0 0
  %666 = vmatpush1.bf16.msra.mxu0 %v173
  %667 = vmatprep.subr.bf16.mxu0 0
  %668 = vmatpush1.bf16.msra.mxu0 %v174
  %669 = vmatprep.subr.bf16.mxu0 0
  %670 = vmatpush1.bf16.msra.mxu0 %v175
  %671 = vmatprep.subr.bf16.mxu0 0
  %672 = vmatpush1.bf16.msra.mxu0 %v176
  %673 = vmatprep.mubr.bf16.mxu0 %v626
  %674 = vmatmul.mubr.bf16.gmra.mrb[0].mxu0 %v625
  %v675 = vpop.f32.mrb[0].mxu0
  %v676 = vadd.f32 0.0, %v675
  %v677 = vpop.f32.mrb[0].mxu0
  %v678 = vpop.f32.mrb[0].mxu0
  %v679 = vadd.f32 0.0, %v678
  %v680 = vpop.f32.mrb[0].mxu0
  %681 = vmatprep.mubr.bf16.mxu0 %v629
  %682 = vmatmul.mubr.bf16.gmra.mrb[0].mxu0 %v628
  %v683 = vpop.f32.mrb[0].mxu0
  %v684 = vadd.f32 0.0, %v683
  %v685 = vpop.f32.mrb[0].mxu0
  %v686 = vpop.f32.mrb[0].mxu0
  %v687 = vadd.f32 0.0, %v686
  %v688 = vpop.f32.mrb[0].mxu0
  %689 = vdwg.mxu0
  %690 = vmatprep.subr.bf16.mxu0 0
  %691 = vmatpush1.bf16.msra.mxu0 %v177
  %692 = vmatprep.subr.bf16.mxu0 0
  %693 = vmatpush1.bf16.msra.mxu0 %v178
  %694 = vmatprep.subr.bf16.mxu0 0
  %695 = vmatpush1.bf16.msra.mxu0 0
  %696 = vmatprep.subr.bf16.mxu0 0
  %697 = vmatpush1.bf16.msra.mxu0 0
  %698 = vmatprep.subr.bf16.mxu0 0
  %699 = vmatpush1.bf16.msra.mxu0 0
  %700 = vmatprep.subr.bf16.mxu0 0
  %701 = vmatpush1.bf16.msra.mxu0 0
  %702 = vmatprep.subr.bf16.mxu0 0
  %703 = vmatpush1.bf16.msra.mxu0 0
  %704 = vmatprep.subr.bf16.mxu0 0
  %705 = vmatpush1.bf16.msra.mxu0 0
  %706 = vmatprep.subr.bf16.mxu0 0
  %707 = vmatpush1.bf16.msra.mxu0 0
  %708 = vmatprep.subr.bf16.mxu0 0
  %709 = vmatpush1.bf16.msra.mxu0 0
  %710 = vmatprep.subr.bf16.mxu0 0
  %711 = vmatpush1.bf16.msra.mxu0 0
  %712 = vmatprep.subr.bf16.mxu0 0
  %713 = vmatpush1.bf16.msra.mxu0 0
  %714 = vmatprep.subr.bf16.mxu0 0
  %715 = vmatpush1.bf16.msra.mxu0 0
  %716 = vmatprep.subr.bf16.mxu0 0
  %717 = vmatpush1.bf16.msra.mxu0 0
  %718 = vmatprep.subr.bf16.mxu0 0
  %719 = vmatpush1.bf16.msra.mxu0 0
  %720 = vmatprep.subr.bf16.mxu0 0
  %721 = vmatpush1.bf16.msra.mxu0 0
  %722 = vmatprep.mubr.bf16.mxu0 0
  %723 = vmatmul.mubr.bf16.gmra.mrb[0].mxu0 %v636
  %v724 = vpop.f32.mrb[0].mxu0
  %v725 = vadd.f32 %v676, %v724
  %v726 = vpop.f32.mrb[0].mxu0
  %v727 = vpop.f32.mrb[0].mxu0
  %v728 = vadd.f32 %v679, %v727
  %v729 = vpop.f32.mrb[0].mxu0
  %730 = vmatprep.mubr.bf16.mxu0 0
  %731 = vmatmul.mubr.bf16.gmra.mrb[0].mxu0 %v639
  %v732 = vpop.f32.mrb[0].mxu0
  %v733 = vadd.f32 %v684, %v732
  %v734 = vpop.f32.mrb[0].mxu0
  %v735 = vpop.f32.mrb[0].mxu0
  %v736 = vadd.f32 %v687, %v735
  %v737 = vpop.f32.mrb[0].mxu0
  %738 = vdwg.mxu0
  %v739 = vmax.f32 %v592, %v725
  %v740 = vmax.f32 %v593, %v728
  %v741 = vmax.f32 %v594, %v733
  %v742 = vmax.f32 %v595, %v736
  %v743 = vld [vmem:[%s2] sm:$0x1]
  %v745 = vlaneseq
  %v746 = vshrl.u32 %v745, 7
  %v747 = vsub.s32 0, %v746
  %v748 = vrot.slane %v743, %v747
  %v750 = vadd.f32 %v739, %v748
  %v751 = vadd.f32 %v740, %v748
  %v752 = vadd.f32 %v741, %v748
  %v753 = vadd.f32 %v742, %v748
  %v754 = vmax.f32 %v750, 0.0
  %v755 = vmax.f32 %v751, 0.0
  %v756 = vmax.f32 %v752, 0.0
  %v757 = vmax.f32 %v753, 0.0
  %v758 = vpack.c.bf16 %v755, %v754
  %v759 = vpack.c.bf16 %v757, %v756
  %v762 = vunpack.c.l.b16 %v758
  %v763 = vunpack.c.h.b16 %v758
  %v764 = vunpack.c.l.b16 %v759
  %v765 = vunpack.c.h.b16 %v759
  %v766 = vpack.c.b16 %v762, %v762
  %v767 = vpack.c.b16 %v763, %v763
  %v768 = vpack.c.b16 %v764, %v764
  %v769 = vpack.c.b16 %v765, %v765
  %vm774 = vcmask 519168
  %775 = vst.msk [vmem:[%s3] sm:$0xf] %vm774, %v766
  %776 = vst.msk [vmem:[%s3 + $0x4] sm:$0xf] %vm774, %v767
  %777 = vst.msk [vmem:[%s3 + $0x8] sm:$0xf] %vm774, %v768
  %778 = vst.msk [vmem:[%s3 + $0xc] sm:$0xf] %vm774, %v769
  // Predicated region
  $region14: #{complex_cnn_forward.6} parent=0 // pred_check
    _
  $region15: #{complex_cnn_forward.6} parent=0 // pred_check_branch
    %780 = sbr.rel (0) target = $region17
  $region16: #{complex_cnn_forward.6} parent=0 // pred_region
    _
  $region17: #{complex_cnn_forward.6} parent=0 // pred_fallthru
    _
  // Predicated region
  $region18: #{complex_cnn_forward.6} parent=0 // pred_check
    _
  $region19: #{complex_cnn_forward.6} parent=0 // pred_check_branch
    %782 = sbr.rel (0) target = $region21
  $region20: #{complex_cnn_forward.6} parent=0 // pred_region
    _
  $region21: #{complex_cnn_forward.6} parent=0 // pred_fallthru
    _

// kernel: complex_cnn_forward.7
$region0: #{complex_cnn_forward.7}
  #allocation0 [shape = 'u32[]', space=smem, size = 0x4, offset = 0x4, fixed_abs, tag = 'smem constant byte address 0x4 - core index']
  #allocation1 [shape = 'u32[144,128]{1,0:T(1,128)}', space=vmem, size = 0x12000, scoped, tag = 'internal scratch']
  %s0 = inlined_call_operand.vmem [shape: bf16[4,8,576], index: 0, kind: input, shape index: {}]
  %s1 = inlined_call_operand.vmem [shape: bf16[576,128], index: 1, kind: input, shape index: {}]
  %s2 = inlined_call_operand.vmem [shape: f32[1,128], index: 2, kind: input, shape index: {}]
  %s3 = inlined_call_operand.vmem [shape: bf16[8,128], index: 3, kind: output, shape index: {}]
  %s4 = sld [smem:[#allocation0]]
  $region22: #{complex_cnn_forward.7} parent=0
    _
  %s6 = ssub.s32 1, %s4
  %s7 = scalar_select 0, %s6, %s4
  // Predicated region
  $region2: #{complex_cnn_forward.7} parent=0 // pred_check
    _
  $region3: #{complex_cnn_forward.7} parent=0 // pred_check_branch
    %9 = sbr.rel (0) target = $region5
  $region4: #{complex_cnn_forward.7} parent=0 // pred_region
    _
  $region5: #{complex_cnn_forward.7} parent=0 // pred_fallthru
    _
  // Predicated region
  $region6: #{complex_cnn_forward.7} parent=0 // pred_check
    _
  $region7: #{complex_cnn_forward.7} parent=0 // pred_check_branch
    %11 = sbr.rel (0) target = $region9
  $region8: #{complex_cnn_forward.7} parent=0 // pred_region
    _
  $region9: #{complex_cnn_forward.7} parent=0 // pred_fallthru
    _
  // Predicated region
  $region10: #{complex_cnn_forward.7} parent=0 // pred_check
    _
  $region11: #{complex_cnn_forward.7} parent=0 // pred_check_branch
    %13 = sbr.rel (0) target = $region13
  $region12: #{complex_cnn_forward.7} parent=0 // pred_region
    _
  $region13: #{complex_cnn_forward.7} parent=0 // pred_fallthru
    _
  %v15 = vld [vmem:[%s1] sm:$0xf]
  %v16 = vld [vmem:[%s1 + $0x4] sm:$0xf]
  %v17 = vld [vmem:[%s1 + $0x8] sm:$0xf]
  %v18 = vld [vmem:[%s1 + $0xc] sm:$0xf]
  %v19 = vld [vmem:[%s1 + $0x10] sm:$0xf]
  %v20 = vld [vmem:[%s1 + $0x14] sm:$0xf]
  %v21 = vld [vmem:[%s1 + $0x18] sm:$0xf]
  %v22 = vld [vmem:[%s1 + $0x1c] sm:$0xf]
  %v23 = vld [vmem:[%s1 + $0x20] sm:$0xf]
  %v24 = vld [vmem:[%s1 + $0x24] sm:$0xf]
  %v25 = vld [vmem:[%s1 + $0x28] sm:$0xf]
  %v26 = vld [vmem:[%s1 + $0x2c] sm:$0xf]
  %v27 = vld [vmem:[%s1 + $0x30] sm:$0xf]
  %v28 = vld [vmem:[%s1 + $0x34] sm:$0xf]
  %v29 = vld [vmem:[%s1 + $0x38] sm:$0xf]
  %v30 = vld [vmem:[%s1 + $0x3c] sm:$0xf]
  %v31 = vld [vmem:[%s1 + $0x40] sm:$0xf]
  %v32 = vld [vmem:[%s1 + $0x44] sm:$0xf]
  %v33 = vld [vmem:[%s1 + $0x48] sm:$0xf]
  %v34 = vld [vmem:[%s1 + $0x4c] sm:$0xf]
  %v35 = vld [vmem:[%s1 + $0x50] sm:$0xf]
  %v36 = vld [vmem:[%s1 + $0x54] sm:$0xf]
  %v37 = vld [vmem:[%s1 + $0x58] sm:$0xf]
  %v38 = vld [vmem:[%s1 + $0x5c] sm:$0xf]
  %v39 = vld [vmem:[%s1 + $0x60] sm:$0xf]
  %v40 = vld [vmem:[%s1 + $0x64] sm:$0xf]
  %v41 = vld [vmem:[%s1 + $0x68] sm:$0xf]
  %v42 = vld [vmem:[%s1 + $0x6c] sm:$0xf]
  %v43 = vld [vmem:[%s1 + $0x70] sm:$0xf]
  %v44 = vld [vmem:[%s1 + $0x74] sm:$0xf]
  %v45 = vld [vmem:[%s1 + $0x78] sm:$0xf]
  %v46 = vld [vmem:[%s1 + $0x7c] sm:$0xf]
  %v47 = vld [vmem:[%s1 + $0x80] sm:$0xf]
  %v48 = vld [vmem:[%s1 + $0x84] sm:$0xf]
  %v49 = vld [vmem:[%s1 + $0x88] sm:$0xf]
  %v50 = vld [vmem:[%s1 + $0x8c] sm:$0xf]
  %v51 = vld [vmem:[%s1 + $0x90] sm:$0xf]
  %v52 = vld [vmem:[%s1 + $0x94] sm:$0xf]
  %v53 = vld [vmem:[%s1 + $0x98] sm:$0xf]
  %v54 = vld [vmem:[%s1 + $0x9c] sm:$0xf]
  %v55 = vld [vmem:[%s1 + $0xa0] sm:$0xf]
  %v56 = vld [vmem:[%s1 + $0xa4] sm:$0xf]
  %v57 = vld [vmem:[%s1 + $0xa8] sm:$0xf]
  %v58 = vld [vmem:[%s1 + $0xac] sm:$0xf]
  %v59 = vld [vmem:[%s1 + $0xb0] sm:$0xf]
  %v60 = vld [vmem:[%s1 + $0xb4] sm:$0xf]
  %v61 = vld [vmem:[%s1 + $0xb8] sm:$0xf]
  %v62 = vld [vmem:[%s1 + $0xbc] sm:$0xf]
  %v63 = vld [vmem:[%s1 + $0xc0] sm:$0xf]
  %v64 = vld [vmem:[%s1 + $0xc4] sm:$0xf]
  %v65 = vld [vmem:[%s1 + $0xc8] sm:$0xf]
  %v66 = vld [vmem:[%s1 + $0xcc] sm:$0xf]
  %v67 = vld [vmem:[%s1 + $0xd0] sm:$0xf]
  %v68 = vld [vmem:[%s1 + $0xd4] sm:$0xf]
  %v69 = vld [vmem:[%s1 + $0xd8] sm:$0xf]
  %v70 = vld [vmem:[%s1 + $0xdc] sm:$0xf]
  %v71 = vld [vmem:[%s1 + $0xe0] sm:$0xf]
  %v72 = vld [vmem:[%s1 + $0xe4] sm:$0xf]
  %v73 = vld [vmem:[%s1 + $0xe8] sm:$0xf]
  %v74 = vld [vmem:[%s1 + $0xec] sm:$0xf]
  %v75 = vld [vmem:[%s1 + $0xf0] sm:$0xf]
  %v76 = vld [vmem:[%s1 + $0xf4] sm:$0xf]
  %v77 = vld [vmem:[%s1 + $0xf8] sm:$0xf]
  %v78 = vld [vmem:[%s1 + $0xfc] sm:$0xf]
  %v79 = vld [vmem:[%s1 + $0x100] sm:$0xf]
  %v80 = vld [vmem:[%s1 + $0x104] sm:$0xf]
  %v81 = vld [vmem:[%s1 + $0x108] sm:$0xf]
  %v82 = vld [vmem:[%s1 + $0x10c] sm:$0xf]
  %v83 = vld [vmem:[%s1 + $0x110] sm:$0xf]
  %v84 = vld [vmem:[%s1 + $0x114] sm:$0xf]
  %v85 = vld [vmem:[%s1 + $0x118] sm:$0xf]
  %v86 = vld [vmem:[%s1 + $0x11c] sm:$0xf]
  %v87 = vld [vmem:[%s0] sm:$0xff]
  %v88 = vld [vmem:[%s0 + $0x8] sm:$0xff]
  %v89 = vld [vmem:[%s0 + $0x10] sm:$0xf]
  %v93 = vunpack.c.l.b16 %v87
  %v94 = vunpack.c.h.b16 %v87
  %v95 = vunpack.c.l.b16 %v88
  %v96 = vunpack.c.h.b16 %v88
  %v97 = vunpack.c.l.b16 %v89
  %v98 = vpack.c.b16 %v93, %v93
  %v99 = vpack.c.b16 %v94, %v94
  %v100 = vpack.c.b16 %v95, %v95
  %v101 = vpack.c.b16 %v96, %v96
  %v102 = vpack.c.b16 %v97, %v97
  %v179 = vunpack.c.l.b16 %v15
  %v180 = vunpack.c.l.b16 %v16
  %v181 = vunpack.c.l.b16 %v17
  %v182 = vunpack.c.l.b16 %v18
  %v183 = vunpack.c.l.b16 %v19
  %v184 = vunpack.c.l.b16 %v20
  %v185 = vunpack.c.l.b16 %v21
  %v186 = vunpack.c.l.b16 %v22
  %v187 = vunpack.c.l.b16 %v23
  %v188 = vunpack.c.l.b16 %v24
  %v189 = vunpack.c.l.b16 %v25
  %v190 = vunpack.c.l.b16 %v26
  %v191 = vunpack.c.l.b16 %v27
  %v192 = vunpack.c.l.b16 %v28
  %v193 = vunpack.c.l.b16 %v29
  %v194 = vunpack.c.l.b16 %v30
  %v195 = vunpack.c.l.b16 %v31
  %v196 = vunpack.c.l.b16 %v32
  %v197 = vunpack.c.l.b16 %v33
  %v198 = vunpack.c.l.b16 %v34
  %v199 = vunpack.c.l.b16 %v35
  %v200 = vunpack.c.l.b16 %v36
  %v201 = vunpack.c.l.b16 %v37
  %v202 = vunpack.c.l.b16 %v38
  %v203 = vunpack.c.l.b16 %v39
  %v204 = vunpack.c.l.b16 %v40
  %v205 = vunpack.c.l.b16 %v41
  %v206 = vunpack.c.l.b16 %v42
  %v207 = vunpack.c.l.b16 %v43
  %v208 = vunpack.c.l.b16 %v44
  %v209 = vunpack.c.l.b16 %v45
  %v210 = vunpack.c.l.b16 %v46
  %v211 = vunpack.c.l.b16 %v47
  %v212 = vunpack.c.l.b16 %v48
  %v213 = vunpack.c.l.b16 %v49
  %v214 = vunpack.c.l.b16 %v50
  %v215 = vunpack.c.l.b16 %v51
  %v216 = vunpack.c.l.b16 %v52
  %v217 = vunpack.c.l.b16 %v53
  %v218 = vunpack.c.l.b16 %v54
  %v219 = vunpack.c.l.b16 %v55
  %v220 = vunpack.c.l.b16 %v56
  %v221 = vunpack.c.l.b16 %v57
  %v222 = vunpack.c.l.b16 %v58
  %v223 = vunpack.c.l.b16 %v59
  %v224 = vunpack.c.l.b16 %v60
  %v225 = vunpack.c.l.b16 %v61
  %v226 = vunpack.c.l.b16 %v62
  %v227 = vunpack.c.l.b16 %v63
  %v228 = vunpack.c.l.b16 %v64
  %v229 = vunpack.c.l.b16 %v65
  %v230 = vunpack.c.l.b16 %v66
  %v231 = vunpack.c.l.b16 %v67
  %v232 = vunpack.c.l.b16 %v68
  %v233 = vunpack.c.l.b16 %v69
  %v234 = vunpack.c.l.b16 %v70
  %v235 = vunpack.c.l.b16 %v71
  %v236 = vunpack.c.l.b16 %v72
  %v237 = vunpack.c.l.b16 %v73
  %v238 = vunpack.c.l.b16 %v74
  %v239 = vunpack.c.l.b16 %v75
  %v240 = vunpack.c.l.b16 %v76
  %v241 = vunpack.c.l.b16 %v77
  %v242 = vunpack.c.l.b16 %v78
  %v243 = vunpack.c.l.b16 %v79
  %v244 = vunpack.c.l.b16 %v80
  %v245 = vunpack.c.l.b16 %v81
  %v246 = vunpack.c.l.b16 %v82
  %v247 = vunpack.c.l.b16 %v83
  %v248 = vunpack.c.l.b16 %v84
  %v249 = vunpack.c.l.b16 %v85
  %v250 = vunpack.c.l.b16 %v86
  %v251 = vpack.c.b16 %v180, %v179
  %v252 = vpack.c.b16 %v182, %v181
  %v253 = vpack.c.b16 %v184, %v183
  %v254 = vpack.c.b16 %v186, %v185
  %v255 = vpack.c.b16 %v188, %v187
  %v256 = vpack.c.b16 %v190, %v189
  %v257 = vpack.c.b16 %v192, %v191
  %v258 = vpack.c.b16 %v194, %v193
  %v259 = vpack.c.b16 %v196, %v195
  %v260 = vpack.c.b16 %v198, %v197
  %v261 = vpack.c.b16 %v200, %v199
  %v262 = vpack.c.b16 %v202, %v201
  %v263 = vpack.c.b16 %v204, %v203
  %v264 = vpack.c.b16 %v206, %v205
  %v265 = vpack.c.b16 %v208, %v207
  %v266 = vpack.c.b16 %v210, %v209
  %v267 = vpack.c.b16 %v212, %v211
  %v268 = vpack.c.b16 %v214, %v213
  %v269 = vpack.c.b16 %v216, %v215
  %v270 = vpack.c.b16 %v218, %v217
  %v271 = vpack.c.b16 %v220, %v219
  %v272 = vpack.c.b16 %v222, %v221
  %v273 = vpack.c.b16 %v224, %v223
  %v274 = vpack.c.b16 %v226, %v225
  %v275 = vpack.c.b16 %v228, %v227
  %v276 = vpack.c.b16 %v230, %v229
  %v277 = vpack.c.b16 %v232, %v231
  %v278 = vpack.c.b16 %v234, %v233
  %v279 = vpack.c.b16 %v236, %v235
  %v280 = vpack.c.b16 %v238, %v237
  %v281 = vpack.c.b16 %v240, %v239
  %v282 = vpack.c.b16 %v242, %v241
  %v283 = vpack.c.b16 %v244, %v243
  %v284 = vpack.c.b16 %v246, %v245
  %v285 = vpack.c.b16 %v248, %v247
  %v286 = vpack.c.b16 %v250, %v249
  %vm323 = vcmask 523264
  %v325 = vsel %vm323, %v102, 0
  %327 = vmatprep.subr.bf16.mxu0 0
  %328 = vmatpush1.bf16.msra.mxu0 %v251
  %329 = vmatprep.subr.bf16.mxu0 0
  %330 = vmatpush1.bf16.msra.mxu0 %v252
  %331 = vmatprep.subr.bf16.mxu0 0
  %332 = vmatpush1.bf16.msra.mxu0 %v253
  %333 = vmatprep.subr.bf16.mxu0 0
  %334 = vmatpush1.bf16.msra.mxu0 %v254
  %335 = vmatprep.subr.bf16.mxu0 0
  %336 = vmatpush1.bf16.msra.mxu0 %v255
  %337 = vmatprep.subr.bf16.mxu0 0
  %338 = vmatpush1.bf16.msra.mxu0 %v256
  %339 = vmatprep.subr.bf16.mxu0 0
  %340 = vmatpush1.bf16.msra.mxu0 %v257
  %341 = vmatprep.subr.bf16.mxu0 0
  %342 = vmatpush1.bf16.msra.mxu0 %v258
  %343 = vmatprep.subr.bf16.mxu0 0
  %344 = vmatpush1.bf16.msra.mxu0 %v259
  %345 = vmatprep.subr.bf16.mxu0 0
  %346 = vmatpush1.bf16.msra.mxu0 %v260
  %347 = vmatprep.subr.bf16.mxu0 0
  %348 = vmatpush1.bf16.msra.mxu0 %v261
  %349 = vmatprep.subr.bf16.mxu0 0
  %350 = vmatpush1.bf16.msra.mxu0 %v262
  %351 = vmatprep.subr.bf16.mxu0 0
  %352 = vmatpush1.bf16.msra.mxu0 %v263
  %353 = vmatprep.subr.bf16.mxu0 0
  %354 = vmatpush1.bf16.msra.mxu0 %v264
  %355 = vmatprep.subr.bf16.mxu0 0
  %356 = vmatpush1.bf16.msra.mxu0 %v265
  %357 = vmatprep.subr.bf16.mxu0 0
  %358 = vmatpush1.bf16.msra.mxu0 %v266
  %359 = vmatprep.mubr.bf16.mxu0 %v99
  %360 = vmatmul.mubr.bf16.gmra.mrb[0].mxu0 %v98
  %v361 = vpop.f32.mrb[0].mxu0
  %v362 = vadd.f32 0.0, %v361
  %v363 = vpop.f32.mrb[0].mxu0
  %v364 = vpop.f32.mrb[0].mxu0
  %v365 = vpop.f32.mrb[0].mxu0
  %366 = vdwg.mxu0
  %367 = vmatprep.subr.bf16.mxu0 0
  %368 = vmatpush1.bf16.msra.mxu0 %v267
  %369 = vmatprep.subr.bf16.mxu0 0
  %370 = vmatpush1.bf16.msra.mxu0 %v268
  %371 = vmatprep.subr.bf16.mxu0 0
  %372 = vmatpush1.bf16.msra.mxu0 %v269
  %373 = vmatprep.subr.bf16.mxu0 0
  %374 = vmatpush1.bf16.msra.mxu0 %v270
  %375 = vmatprep.subr.bf16.mxu0 0
  %376 = vmatpush1.bf16.msra.mxu0 %v271
  %377 = vmatprep.subr.bf16.mxu0 0
  %378 = vmatpush1.bf16.msra.mxu0 %v272
  %379 = vmatprep.subr.bf16.mxu0 0
  %380 = vmatpush1.bf16.msra.mxu0 %v273
  %381 = vmatprep.subr.bf16.mxu0 0
  %382 = vmatpush1.bf16.msra.mxu0 %v274
  %383 = vmatprep.subr.bf16.mxu0 0
  %384 = vmatpush1.bf16.msra.mxu0 %v275
  %385 = vmatprep.subr.bf16.mxu0 0
  %386 = vmatpush1.bf16.msra.mxu0 %v276
  %387 = vmatprep.subr.bf16.mxu0 0
  %388 = vmatpush1.bf16.msra.mxu0 %v277
  %389 = vmatprep.subr.bf16.mxu0 0
  %390 = vmatpush1.bf16.msra.mxu0 %v278
  %391 = vmatprep.subr.bf16.mxu0 0
  %392 = vmatpush1.bf16.msra.mxu0 %v279
  %393 = vmatprep.subr.bf16.mxu0 0
  %394 = vmatpush1.bf16.msra.mxu0 %v280
  %395 = vmatprep.subr.bf16.mxu0 0
  %396 = vmatpush1.bf16.msra.mxu0 %v281
  %397 = vmatprep.subr.bf16.mxu0 0
  %398 = vmatpush1.bf16.msra.mxu0 %v282
  %399 = vmatprep.mubr.bf16.mxu0 %v101
  %400 = vmatmul.mubr.bf16.gmra.mrb[0].mxu0 %v100
  %v401 = vpop.f32.mrb[0].mxu0
  %v402 = vadd.f32 %v362, %v401
  %v403 = vpop.f32.mrb[0].mxu0
  %v404 = vpop.f32.mrb[0].mxu0
  %v405 = vpop.f32.mrb[0].mxu0
  %406 = vdwg.mxu0
  %407 = vmatprep.subr.bf16.mxu0 0
  %408 = vmatpush1.bf16.msra.mxu0 %v283
  %409 = vmatprep.subr.bf16.mxu0 0
  %410 = vmatpush1.bf16.msra.mxu0 %v284
  %411 = vmatprep.subr.bf16.mxu0 0
  %412 = vmatpush1.bf16.msra.mxu0 %v285
  %413 = vmatprep.subr.bf16.mxu0 0
  %414 = vmatpush1.bf16.msra.mxu0 %v286
  %415 = vmatprep.subr.bf16.mxu0 0
  %416 = vmatpush1.bf16.msra.mxu0 0
  %417 = vmatprep.subr.bf16.mxu0 0
  %418 = vmatpush1.bf16.msra.mxu0 0
  %419 = vmatprep.subr.bf16.mxu0 0
  %420 = vmatpush1.bf16.msra.mxu0 0
  %421 = vmatprep.subr.bf16.mxu0 0
  %422 = vmatpush1.bf16.msra.mxu0 0
  %423 = vmatprep.subr.bf16.mxu0 0
  %424 = vmatpush1.bf16.msra.mxu0 0
  %425 = vmatprep.subr.bf16.mxu0 0
  %426 = vmatpush1.bf16.msra.mxu0 0
  %427 = vmatprep.subr.bf16.mxu0 0
  %428 = vmatpush1.bf16.msra.mxu0 0
  %429 = vmatprep.subr.bf16.mxu0 0
  %430 = vmatpush1.bf16.msra.mxu0 0
  %431 = vmatprep.subr.bf16.mxu0 0
  %432 = vmatpush1.bf16.msra.mxu0 0
  %433 = vmatprep.subr.bf16.mxu0 0
  %434 = vmatpush1.bf16.msra.mxu0 0
  %435 = vmatprep.subr.bf16.mxu0 0
  %436 = vmatpush1.bf16.msra.mxu0 0
  %437 = vmatprep.subr.bf16.mxu0 0
  %438 = vmatpush1.bf16.msra.mxu0 0
  %439 = vmatprep.mubr.bf16.mxu0 0
  %440 = vmatmul.mubr.bf16.gmra.mrb[0].mxu0 %v325
  %v441 = vpop.f32.mrb[0].mxu0
  %v442 = vadd.f32 %v402, %v441
  %v443 = vpop.f32.mrb[0].mxu0
  %v444 = vpop.f32.mrb[0].mxu0
  %v445 = vpop.f32.mrb[0].mxu0
  %446 = vdwg.mxu0
  %s447 = scalar_lea.vmem %s0, 20
  %v448 = vld [vmem:[%s447] sm:$0xff]
  %v449 = vld [vmem:[%s447 + $0x8] sm:$0xff]
  %v450 = vld [vmem:[%s447 + $0x10] sm:$0xf]
  %v454 = vunpack.c.l.b16 %v448
  %v455 = vunpack.c.h.b16 %v448
  %v456 = vunpack.c.l.b16 %v449
  %v457 = vunpack.c.h.b16 %v449
  %v458 = vunpack.c.l.b16 %v450
  %v459 = vpack.c.b16 %v454, %v454
  %v460 = vpack.c.b16 %v455, %v455
  %v461 = vpack.c.b16 %v456, %v456
  %v462 = vpack.c.b16 %v457, %v457
  %v463 = vpack.c.b16 %v458, %v458
  %v469 = vsel %vm323, %v463, 0
  %471 = vmatprep.subr.bf16.mxu0 0
  %472 = vmatpush1.bf16.msra.mxu0 %v251
  %473 = vmatprep.subr.bf16.mxu0 0
  %474 = vmatpush1.bf16.msra.mxu0 %v252
  %475 = vmatprep.subr.bf16.mxu0 0
  %476 = vmatpush1.bf16.msra.mxu0 %v253
  %477 = vmatprep.subr.bf16.mxu0 0
  %478 = vmatpush1.bf16.msra.mxu0 %v254
  %479 = vmatprep.subr.bf16.mxu0 0
  %480 = vmatpush1.bf16.msra.mxu0 %v255
  %481 = vmatprep.subr.bf16.mxu0 0
  %482 = vmatpush1.bf16.msra.mxu0 %v256
  %483 = vmatprep.subr.bf16.mxu0 0
  %484 = vmatpush1.bf16.msra.mxu0 %v257
  %485 = vmatprep.subr.bf16.mxu0 0
  %486 = vmatpush1.bf16.msra.mxu0 %v258
  %487 = vmatprep.subr.bf16.mxu0 0
  %488 = vmatpush1.bf16.msra.mxu0 %v259
  %489 = vmatprep.subr.bf16.mxu0 0
  %490 = vmatpush1.bf16.msra.mxu0 %v260
  %491 = vmatprep.subr.bf16.mxu0 0
  %492 = vmatpush1.bf16.msra.mxu0 %v261
  %493 = vmatprep.subr.bf16.mxu0 0
  %494 = vmatpush1.bf16.msra.mxu0 %v262
  %495 = vmatprep.subr.bf16.mxu0 0
  %496 = vmatpush1.bf16.msra.mxu0 %v263
  %497 = vmatprep.subr.bf16.mxu0 0
  %498 = vmatpush1.bf16.msra.mxu0 %v264
  %499 = vmatprep.subr.bf16.mxu0 0
  %500 = vmatpush1.bf16.msra.mxu0 %v265
  %501 = vmatprep.subr.bf16.mxu0 0
  %502 = vmatpush1.bf16.msra.mxu0 %v266
  %503 = vmatprep.mubr.bf16.mxu0 %v460
  %504 = vmatmul.mubr.bf16.gmra.mrb[0].mxu0 %v459
  %v505 = vpop.f32.mrb[0].mxu0
  %v506 = vadd.f32 0.0, %v505
  %v507 = vpop.f32.mrb[0].mxu0
  %v508 = vpop.f32.mrb[0].mxu0
  %v509 = vpop.f32.mrb[0].mxu0
  %510 = vdwg.mxu0
  %511 = vmatprep.subr.bf16.mxu0 0
  %512 = vmatpush1.bf16.msra.mxu0 %v267
  %513 = vmatprep.subr.bf16.mxu0 0
  %514 = vmatpush1.bf16.msra.mxu0 %v268
  %515 = vmatprep.subr.bf16.mxu0 0
  %516 = vmatpush1.bf16.msra.mxu0 %v269
  %517 = vmatprep.subr.bf16.mxu0 0
  %518 = vmatpush1.bf16.msra.mxu0 %v270
  %519 = vmatprep.subr.bf16.mxu0 0
  %520 = vmatpush1.bf16.msra.mxu0 %v271
  %521 = vmatprep.subr.bf16.mxu0 0
  %522 = vmatpush1.bf16.msra.mxu0 %v272
  %523 = vmatprep.subr.bf16.mxu0 0
  %524 = vmatpush1.bf16.msra.mxu0 %v273
  %525 = vmatprep.subr.bf16.mxu0 0
  %526 = vmatpush1.bf16.msra.mxu0 %v274
  %527 = vmatprep.subr.bf16.mxu0 0
  %528 = vmatpush1.bf16.msra.mxu0 %v275
  %529 = vmatprep.subr.bf16.mxu0 0
  %530 = vmatpush1.bf16.msra.mxu0 %v276
  %531 = vmatprep.subr.bf16.mxu0 0
  %532 = vmatpush1.bf16.msra.mxu0 %v277
  %533 = vmatprep.subr.bf16.mxu0 0
  %534 = vmatpush1.bf16.msra.mxu0 %v278
  %535 = vmatprep.subr.bf16.mxu0 0
  %536 = vmatpush1.bf16.msra.mxu0 %v279
  %537 = vmatprep.subr.bf16.mxu0 0
  %538 = vmatpush1.bf16.msra.mxu0 %v280
  %539 = vmatprep.subr.bf16.mxu0 0
  %540 = vmatpush1.bf16.msra.mxu0 %v281
  %541 = vmatprep.subr.bf16.mxu0 0
  %542 = vmatpush1.bf16.msra.mxu0 %v282
  %543 = vmatprep.mubr.bf16.mxu0 %v462
  %544 = vmatmul.mubr.bf16.gmra.mrb[0].mxu0 %v461
  %v545 = vpop.f32.mrb[0].mxu0
  %v546 = vadd.f32 %v506, %v545
  %v547 = vpop.f32.mrb[0].mxu0
  %v548 = vpop.f32.mrb[0].mxu0
  %v549 = vpop.f32.mrb[0].mxu0
  %550 = vdwg.mxu0
  %551 = vmatprep.subr.bf16.mxu0 0
  %552 = vmatpush1.bf16.msra.mxu0 %v283
  %553 = vmatprep.subr.bf16.mxu0 0
  %554 = vmatpush1.bf16.msra.mxu0 %v284
  %555 = vmatprep.subr.bf16.mxu0 0
  %556 = vmatpush1.bf16.msra.mxu0 %v285
  %557 = vmatprep.subr.bf16.mxu0 0
  %558 = vmatpush1.bf16.msra.mxu0 %v286
  %559 = vmatprep.subr.bf16.mxu0 0
  %560 = vmatpush1.bf16.msra.mxu0 0
  %561 = vmatprep.subr.bf16.mxu0 0
  %562 = vmatpush1.bf16.msra.mxu0 0
  %563 = vmatprep.subr.bf16.mxu0 0
  %564 = vmatpush1.bf16.msra.mxu0 0
  %565 = vmatprep.subr.bf16.mxu0 0
  %566 = vmatpush1.bf16.msra.mxu0 0
  %567 = vmatprep.subr.bf16.mxu0 0
  %568 = vmatpush1.bf16.msra.mxu0 0
  %569 = vmatprep.subr.bf16.mxu0 0
  %570 = vmatpush1.bf16.msra.mxu0 0
  %571 = vmatprep.subr.bf16.mxu0 0
  %572 = vmatpush1.bf16.msra.mxu0 0
  %573 = vmatprep.subr.bf16.mxu0 0
  %574 = vmatpush1.bf16.msra.mxu0 0
  %575 = vmatprep.subr.bf16.mxu0 0
  %576 = vmatpush1.bf16.msra.mxu0 0
  %577 = vmatprep.subr.bf16.mxu0 0
  %578 = vmatpush1.bf16.msra.mxu0 0
  %579 = vmatprep.subr.bf16.mxu0 0
  %580 = vmatpush1.bf16.msra.mxu0 0
  %581 = vmatprep.subr.bf16.mxu0 0
  %582 = vmatpush1.bf16.msra.mxu0 0
  %583 = vmatprep.mubr.bf16.mxu0 0
  %584 = vmatmul.mubr.bf16.gmra.mrb[0].mxu0 %v469
  %v585 = vpop.f32.mrb[0].mxu0
  %v586 = vadd.f32 %v546, %v585
  %v587 = vpop.f32.mrb[0].mxu0
  %v588 = vpop.f32.mrb[0].mxu0
  %v589 = vpop.f32.mrb[0].mxu0
  %590 = vdwg.mxu0
  %v591 = vmax.f32 %v442, %v586
  %s592 = scalar_lea.vmem %s0, 40
  %v593 = vld [vmem:[%s592] sm:$0xff]
  %v594 = vld [vmem:[%s592 + $0x8] sm:$0xff]
  %v595 = vld [vmem:[%s592 + $0x10] sm:$0xf]
  %v599 = vunpack.c.l.b16 %v593
  %v600 = vunpack.c.h.b16 %v593
  %v601 = vunpack.c.l.b16 %v594
  %v602 = vunpack.c.h.b16 %v594
  %v603 = vunpack.c.l.b16 %v595
  %v604 = vpack.c.b16 %v599, %v599
  %v605 = vpack.c.b16 %v600, %v600
  %v606 = vpack.c.b16 %v601, %v601
  %v607 = vpack.c.b16 %v602, %v602
  %v608 = vpack.c.b16 %v603, %v603
  %v614 = vsel %vm323, %v608, 0
  %616 = vmatprep.subr.bf16.mxu0 0
  %617 = vmatpush1.bf16.msra.mxu0 %v251
  %618 = vmatprep.subr.bf16.mxu0 0
  %619 = vmatpush1.bf16.msra.mxu0 %v252
  %620 = vmatprep.subr.bf16.mxu0 0
  %621 = vmatpush1.bf16.msra.mxu0 %v253
  %622 = vmatprep.subr.bf16.mxu0 0
  %623 = vmatpush1.bf16.msra.mxu0 %v254
  %624 = vmatprep.subr.bf16.mxu0 0
  %625 = vmatpush1.bf16.msra.mxu0 %v255
  %626 = vmatprep.subr.bf16.mxu0 0
  %627 = vmatpush1.bf16.msra.mxu0 %v256
  %628 = vmatprep.subr.bf16.mxu0 0
  %629 = vmatpush1.bf16.msra.mxu0 %v257
  %630 = vmatprep.subr.bf16.mxu0 0
  %631 = vmatpush1.bf16.msra.mxu0 %v258
  %632 = vmatprep.subr.bf16.mxu0 0
  %633 = vmatpush1.bf16.msra.mxu0 %v259
  %634 = vmatprep.subr.bf16.mxu0 0
  %635 = vmatpush1.bf16.msra.mxu0 %v260
  %636 = vmatprep.subr.bf16.mxu0 0
  %637 = vmatpush1.bf16.msra.mxu0 %v261
  %638 = vmatprep.subr.bf16.mxu0 0
  %639 = vmatpush1.bf16.msra.mxu0 %v262
  %640 = vmatprep.subr.bf16.mxu0 0
  %641 = vmatpush1.bf16.msra.mxu0 %v263
  %642 = vmatprep.subr.bf16.mxu0 0
  %643 = vmatpush1.bf16.msra.mxu0 %v264
  %644 = vmatprep.subr.bf16.mxu0 0
  %645 = vmatpush1.bf16.msra.mxu0 %v265
  %646 = vmatprep.subr.bf16.mxu0 0
  %647 = vmatpush1.bf16.msra.mxu0 %v266
  %648 = vmatprep.mubr.bf16.mxu0 %v605
  %649 = vmatmul.mubr.bf16.gmra.mrb[0].mxu0 %v604
  %v650 = vpop.f32.mrb[0].mxu0
  %v651 = vadd.f32 0.0, %v650
  %v652 = vpop.f32.mrb[0].mxu0
  %v653 = vpop.f32.mrb[0].mxu0
  %v654 = vpop.f32.mrb[0].mxu0
  %655 = vdwg.mxu0
  %656 = vmatprep.subr.bf16.mxu0 0
  %657 = vmatpush1.bf16.msra.mxu0 %v267
  %658 = vmatprep.subr.bf16.mxu0 0
  %659 = vmatpush1.bf16.msra.mxu0 %v268
  %660 = vmatprep.subr.bf16.mxu0 0
  %661 = vmatpush1.bf16.msra.mxu0 %v269
  %662 = vmatprep.subr.bf16.mxu0 0
  %663 = vmatpush1.bf16.msra.mxu0 %v270
  %664 = vmatprep.subr.bf16.mxu0 0
  %665 = vmatpush1.bf16.msra.mxu0 %v271
  %666 = vmatprep.subr.bf16.mxu0 0
  %667 = vmatpush1.bf16.msra.mxu0 %v272
  %668 = vmatprep.subr.bf16.mxu0 0
  %669 = vmatpush1.bf16.msra.mxu0 %v273
  %670 = vmatprep.subr.bf16.mxu0 0
  %671 = vmatpush1.bf16.msra.mxu0 %v274
  %672 = vmatprep.subr.bf16.mxu0 0
  %673 = vmatpush1.bf16.msra.mxu0 %v275
  %674 = vmatprep.subr.bf16.mxu0 0
  %675 = vmatpush1.bf16.msra.mxu0 %v276
  %676 = vmatprep.subr.bf16.mxu0 0
  %677 = vmatpush1.bf16.msra.mxu0 %v277
  %678 = vmatprep.subr.bf16.mxu0 0
  %679 = vmatpush1.bf16.msra.mxu0 %v278
  %680 = vmatprep.subr.bf16.mxu0 0
  %681 = vmatpush1.bf16.msra.mxu0 %v279
  %682 = vmatprep.subr.bf16.mxu0 0
  %683 = vmatpush1.bf16.msra.mxu0 %v280
  %684 = vmatprep.subr.bf16.mxu0 0
  %685 = vmatpush1.bf16.msra.mxu0 %v281
  %686 = vmatprep.subr.bf16.mxu0 0
  %687 = vmatpush1.bf16.msra.mxu0 %v282
  %688 = vmatprep.mubr.bf16.mxu0 %v607
  %689 = vmatmul.mubr.bf16.gmra.mrb[0].mxu0 %v606
  %v690 = vpop.f32.mrb[0].mxu0
  %v691 = vadd.f32 %v651, %v690
  %v692 = vpop.f32.mrb[0].mxu0
  %v693 = vpop.f32.mrb[0].mxu0
  %v694 = vpop.f32.mrb[0].mxu0
  %695 = vdwg.mxu0
  %696 = vmatprep.subr.bf16.mxu0 0
  %697 = vmatpush1.bf16.msra.mxu0 %v283
  %698 = vmatprep.subr.bf16.mxu0 0
  %699 = vmatpush1.bf16.msra.mxu0 %v284
  %700 = vmatprep.subr.bf16.mxu0 0
  %701 = vmatpush1.bf16.msra.mxu0 %v285
  %702 = vmatprep.subr.bf16.mxu0 0
  %703 = vmatpush1.bf16.msra.mxu0 %v286
  %704 = vmatprep.subr.bf16.mxu0 0
  %705 = vmatpush1.bf16.msra.mxu0 0
  %706 = vmatprep.subr.bf16.mxu0 0
  %707 = vmatpush1.bf16.msra.mxu0 0
  %708 = vmatprep.subr.bf16.mxu0 0
  %709 = vmatpush1.bf16.msra.mxu0 0
  %710 = vmatprep.subr.bf16.mxu0 0
  %711 = vmatpush1.bf16.msra.mxu0 0
  %712 = vmatprep.subr.bf16.mxu0 0
  %713 = vmatpush1.bf16.msra.mxu0 0
  %714 = vmatprep.subr.bf16.mxu0 0
  %715 = vmatpush1.bf16.msra.mxu0 0
  %716 = vmatprep.subr.bf16.mxu0 0
  %717 = vmatpush1.bf16.msra.mxu0 0
  %718 = vmatprep.subr.bf16.mxu0 0
  %719 = vmatpush1.bf16.msra.mxu0 0
  %720 = vmatprep.subr.bf16.mxu0 0
  %721 = vmatpush1.bf16.msra.mxu0 0
  %722 = vmatprep.subr.bf16.mxu0 0
  %723 = vmatpush1.bf16.msra.mxu0 0
  %724 = vmatprep.subr.bf16.mxu0 0
  %725 = vmatpush1.bf16.msra.mxu0 0
  %726 = vmatprep.subr.bf16.mxu0 0
  %727 = vmatpush1.bf16.msra.mxu0 0
  %728 = vmatprep.mubr.bf16.mxu0 0
  %729 = vmatmul.mubr.bf16.gmra.mrb[0].mxu0 %v614
  %v730 = vpop.f32.mrb[0].mxu0
  %v731 = vadd.f32 %v691, %v730
  %v732 = vpop.f32.mrb[0].mxu0
  %v733 = vpop.f32.mrb[0].mxu0
  %v734 = vpop.f32.mrb[0].mxu0
  %735 = vdwg.mxu0
  %v736 = vmax.f32 %v591, %v731
  %s737 = scalar_lea.vmem %s0, 60
  %v738 = vld [vmem:[%s737] sm:$0xff]
  %v739 = vld [vmem:[%s737 + $0x8] sm:$0xff]
  %v740 = vld [vmem:[%s737 + $0x10] sm:$0xf]
  %v744 = vunpack.c.l.b16 %v738
  %v745 = vunpack.c.h.b16 %v738
  %v746 = vunpack.c.l.b16 %v739
  %v747 = vunpack.c.h.b16 %v739
  %v748 = vunpack.c.l.b16 %v740
  %v749 = vpack.c.b16 %v744, %v744
  %v750 = vpack.c.b16 %v745, %v745
  %v751 = vpack.c.b16 %v746, %v746
  %v752 = vpack.c.b16 %v747, %v747
  %v753 = vpack.c.b16 %v748, %v748
  %v759 = vsel %vm323, %v753, 0
  %761 = vmatprep.subr.bf16.mxu0 0
  %762 = vmatpush1.bf16.msra.mxu0 %v251
  %763 = vmatprep.subr.bf16.mxu0 0
  %764 = vmatpush1.bf16.msra.mxu0 %v252
  %765 = vmatprep.subr.bf16.mxu0 0
  %766 = vmatpush1.bf16.msra.mxu0 %v253
  %767 = vmatprep.subr.bf16.mxu0 0
  %768 = vmatpush1.bf16.msra.mxu0 %v254
  %769 = vmatprep.subr.bf16.mxu0 0
  %770 = vmatpush1.bf16.msra.mxu0 %v255
  %771 = vmatprep.subr.bf16.mxu0 0
  %772 = vmatpush1.bf16.msra.mxu0 %v256
  %773 = vmatprep.subr.bf16.mxu0 0
  %774 = vmatpush1.bf16.msra.mxu0 %v257
  %775 = vmatprep.subr.bf16.mxu0 0
  %776 = vmatpush1.bf16.msra.mxu0 %v258
  %777 = vmatprep.subr.bf16.mxu0 0
  %778 = vmatpush1.bf16.msra.mxu0 %v259
  %779 = vmatprep.subr.bf16.mxu0 0
  %780 = vmatpush1.bf16.msra.mxu0 %v260
  %781 = vmatprep.subr.bf16.mxu0 0
  %782 = vmatpush1.bf16.msra.mxu0 %v261
  %783 = vmatprep.subr.bf16.mxu0 0
  %784 = vmatpush1.bf16.msra.mxu0 %v262
  %785 = vmatprep.subr.bf16.mxu0 0
  %786 = vmatpush1.bf16.msra.mxu0 %v263
  %787 = vmatprep.subr.bf16.mxu0 0
  %788 = vmatpush1.bf16.msra.mxu0 %v264
  %789 = vmatprep.subr.bf16.mxu0 0
  %790 = vmatpush1.bf16.msra.mxu0 %v265
  %791 = vmatprep.subr.bf16.mxu0 0
  %792 = vmatpush1.bf16.msra.mxu0 %v266
  %793 = vmatprep.mubr.bf16.mxu0 %v750
  %794 = vmatmul.mubr.bf16.gmra.mrb[0].mxu0 %v749
  %v795 = vpop.f32.mrb[0].mxu0
  %v796 = vadd.f32 0.0, %v795
  %v797 = vpop.f32.mrb[0].mxu0
  %v798 = vpop.f32.mrb[0].mxu0
  %v799 = vpop.f32.mrb[0].mxu0
  %800 = vdwg.mxu0
  %801 = vmatprep.subr.bf16.mxu0 0
  %802 = vmatpush1.bf16.msra.mxu0 %v267
  %803 = vmatprep.subr.bf16.mxu0 0
  %804 = vmatpush1.bf16.msra.mxu0 %v268
  %805 = vmatprep.subr.bf16.mxu0 0
  %806 = vmatpush1.bf16.msra.mxu0 %v269
  %807 = vmatprep.subr.bf16.mxu0 0
  %808 = vmatpush1.bf16.msra.mxu0 %v270
  %809 = vmatprep.subr.bf16.mxu0 0
  %810 = vmatpush1.bf16.msra.mxu0 %v271
  %811 = vmatprep.subr.bf16.mxu0 0
  %812 = vmatpush1.bf16.msra.mxu0 %v272
  %813 = vmatprep.subr.bf16.mxu0 0
  %814 = vmatpush1.bf16.msra.mxu0 %v273
  %815 = vmatprep.subr.bf16.mxu0 0
  %816 = vmatpush1.bf16.msra.mxu0 %v274
  %817 = vmatprep.subr.bf16.mxu0 0
  %818 = vmatpush1.bf16.msra.mxu0 %v275
  %819 = vmatprep.subr.bf16.mxu0 0
  %820 = vmatpush1.bf16.msra.mxu0 %v276
  %821 = vmatprep.subr.bf16.mxu0 0
  %822 = vmatpush1.bf16.msra.mxu0 %v277
  %823 = vmatprep.subr.bf16.mxu0 0
  %824 = vmatpush1.bf16.msra.mxu0 %v278
  %825 = vmatprep.subr.bf16.mxu0 0
  %826 = vmatpush1.bf16.msra.mxu0 %v279
  %827 = vmatprep.subr.bf16.mxu0 0
  %828 = vmatpush1.bf16.msra.mxu0 %v280
  %829 = vmatprep.subr.bf16.mxu0 0
  %830 = vmatpush1.bf16.msra.mxu0 %v281
  %831 = vmatprep.subr.bf16.mxu0 0
  %832 = vmatpush1.bf16.msra.mxu0 %v282
  %833 = vmatprep.mubr.bf16.mxu0 %v752
  %834 = vmatmul.mubr.bf16.gmra.mrb[0].mxu0 %v751
  %v835 = vpop.f32.mrb[0].mxu0
  %v836 = vadd.f32 %v796, %v835
  %v837 = vpop.f32.mrb[0].mxu0
  %v838 = vpop.f32.mrb[0].mxu0
  %v839 = vpop.f32.mrb[0].mxu0
  %840 = vdwg.mxu0
  %841 = vmatprep.subr.bf16.mxu0 0
  %842 = vmatpush1.bf16.msra.mxu0 %v283
  %843 = vmatprep.subr.bf16.mxu0 0
  %844 = vmatpush1.bf16.msra.mxu0 %v284
  %845 = vmatprep.subr.bf16.mxu0 0
  %846 = vmatpush1.bf16.msra.mxu0 %v285
  %847 = vmatprep.subr.bf16.mxu0 0
  %848 = vmatpush1.bf16.msra.mxu0 %v286
  %849 = vmatprep.subr.bf16.mxu0 0
  %850 = vmatpush1.bf16.msra.mxu0 0
  %851 = vmatprep.subr.bf16.mxu0 0
  %852 = vmatpush1.bf16.msra.mxu0 0
  %853 = vmatprep.subr.bf16.mxu0 0
  %854 = vmatpush1.bf16.msra.mxu0 0
  %855 = vmatprep.subr.bf16.mxu0 0
  %856 = vmatpush1.bf16.msra.mxu0 0
  %857 = vmatprep.subr.bf16.mxu0 0
  %858 = vmatpush1.bf16.msra.mxu0 0
  %859 = vmatprep.subr.bf16.mxu0 0
  %860 = vmatpush1.bf16.msra.mxu0 0
  %861 = vmatprep.subr.bf16.mxu0 0
  %862 = vmatpush1.bf16.msra.mxu0 0
  %863 = vmatprep.subr.bf16.mxu0 0
  %864 = vmatpush1.bf16.msra.mxu0 0
  %865 = vmatprep.subr.bf16.mxu0 0
  %866 = vmatpush1.bf16.msra.mxu0 0
  %867 = vmatprep.subr.bf16.mxu0 0
  %868 = vmatpush1.bf16.msra.mxu0 0
  %869 = vmatprep.subr.bf16.mxu0 0
  %870 = vmatpush1.bf16.msra.mxu0 0
  %871 = vmatprep.subr.bf16.mxu0 0
  %872 = vmatpush1.bf16.msra.mxu0 0
  %873 = vmatprep.mubr.bf16.mxu0 0
  %874 = vmatmul.mubr.bf16.gmra.mrb[0].mxu0 %v759
  %v875 = vpop.f32.mrb[0].mxu0
  %v876 = vadd.f32 %v836, %v875
  %v877 = vpop.f32.mrb[0].mxu0
  %v878 = vpop.f32.mrb[0].mxu0
  %v879 = vpop.f32.mrb[0].mxu0
  %880 = vdwg.mxu0
  %v881 = vmax.f32 %v736, %v876
  %v882 = vld [vmem:[%s2] sm:$0x1]
  %v884 = vlaneseq
  %v885 = vshrl.u32 %v884, 7
  %v886 = vsub.s32 0, %v885
  %v887 = vrot.slane %v882, %v886
  %v889 = vadd.f32 %v881, %v887
  %v890 = vmax.f32 %v889, 0.0
  %v891 = vpack.c.bf16 %v890, %v890
  %892 = vst [vmem:[%s3] sm:$0xf] %v891
  // Predicated region
  $region14: #{complex_cnn_forward.7} parent=0 // pred_check
    _
  $region15: #{complex_cnn_forward.7} parent=0 // pred_check_branch
    %894 = sbr.rel (0) target = $region17
  $region16: #{complex_cnn_forward.7} parent=0 // pred_region
    _
  $region17: #{complex_cnn_forward.7} parent=0 // pred_fallthru
    _
  // Predicated region
  $region18: #{complex_cnn_forward.7} parent=0 // pred_check
    _
  $region19: #{complex_cnn_forward.7} parent=0 // pred_check_branch
    %896 = sbr.rel (0) target = $region21
  $region20: #{complex_cnn_forward.7} parent=0 // pred_region
    _
  $region21: #{complex_cnn_forward.7} parent=0 // pred_fallthru
    _

// kernel: complex_cnn_forward.9
$region0: #{complex_cnn_forward.9}
  #allocation0 [shape = 'u32[]', space=smem, size = 0x4, offset = 0x4, fixed_abs, tag = 'smem constant byte address 0x4 - core index']
  #allocation1 [shape = 'u32[144,128]{1,0:T(1,128)}', space=vmem, size = 0x12000, scoped, tag = 'internal scratch']
  %s0 = inlined_call_operand.vmem [shape: bf16[2,256], index: 0, kind: input, shape index: {}]
  %s1 = inlined_call_operand.vmem [shape: bf16[256,512], index: 1, kind: input, shape index: {}]
  %s2 = inlined_call_operand.vmem [shape: f32[1,512], index: 2, kind: input, shape index: {}]
  %s3 = inlined_call_operand.vmem [shape: bf16[512,128], index: 3, kind: input, shape index: {}]
  %s4 = inlined_call_operand.vmem [shape: f32[1,128], index: 4, kind: input, shape index: {}]
  %s5 = inlined_call_operand.vmem [shape: bf16[128,10], index: 5, kind: input, shape index: {}]
  %s6 = inlined_call_operand.vmem [shape: f32[1,10], index: 6, kind: input, shape index: {}]
  %s7 = inlined_call_operand.hbm [shape: f32[2,10], index: 7, kind: output, shape index: {}]
  %s8 = sld [smem:[#allocation0]]
  $region38: #{complex_cnn_forward.9} parent=0
    _
  %s10 = ssub.s32 1, %s8
  %s11 = scalar_select 0, %s10, %s8
  $region1: #{complex_cnn_forward.9} parent=0
    #allocation2 [shape = 'u8[1024]{0}', space=vmem, size = 0x400, scoped, tag = 'output window, operand 0, single buffered']
    #allocation3 [shape = 's32[1]{0}', space=sflag, size = 0x4, scoped, tag = 'scoped memory for complex_cnn_forward.9']
    %12 = vsyncpa [#allocation3], 0
    // Predicated region
    $region2: #{complex_cnn_forward.9} parent=1 // pred_check
      _
    $region3: #{complex_cnn_forward.9} parent=1 // pred_check_branch
      %14 = sbr.rel (0) target = $region5
    $region4: #{complex_cnn_forward.9} parent=1 // pred_region
      _
    $region5: #{complex_cnn_forward.9} parent=1 // pred_fallthru
      _
    // Predicated region
    $region6: #{complex_cnn_forward.9} parent=1 // pred_check
      _
    $region7: #{complex_cnn_forward.9} parent=1 // pred_check_branch
      %16 = sbr.rel (0) target = $region9
    $region8: #{complex_cnn_forward.9} parent=1 // pred_region
      _
    $region9: #{complex_cnn_forward.9} parent=1 // pred_fallthru
      _
    // Predicated region
    $region10: #{complex_cnn_forward.9} parent=1 // pred_check
      _
    $region11: #{complex_cnn_forward.9} parent=1 // pred_check_branch
      %18 = sbr.rel (0) target = $region13
    $region12: #{complex_cnn_forward.9} parent=1 // pred_region
      _
    $region13: #{complex_cnn_forward.9} parent=1 // pred_fallthru
      _
    // Predicated region
    $region14: #{complex_cnn_forward.9} parent=1 // pred_check
      _
    $region15: #{complex_cnn_forward.9} parent=1 // pred_check_branch
      %20 = sbr.rel (0) target = $region17
    $region16: #{complex_cnn_forward.9} parent=1 // pred_region
      _
    $region17: #{complex_cnn_forward.9} parent=1 // pred_fallthru
      _
    // Predicated region
    $region18: #{complex_cnn_forward.9} parent=1 // pred_check
      _
    $region19: #{complex_cnn_forward.9} parent=1 // pred_check_branch
      %22 = sbr.rel (0) target = $region21
    $region20: #{complex_cnn_forward.9} parent=1 // pred_region
      _
    $region21: #{complex_cnn_forward.9} parent=1 // pred_fallthru
      _
    // Predicated region
    $region22: #{complex_cnn_forward.9} parent=1 // pred_check
      _
    $region23: #{complex_cnn_forward.9} parent=1 // pred_check_branch
      %24 = sbr.rel (0) target = $region25
    $region24: #{complex_cnn_forward.9} parent=1 // pred_region
      _
    $region25: #{complex_cnn_forward.9} parent=1 // pred_fallthru
      _
    // Predicated region
    $region26: #{complex_cnn_forward.9} parent=1 // pred_check
      _
    $region27: #{complex_cnn_forward.9} parent=1 // pred_check_branch
      %26 = sbr.rel (0) target = $region29
    $region28: #{complex_cnn_forward.9} parent=1 // pred_region
      _
    $region29: #{complex_cnn_forward.9} parent=1 // pred_fallthru
      _
    %v28 = vld [vmem:[%s0] sm:$0x3]
    %v29 = vld [vmem:[%s1] sm:$0xff]
    %v30 = vld [vmem:[%s1 + $0x8] sm:$0xff]
    %v31 = vld [vmem:[%s1 + $0x10] sm:$0xff]
    %v32 = vld [vmem:[%s1 + $0x18] sm:$0xff]
    %v33 = vld [vmem:[%s1 + $0x20] sm:$0xff]
    %v34 = vld [vmem:[%s1 + $0x28] sm:$0xff]
    %v35 = vld [vmem:[%s1 + $0x30] sm:$0xff]
    %v36 = vld [vmem:[%s1 + $0x38] sm:$0xff]
    %v37 = vld [vmem:[%s1 + $0x40] sm:$0xff]
    %v38 = vld [vmem:[%s1 + $0x48] sm:$0xff]
    %v39 = vld [vmem:[%s1 + $0x50] sm:$0xff]
    %v40 = vld [vmem:[%s1 + $0x58] sm:$0xff]
    %v41 = vld [vmem:[%s1 + $0x60] sm:$0xff]
    %v42 = vld [vmem:[%s1 + $0x68] sm:$0xff]
    %v43 = vld [vmem:[%s1 + $0x70] sm:$0xff]
    %v44 = vld [vmem:[%s1 + $0x78] sm:$0xff]
    %v45 = vld [vmem:[%s1 + $0x80] sm:$0xff]
    %v46 = vld [vmem:[%s1 + $0x88] sm:$0xff]
    %v47 = vld [vmem:[%s1 + $0x90] sm:$0xff]
    %v48 = vld [vmem:[%s1 + $0x98] sm:$0xff]
    %v49 = vld [vmem:[%s1 + $0xa0] sm:$0xff]
    %v50 = vld [vmem:[%s1 + $0xa8] sm:$0xff]
    %v51 = vld [vmem:[%s1 + $0xb0] sm:$0xff]
    %v52 = vld [vmem:[%s1 + $0xb8] sm:$0xff]
    %v53 = vld [vmem:[%s1 + $0xc0] sm:$0xff]
    %v54 = vld [vmem:[%s1 + $0xc8] sm:$0xff]
    %v55 = vld [vmem:[%s1 + $0xd0] sm:$0xff]
    %v56 = vld [vmem:[%s1 + $0xd8] sm:$0xff]
    %v57 = vld [vmem:[%s1 + $0xe0] sm:$0xff]
    %v58 = vld [vmem:[%s1 + $0xe8] sm:$0xff]
    %v59 = vld [vmem:[%s1 + $0xf0] sm:$0xff]
    %v60 = vld [vmem:[%s1 + $0xf8] sm:$0xff]
    %v61 = vld [vmem:[%s1 + $0x100] sm:$0xff]
    %v62 = vld [vmem:[%s1 + $0x108] sm:$0xff]
    %v63 = vld [vmem:[%s1 + $0x110] sm:$0xff]
    %v64 = vld [vmem:[%s1 + $0x118] sm:$0xff]
    %v65 = vld [vmem:[%s1 + $0x120] sm:$0xff]
    %v66 = vld [vmem:[%s1 + $0x128] sm:$0xff]
    %v67 = vld [vmem:[%s1 + $0x130] sm:$0xff]
    %v68 = vld [vmem:[%s1 + $0x138] sm:$0xff]
    %v69 = vld [vmem:[%s1 + $0x140] sm:$0xff]
    %v70 = vld [vmem:[%s1 + $0x148] sm:$0xff]
    %v71 = vld [vmem:[%s1 + $0x150] sm:$0xff]
    %v72 = vld [vmem:[%s1 + $0x158] sm:$0xff]
    %v73 = vld [vmem:[%s1 + $0x160] sm:$0xff]
    %v74 = vld [vmem:[%s1 + $0x168] sm:$0xff]
    %v75 = vld [vmem:[%s1 + $0x170] sm:$0xff]
    %v76 = vld [vmem:[%s1 + $0x178] sm:$0xff]
    %v77 = vld [vmem:[%s1 + $0x180] sm:$0xff]
    %v78 = vld [vmem:[%s1 + $0x188] sm:$0xff]
    %v79 = vld [vmem:[%s1 + $0x190] sm:$0xff]
    %v80 = vld [vmem:[%s1 + $0x198] sm:$0xff]
    %v81 = vld [vmem:[%s1 + $0x1a0] sm:$0xff]
    %v82 = vld [vmem:[%s1 + $0x1a8] sm:$0xff]
    %v83 = vld [vmem:[%s1 + $0x1b0] sm:$0xff]
    %v84 = vld [vmem:[%s1 + $0x1b8] sm:$0xff]
    %v85 = vld [vmem:[%s1 + $0x1c0] sm:$0xff]
    %v86 = vld [vmem:[%s1 + $0x1c8] sm:$0xff]
    %v87 = vld [vmem:[%s1 + $0x1d0] sm:$0xff]
    %v88 = vld [vmem:[%s1 + $0x1d8] sm:$0xff]
    %v89 = vld [vmem:[%s1 + $0x1e0] sm:$0xff]
    %v90 = vld [vmem:[%s1 + $0x1e8] sm:$0xff]
    %v91 = vld [vmem:[%s1 + $0x1f0] sm:$0xff]
    %v92 = vld [vmem:[%s1 + $0x1f8] sm:$0xff]
    %v93 = vld [vmem:[%s2] sm:$0xf]
    %v95 = vlaneseq
    %v96 = vshrl.u32 %v95, 7
    %v97 = vsub.s32 0, %v96
    %v98 = vrot.slane %v93, %v97
    %v99 = vlaneseq
    %v100 = vshrl.u32 %v99, 7
    %v101 = vsub.s32 1, %v100
    %v102 = vrot.slane %v93, %v101
    %v103 = vlaneseq
    %v104 = vshrl.u32 %v103, 7
    %v105 = vsub.s32 2, %v104
    %v106 = vrot.slane %v93, %v105
    %v107 = vlaneseq
    %v108 = vshrl.u32 %v107, 7
    %v109 = vsub.s32 3, %v108
    %v110 = vrot.slane %v93, %v109
    %v117 = vunpack.c.l.s4 1966171168
    %v118 = vunpack.c.0.s8 %v117
    %v119 = vlaneseq
    %v120 = vshrl.u32 %v119, 7
    %v121 = vsub.s32 %v118, %v120
    %v122 = vrot.slane %v28, %v121
    %v123 = vcombine.high %v122, %v122
    %v125 = vunpack.c.l.s4 1966171168
    %v126 = vunpack.c.0.s8 %v125
    %v127 = vlaneseq
    %v128 = vshrl.u32 %v127, 7
    %v129 = vsub.s32 %v126, %v128
    %v130 = vrot.slane %v122, %v129
    %v132 = vunpack.c.l.s4 1966171168
    %v133 = vunpack.c.0.s8 %v132
    %v134 = vlaneseq
    %v135 = vshrl.u32 %v134, 7
    %v136 = vsub.s32 %v133, %v135
    %v137 = vrot.slane %v123, %v136
    %v204 = vunpack.c.l.b16 %v29
    %v205 = vunpack.c.h.b16 %v29
    %v206 = vunpack.c.l.b16 %v30
    %v207 = vunpack.c.h.b16 %v30
    %v208 = vunpack.c.l.b16 %v31
    %v209 = vunpack.c.h.b16 %v31
    %v210 = vunpack.c.l.b16 %v32
    %v211 = vunpack.c.h.b16 %v32
    %v212 = vunpack.c.l.b16 %v33
    %v213 = vunpack.c.h.b16 %v33
    %v214 = vunpack.c.l.b16 %v34
    %v215 = vunpack.c.h.b16 %v34
    %v216 = vunpack.c.l.b16 %v35
    %v217 = vunpack.c.h.b16 %v35
    %v218 = vunpack.c.l.b16 %v36
    %v219 = vunpack.c.h.b16 %v36
    %v220 = vunpack.c.l.b16 %v37
    %v221 = vunpack.c.h.b16 %v37
    %v222 = vunpack.c.l.b16 %v38
    %v223 = vunpack.c.h.b16 %v38
    %v224 = vunpack.c.l.b16 %v39
    %v225 = vunpack.c.h.b16 %v39
    %v226 = vunpack.c.l.b16 %v40
    %v227 = vunpack.c.h.b16 %v40
    %v228 = vunpack.c.l.b16 %v41
    %v229 = vunpack.c.h.b16 %v41
    %v230 = vunpack.c.l.b16 %v42
    %v231 = vunpack.c.h.b16 %v42
    %v232 = vunpack.c.l.b16 %v43
    %v233 = vunpack.c.h.b16 %v43
    %v234 = vunpack.c.l.b16 %v44
    %v235 = vunpack.c.h.b16 %v44
    %v236 = vunpack.c.l.b16 %v45
    %v237 = vunpack.c.h.b16 %v45
    %v238 = vunpack.c.l.b16 %v46
    %v239 = vunpack.c.h.b16 %v46
    %v240 = vunpack.c.l.b16 %v47
    %v241 = vunpack.c.h.b16 %v47
    %v242 = vunpack.c.l.b16 %v48
    %v243 = vunpack.c.h.b16 %v48
    %v244 = vunpack.c.l.b16 %v49
    %v245 = vunpack.c.h.b16 %v49
    %v246 = vunpack.c.l.b16 %v50
    %v247 = vunpack.c.h.b16 %v50
    %v248 = vunpack.c.l.b16 %v51
    %v249 = vunpack.c.h.b16 %v51
    %v250 = vunpack.c.l.b16 %v52
    %v251 = vunpack.c.h.b16 %v52
    %v252 = vunpack.c.l.b16 %v53
    %v253 = vunpack.c.h.b16 %v53
    %v254 = vunpack.c.l.b16 %v54
    %v255 = vunpack.c.h.b16 %v54
    %v256 = vunpack.c.l.b16 %v55
    %v257 = vunpack.c.h.b16 %v55
    %v258 = vunpack.c.l.b16 %v56
    %v259 = vunpack.c.h.b16 %v56
    %v260 = vunpack.c.l.b16 %v57
    %v261 = vunpack.c.h.b16 %v57
    %v262 = vunpack.c.l.b16 %v58
    %v263 = vunpack.c.h.b16 %v58
    %v264 = vunpack.c.l.b16 %v59
    %v265 = vunpack.c.h.b16 %v59
    %v266 = vunpack.c.l.b16 %v60
    %v267 = vunpack.c.h.b16 %v60
    %v268 = vunpack.c.l.b16 %v61
    %v269 = vunpack.c.h.b16 %v61
    %v270 = vunpack.c.l.b16 %v62
    %v271 = vunpack.c.h.b16 %v62
    %v272 = vunpack.c.l.b16 %v63
    %v273 = vunpack.c.h.b16 %v63
    %v274 = vunpack.c.l.b16 %v64
    %v275 = vunpack.c.h.b16 %v64
    %v276 = vunpack.c.l.b16 %v65
    %v277 = vunpack.c.h.b16 %v65
    %v278 = vunpack.c.l.b16 %v66
    %v279 = vunpack.c.h.b16 %v66
    %v280 = vunpack.c.l.b16 %v67
    %v281 = vunpack.c.h.b16 %v67
    %v282 = vunpack.c.l.b16 %v68
    %v283 = vunpack.c.h.b16 %v68
    %v284 = vunpack.c.l.b16 %v69
    %v285 = vunpack.c.h.b16 %v69
    %v286 = vunpack.c.l.b16 %v70
    %v287 = vunpack.c.h.b16 %v70
    %v288 = vunpack.c.l.b16 %v71
    %v289 = vunpack.c.h.b16 %v71
    %v290 = vunpack.c.l.b16 %v72
    %v291 = vunpack.c.h.b16 %v72
    %v292 = vunpack.c.l.b16 %v73
    %v293 = vunpack.c.h.b16 %v73
    %v294 = vunpack.c.l.b16 %v74
    %v295 = vunpack.c.h.b16 %v74
    %v296 = vunpack.c.l.b16 %v75
    %v297 = vunpack.c.h.b16 %v75
    %v298 = vunpack.c.l.b16 %v76
    %v299 = vunpack.c.h.b16 %v76
    %v300 = vunpack.c.l.b16 %v77
    %v301 = vunpack.c.h.b16 %v77
    %v302 = vunpack.c.l.b16 %v78
    %v303 = vunpack.c.h.b16 %v78
    %v304 = vunpack.c.l.b16 %v79
    %v305 = vunpack.c.h.b16 %v79
    %v306 = vunpack.c.l.b16 %v80
    %v307 = vunpack.c.h.b16 %v80
    %v308 = vunpack.c.l.b16 %v81
    %v309 = vunpack.c.h.b16 %v81
    %v310 = vunpack.c.l.b16 %v82
    %v311 = vunpack.c.h.b16 %v82
    %v312 = vunpack.c.l.b16 %v83
    %v313 = vunpack.c.h.b16 %v83
    %v314 = vunpack.c.l.b16 %v84
    %v315 = vunpack.c.h.b16 %v84
    %v316 = vunpack.c.l.b16 %v85
    %v317 = vunpack.c.h.b16 %v85
    %v318 = vunpack.c.l.b16 %v86
    %v319 = vunpack.c.h.b16 %v86
    %v320 = vunpack.c.l.b16 %v87
    %v321 = vunpack.c.h.b16 %v87
    %v322 = vunpack.c.l.b16 %v88
    %v323 = vunpack.c.h.b16 %v88
    %v324 = vunpack.c.l.b16 %v89
    %v325 = vunpack.c.h.b16 %v89
    %v326 = vunpack.c.l.b16 %v90
    %v327 = vunpack.c.h.b16 %v90
    %v328 = vunpack.c.l.b16 %v91
    %v329 = vunpack.c.h.b16 %v91
    %v330 = vunpack.c.l.b16 %v92
    %v331 = vunpack.c.h.b16 %v92
    %v332 = vpack.c.b16 %v208, %v204
    %v333 = vpack.c.b16 %v209, %v205
    %v334 = vpack.c.b16 %v210, %v206
    %v335 = vpack.c.b16 %v211, %v207
    %v336 = vpack.c.b16 %v216, %v212
    %v337 = vpack.c.b16 %v217, %v213
    %v338 = vpack.c.b16 %v218, %v214
    %v339 = vpack.c.b16 %v219, %v215
    %v340 = vpack.c.b16 %v224, %v220
    %v341 = vpack.c.b16 %v225, %v221
    %v342 = vpack.c.b16 %v226, %v222
    %v343 = vpack.c.b16 %v227, %v223
    %v344 = vpack.c.b16 %v232, %v228
    %v345 = vpack.c.b16 %v233, %v229
    %v346 = vpack.c.b16 %v234, %v230
    %v347 = vpack.c.b16 %v235, %v231
    %v348 = vpack.c.b16 %v240, %v236
    %v349 = vpack.c.b16 %v241, %v237
    %v350 = vpack.c.b16 %v242, %v238
    %v351 = vpack.c.b16 %v243, %v239
    %v352 = vpack.c.b16 %v248, %v244
    %v353 = vpack.c.b16 %v249, %v245
    %v354 = vpack.c.b16 %v250, %v246
    %v355 = vpack.c.b16 %v251, %v247
    %v356 = vpack.c.b16 %v256, %v252
    %v357 = vpack.c.b16 %v257, %v253
    %v358 = vpack.c.b16 %v258, %v254
    %v359 = vpack.c.b16 %v259, %v255
    %v360 = vpack.c.b16 %v264, %v260
    %v361 = vpack.c.b16 %v265, %v261
    %v362 = vpack.c.b16 %v266, %v262
    %v363 = vpack.c.b16 %v267, %v263
    %v364 = vpack.c.b16 %v272, %v268
    %v365 = vpack.c.b16 %v273, %v269
    %v366 = vpack.c.b16 %v274, %v270
    %v367 = vpack.c.b16 %v275, %v271
    %v368 = vpack.c.b16 %v280, %v276
    %v369 = vpack.c.b16 %v281, %v277
    %v370 = vpack.c.b16 %v282, %v278
    %v371 = vpack.c.b16 %v283, %v279
    %v372 = vpack.c.b16 %v288, %v284
    %v373 = vpack.c.b16 %v289, %v285
    %v374 = vpack.c.b16 %v290, %v286
    %v375 = vpack.c.b16 %v291, %v287
    %v376 = vpack.c.b16 %v296, %v292
    %v377 = vpack.c.b16 %v297, %v293
    %v378 = vpack.c.b16 %v298, %v294
    %v379 = vpack.c.b16 %v299, %v295
    %v380 = vpack.c.b16 %v304, %v300
    %v381 = vpack.c.b16 %v305, %v301
    %v382 = vpack.c.b16 %v306, %v302
    %v383 = vpack.c.b16 %v307, %v303
    %v384 = vpack.c.b16 %v312, %v308
    %v385 = vpack.c.b16 %v313, %v309
    %v386 = vpack.c.b16 %v314, %v310
    %v387 = vpack.c.b16 %v315, %v311
    %v388 = vpack.c.b16 %v320, %v316
    %v389 = vpack.c.b16 %v321, %v317
    %v390 = vpack.c.b16 %v322, %v318
    %v391 = vpack.c.b16 %v323, %v319
    %v392 = vpack.c.b16 %v328, %v324
    %v393 = vpack.c.b16 %v329, %v325
    %v394 = vpack.c.b16 %v330, %v326
    %v395 = vpack.c.b16 %v331, %v327
    %460 = vmatprep.subr.bf16.mxu0 %v333
    %461 = vmatpush1.bf16.msra.mxu0 %v332
    %462 = vmatprep.subr.bf16.mxu0 %v337
    %463 = vmatpush1.bf16.msra.mxu0 %v336
    %464 = vmatprep.subr.bf16.mxu0 %v341
    %465 = vmatpush1.bf16.msra.mxu0 %v340
    %466 = vmatprep.subr.bf16.mxu0 %v345
    %467 = vmatpush1.bf16.msra.mxu0 %v344
    %468 = vmatprep.subr.bf16.mxu0 %v349
    %469 = vmatpush1.bf16.msra.mxu0 %v348
    %470 = vmatprep.subr.bf16.mxu0 %v353
    %471 = vmatpush1.bf16.msra.mxu0 %v352
    %472 = vmatprep.subr.bf16.mxu0 %v357
    %473 = vmatpush1.bf16.msra.mxu0 %v356
    %474 = vmatprep.subr.bf16.mxu0 %v361
    %475 = vmatpush1.bf16.msra.mxu0 %v360
    %476 = vmatprep.subr.bf16.mxu0 %v365
    %477 = vmatpush1.bf16.msra.mxu0 %v364
    %478 = vmatprep.subr.bf16.mxu0 %v369
    %479 = vmatpush1.bf16.msra.mxu0 %v368
    %480 = vmatprep.subr.bf16.mxu0 %v373
    %481 = vmatpush1.bf16.msra.mxu0 %v372
    %482 = vmatprep.subr.bf16.mxu0 %v377
    %483 = vmatpush1.bf16.msra.mxu0 %v376
    %484 = vmatprep.subr.bf16.mxu0 %v381
    %485 = vmatpush1.bf16.msra.mxu0 %v380
    %486 = vmatprep.subr.bf16.mxu0 %v385
    %487 = vmatpush1.bf16.msra.mxu0 %v384
    %488 = vmatprep.subr.bf16.mxu0 %v389
    %489 = vmatpush1.bf16.msra.mxu0 %v388
    %490 = vmatprep.subr.bf16.mxu0 %v393
    %491 = vmatpush1.bf16.msra.mxu0 %v392
    %492 = vmatprep.mubr.bf16.mxu0 %v137
    %493 = vmatmul.mubr.bf16.gmra.mrb[0].mxu0 %v130
    %v494 = vpop.f32.mrb[0].mxu0
    %v495 = vadd.f32 %v98, %v494
    %v496 = vpop.f32.mrb[0].mxu0
    %v497 = vadd.f32 %v102, %v496
    %v498 = vpop.f32.mrb[0].mxu0
    %v499 = vpop.f32.mrb[0].mxu0
    %500 = vdwg.mxu0
    %501 = vmatprep.subr.bf16.mxu0 %v335
    %502 = vmatpush1.bf16.msra.mxu0 %v334
    %503 = vmatprep.subr.bf16.mxu0 %v339
    %504 = vmatpush1.bf16.msra.mxu0 %v338
    %505 = vmatprep.subr.bf16.mxu0 %v343
    %506 = vmatpush1.bf16.msra.mxu0 %v342
    %507 = vmatprep.subr.bf16.mxu0 %v347
    %508 = vmatpush1.bf16.msra.mxu0 %v346
    %509 = vmatprep.subr.bf16.mxu0 %v351
    %510 = vmatpush1.bf16.msra.mxu0 %v350
    %511 = vmatprep.subr.bf16.mxu0 %v355
    %512 = vmatpush1.bf16.msra.mxu0 %v354
    %513 = vmatprep.subr.bf16.mxu0 %v359
    %514 = vmatpush1.bf16.msra.mxu0 %v358
    %515 = vmatprep.subr.bf16.mxu0 %v363
    %516 = vmatpush1.bf16.msra.mxu0 %v362
    %517 = vmatprep.subr.bf16.mxu0 %v367
    %518 = vmatpush1.bf16.msra.mxu0 %v366
    %519 = vmatprep.subr.bf16.mxu0 %v371
    %520 = vmatpush1.bf16.msra.mxu0 %v370
    %521 = vmatprep.subr.bf16.mxu0 %v375
    %522 = vmatpush1.bf16.msra.mxu0 %v374
    %523 = vmatprep.subr.bf16.mxu0 %v379
    %524 = vmatpush1.bf16.msra.mxu0 %v378
    %525 = vmatprep.subr.bf16.mxu0 %v383
    %526 = vmatpush1.bf16.msra.mxu0 %v382
    %527 = vmatprep.subr.bf16.mxu0 %v387
    %528 = vmatpush1.bf16.msra.mxu0 %v386
    %529 = vmatprep.subr.bf16.mxu0 %v391
    %530 = vmatpush1.bf16.msra.mxu0 %v390
    %531 = vmatprep.subr.bf16.mxu0 %v395
    %532 = vmatpush1.bf16.msra.mxu0 %v394
    %533 = vmatprep.mubr.bf16.mxu0 %v137
    %534 = vmatmul.mubr.bf16.gmra.mrb[0].mxu0 %v130
    %v535 = vpop.f32.mrb[0].mxu0
    %v536 = vadd.f32 %v106, %v535
    %v537 = vpop.f32.mrb[0].mxu0
    %v538 = vadd.f32 %v110, %v537
    %v539 = vpop.f32.mrb[0].mxu0
    %v540 = vpop.f32.mrb[0].mxu0
    %541 = vdwg.mxu0
    %v542 = vmax.f32 %v495, 0.0
    %v543 = vmax.f32 %v497, 0.0
    %v544 = vmax.f32 %v536, 0.0
    %v545 = vmax.f32 %v538, 0.0
    %v546 = vpack.c.bf16 %v542, %v542
    %v547 = vpack.c.bf16 %v543, %v543
    %v548 = vpack.c.bf16 %v544, %v544
    %v549 = vpack.c.bf16 %v545, %v545
    %v550 = vld [vmem:[%s3] sm:$0xf]
    %v551 = vld [vmem:[%s3 + $0x4] sm:$0xf]
    %v552 = vld [vmem:[%s3 + $0x8] sm:$0xf]
    %v553 = vld [vmem:[%s3 + $0xc] sm:$0xf]
    %v554 = vld [vmem:[%s3 + $0x10] sm:$0xf]
    %v555 = vld [vmem:[%s3 + $0x14] sm:$0xf]
    %v556 = vld [vmem:[%s3 + $0x18] sm:$0xf]
    %v557 = vld [vmem:[%s3 + $0x1c] sm:$0xf]
    %v558 = vld [vmem:[%s3 + $0x20] sm:$0xf]
    %v559 = vld [vmem:[%s3 + $0x24] sm:$0xf]
    %v560 = vld [vmem:[%s3 + $0x28] sm:$0xf]
    %v561 = vld [vmem:[%s3 + $0x2c] sm:$0xf]
    %v562 = vld [vmem:[%s3 + $0x30] sm:$0xf]
    %v563 = vld [vmem:[%s3 + $0x34] sm:$0xf]
    %v564 = vld [vmem:[%s3 + $0x38] sm:$0xf]
    %v565 = vld [vmem:[%s3 + $0x3c] sm:$0xf]
    %v566 = vld [vmem:[%s3 + $0x40] sm:$0xf]
    %v567 = vld [vmem:[%s3 + $0x44] sm:$0xf]
    %v568 = vld [vmem:[%s3 + $0x48] sm:$0xf]
    %v569 = vld [vmem:[%s3 + $0x4c] sm:$0xf]
    %v570 = vld [vmem:[%s3 + $0x50] sm:$0xf]
    %v571 = vld [vmem:[%s3 + $0x54] sm:$0xf]
    %v572 = vld [vmem:[%s3 + $0x58] sm:$0xf]
    %v573 = vld [vmem:[%s3 + $0x5c] sm:$0xf]
    %v574 = vld [vmem:[%s3 + $0x60] sm:$0xf]
    %v575 = vld [vmem:[%s3 + $0x64] sm:$0xf]
    %v576 = vld [vmem:[%s3 + $0x68] sm:$0xf]
    %v577 = vld [vmem:[%s3 + $0x6c] sm:$0xf]
    %v578 = vld [vmem:[%s3 + $0x70] sm:$0xf]
    %v579 = vld [vmem:[%s3 + $0x74] sm:$0xf]
    %v580 = vld [vmem:[%s3 + $0x78] sm:$0xf]
    %v581 = vld [vmem:[%s3 + $0x7c] sm:$0xf]
    %v582 = vld [vmem:[%s3 + $0x80] sm:$0xf]
    %v583 = vld [vmem:[%s3 + $0x84] sm:$0xf]
    %v584 = vld [vmem:[%s3 + $0x88] sm:$0xf]
    %v585 = vld [vmem:[%s3 + $0x8c] sm:$0xf]
    %v586 = vld [vmem:[%s3 + $0x90] sm:$0xf]
    %v587 = vld [vmem:[%s3 + $0x94] sm:$0xf]
    %v588 = vld [vmem:[%s3 + $0x98] sm:$0xf]
    %v589 = vld [vmem:[%s3 + $0x9c] sm:$0xf]
    %v590 = vld [vmem:[%s3 + $0xa0] sm:$0xf]
    %v591 = vld [vmem:[%s3 + $0xa4] sm:$0xf]
    %v592 = vld [vmem:[%s3 + $0xa8] sm:$0xf]
    %v593 = vld [vmem:[%s3 + $0xac] sm:$0xf]
    %v594 = vld [vmem:[%s3 + $0xb0] sm:$0xf]
    %v595 = vld [vmem:[%s3 + $0xb4] sm:$0xf]
    %v596 = vld [vmem:[%s3 + $0xb8] sm:$0xf]
    %v597 = vld [vmem:[%s3 + $0xbc] sm:$0xf]
    %v598 = vld [vmem:[%s3 + $0xc0] sm:$0xf]
    %v599 = vld [vmem:[%s3 + $0xc4] sm:$0xf]
    %v600 = vld [vmem:[%s3 + $0xc8] sm:$0xf]
    %v601 = vld [vmem:[%s3 + $0xcc] sm:$0xf]
    %v602 = vld [vmem:[%s3 + $0xd0] sm:$0xf]
    %v603 = vld [vmem:[%s3 + $0xd4] sm:$0xf]
    %v604 = vld [vmem:[%s3 + $0xd8] sm:$0xf]
    %v605 = vld [vmem:[%s3 + $0xdc] sm:$0xf]
    %v606 = vld [vmem:[%s3 + $0xe0] sm:$0xf]
    %v607 = vld [vmem:[%s3 + $0xe4] sm:$0xf]
    %v608 = vld [vmem:[%s3 + $0xe8] sm:$0xf]
    %v609 = vld [vmem:[%s3 + $0xec] sm:$0xf]
    %v610 = vld [vmem:[%s3 + $0xf0] sm:$0xf]
    %v611 = vld [vmem:[%s3 + $0xf4] sm:$0xf]
    %v612 = vld [vmem:[%s3 + $0xf8] sm:$0xf]
    %v613 = vld [vmem:[%s3 + $0xfc] sm:$0xf]
    %v614 = vld [vmem:[%s4] sm:$0x1]
    %v616 = vlaneseq
    %v617 = vshrl.u32 %v616, 7
    %v618 = vsub.s32 0, %v617
    %v619 = vrot.slane %v614, %v618
    %v685 = vunpack.c.l.b16 %v550
    %v686 = vunpack.c.l.b16 %v551
    %v687 = vunpack.c.l.b16 %v552
    %v688 = vunpack.c.l.b16 %v553
    %v689 = vunpack.c.l.b16 %v554
    %v690 = vunpack.c.l.b16 %v555
    %v691 = vunpack.c.l.b16 %v556
    %v692 = vunpack.c.l.b16 %v557
    %v693 = vunpack.c.l.b16 %v558
    %v694 = vunpack.c.l.b16 %v559
    %v695 = vunpack.c.l.b16 %v560
    %v696 = vunpack.c.l.b16 %v561
    %v697 = vunpack.c.l.b16 %v562
    %v698 = vunpack.c.l.b16 %v563
    %v699 = vunpack.c.l.b16 %v564
    %v700 = vunpack.c.l.b16 %v565
    %v701 = vunpack.c.l.b16 %v566
    %v702 = vunpack.c.l.b16 %v567
    %v703 = vunpack.c.l.b16 %v568
    %v704 = vunpack.c.l.b16 %v569
    %v705 = vunpack.c.l.b16 %v570
    %v706 = vunpack.c.l.b16 %v571
    %v707 = vunpack.c.l.b16 %v572
    %v708 = vunpack.c.l.b16 %v573
    %v709 = vunpack.c.l.b16 %v574
    %v710 = vunpack.c.l.b16 %v575
    %v711 = vunpack.c.l.b16 %v576
    %v712 = vunpack.c.l.b16 %v577
    %v713 = vunpack.c.l.b16 %v578
    %v714 = vunpack.c.l.b16 %v579
    %v715 = vunpack.c.l.b16 %v580
    %v716 = vunpack.c.l.b16 %v581
    %v717 = vunpack.c.l.b16 %v582
    %v718 = vunpack.c.l.b16 %v583
    %v719 = vunpack.c.l.b16 %v584
    %v720 = vunpack.c.l.b16 %v585
    %v721 = vunpack.c.l.b16 %v586
    %v722 = vunpack.c.l.b16 %v587
    %v723 = vunpack.c.l.b16 %v588
    %v724 = vunpack.c.l.b16 %v589
    %v725 = vunpack.c.l.b16 %v590
    %v726 = vunpack.c.l.b16 %v591
    %v727 = vunpack.c.l.b16 %v592
    %v728 = vunpack.c.l.b16 %v593
    %v729 = vunpack.c.l.b16 %v594
    %v730 = vunpack.c.l.b16 %v595
    %v731 = vunpack.c.l.b16 %v596
    %v732 = vunpack.c.l.b16 %v597
    %v733 = vunpack.c.l.b16 %v598
    %v734 = vunpack.c.l.b16 %v599
    %v735 = vunpack.c.l.b16 %v600
    %v736 = vunpack.c.l.b16 %v601
    %v737 = vunpack.c.l.b16 %v602
    %v738 = vunpack.c.l.b16 %v603
    %v739 = vunpack.c.l.b16 %v604
    %v740 = vunpack.c.l.b16 %v605
    %v741 = vunpack.c.l.b16 %v606
    %v742 = vunpack.c.l.b16 %v607
    %v743 = vunpack.c.l.b16 %v608
    %v744 = vunpack.c.l.b16 %v609
    %v745 = vunpack.c.l.b16 %v610
    %v746 = vunpack.c.l.b16 %v611
    %v747 = vunpack.c.l.b16 %v612
    %v748 = vunpack.c.l.b16 %v613
    %v749 = vpack.c.b16 %v686, %v685
    %v750 = vpack.c.b16 %v688, %v687
    %v751 = vpack.c.b16 %v690, %v689
    %v752 = vpack.c.b16 %v692, %v691
    %v753 = vpack.c.b16 %v694, %v693
    %v754 = vpack.c.b16 %v696, %v695
    %v755 = vpack.c.b16 %v698, %v697
    %v756 = vpack.c.b16 %v700, %v699
    %v757 = vpack.c.b16 %v702, %v701
    %v758 = vpack.c.b16 %v704, %v703
    %v759 = vpack.c.b16 %v706, %v705
    %v760 = vpack.c.b16 %v708, %v707
    %v761 = vpack.c.b16 %v710, %v709
    %v762 = vpack.c.b16 %v712, %v711
    %v763 = vpack.c.b16 %v714, %v713
    %v764 = vpack.c.b16 %v716, %v715
    %v765 = vpack.c.b16 %v718, %v717
    %v766 = vpack.c.b16 %v720, %v719
    %v767 = vpack.c.b16 %v722, %v721
    %v768 = vpack.c.b16 %v724, %v723
    %v769 = vpack.c.b16 %v726, %v725
    %v770 = vpack.c.b16 %v728, %v727
    %v771 = vpack.c.b16 %v730, %v729
    %v772 = vpack.c.b16 %v732, %v731
    %v773 = vpack.c.b16 %v734, %v733
    %v774 = vpack.c.b16 %v736, %v735
    %v775 = vpack.c.b16 %v738, %v737
    %v776 = vpack.c.b16 %v740, %v739
    %v777 = vpack.c.b16 %v742, %v741
    %v778 = vpack.c.b16 %v744, %v743
    %v779 = vpack.c.b16 %v746, %v745
    %v780 = vpack.c.b16 %v748, %v747
    %813 = vmatprep.subr.bf16.mxu0 0
    %814 = vmatpush1.bf16.msra.mxu0 %v749
    %815 = vmatprep.subr.bf16.mxu0 0
    %816 = vmatpush1.bf16.msra.mxu0 %v750
    %817 = vmatprep.subr.bf16.mxu0 0
    %818 = vmatpush1.bf16.msra.mxu0 %v751
    %819 = vmatprep.subr.bf16.mxu0 0
    %820 = vmatpush1.bf16.msra.mxu0 %v752
    %821 = vmatprep.subr.bf16.mxu0 0
    %822 = vmatpush1.bf16.msra.mxu0 %v753
    %823 = vmatprep.subr.bf16.mxu0 0
    %824 = vmatpush1.bf16.msra.mxu0 %v754
    %825 = vmatprep.subr.bf16.mxu0 0
    %826 = vmatpush1.bf16.msra.mxu0 %v755
    %827 = vmatprep.subr.bf16.mxu0 0
    %828 = vmatpush1.bf16.msra.mxu0 %v756
    %829 = vmatprep.subr.bf16.mxu0 0
    %830 = vmatpush1.bf16.msra.mxu0 %v757
    %831 = vmatprep.subr.bf16.mxu0 0
    %832 = vmatpush1.bf16.msra.mxu0 %v758
    %833 = vmatprep.subr.bf16.mxu0 0
    %834 = vmatpush1.bf16.msra.mxu0 %v759
    %835 = vmatprep.subr.bf16.mxu0 0
    %836 = vmatpush1.bf16.msra.mxu0 %v760
    %837 = vmatprep.subr.bf16.mxu0 0
    %838 = vmatpush1.bf16.msra.mxu0 %v761
    %839 = vmatprep.subr.bf16.mxu0 0
    %840 = vmatpush1.bf16.msra.mxu0 %v762
    %841 = vmatprep.subr.bf16.mxu0 0
    %842 = vmatpush1.bf16.msra.mxu0 %v763
    %843 = vmatprep.subr.bf16.mxu0 0
    %844 = vmatpush1.bf16.msra.mxu0 %v764
    %845 = vmatprep.mubr.bf16.mxu0 %v547
    %846 = vmatmul.mubr.bf16.gmra.mrb[0].mxu0 %v546
    %v847 = vpop.f32.mrb[0].mxu0
    %v848 = vadd.f32 %v619, %v847
    %v849 = vpop.f32.mrb[0].mxu0
    %v850 = vpop.f32.mrb[0].mxu0
    %v851 = vpop.f32.mrb[0].mxu0
    %852 = vdwg.mxu0
    %853 = vmatprep.subr.bf16.mxu0 0
    %854 = vmatpush1.bf16.msra.mxu0 %v765
    %855 = vmatprep.subr.bf16.mxu0 0
    %856 = vmatpush1.bf16.msra.mxu0 %v766
    %857 = vmatprep.subr.bf16.mxu0 0
    %858 = vmatpush1.bf16.msra.mxu0 %v767
    %859 = vmatprep.subr.bf16.mxu0 0
    %860 = vmatpush1.bf16.msra.mxu0 %v768
    %861 = vmatprep.subr.bf16.mxu0 0
    %862 = vmatpush1.bf16.msra.mxu0 %v769
    %863 = vmatprep.subr.bf16.mxu0 0
    %864 = vmatpush1.bf16.msra.mxu0 %v770
    %865 = vmatprep.subr.bf16.mxu0 0
    %866 = vmatpush1.bf16.msra.mxu0 %v771
    %867 = vmatprep.subr.bf16.mxu0 0
    %868 = vmatpush1.bf16.msra.mxu0 %v772
    %869 = vmatprep.subr.bf16.mxu0 0
    %870 = vmatpush1.bf16.msra.mxu0 %v773
    %871 = vmatprep.subr.bf16.mxu0 0
    %872 = vmatpush1.bf16.msra.mxu0 %v774
    %873 = vmatprep.subr.bf16.mxu0 0
    %874 = vmatpush1.bf16.msra.mxu0 %v775
    %875 = vmatprep.subr.bf16.mxu0 0
    %876 = vmatpush1.bf16.msra.mxu0 %v776
    %877 = vmatprep.subr.bf16.mxu0 0
    %878 = vmatpush1.bf16.msra.mxu0 %v777
    %879 = vmatprep.subr.bf16.mxu0 0
    %880 = vmatpush1.bf16.msra.mxu0 %v778
    %881 = vmatprep.subr.bf16.mxu0 0
    %882 = vmatpush1.bf16.msra.mxu0 %v779
    %883 = vmatprep.subr.bf16.mxu0 0
    %884 = vmatpush1.bf16.msra.mxu0 %v780
    %885 = vmatprep.mubr.bf16.mxu0 %v549
    %886 = vmatmul.mubr.bf16.gmra.mrb[0].mxu0 %v548
    %v887 = vpop.f32.mrb[0].mxu0
    %v888 = vadd.f32 %v848, %v887
    %v889 = vpop.f32.mrb[0].mxu0
    %v890 = vpop.f32.mrb[0].mxu0
    %v891 = vpop.f32.mrb[0].mxu0
    %892 = vdwg.mxu0
    %v893 = vmax.f32 %v888, 0.0
    %v894 = vpack.c.bf16 %v893, %v893
    %v895 = vld [vmem:[%s5] sm:$0xf]
    %v896 = vld [vmem:[%s5 + $0x4] sm:$0xf]
    %v897 = vld [vmem:[%s5 + $0x8] sm:$0xf]
    %v898 = vld [vmem:[%s5 + $0xc] sm:$0xf]
    %v899 = vld [vmem:[%s5 + $0x10] sm:$0xf]
    %v900 = vld [vmem:[%s5 + $0x14] sm:$0xf]
    %v901 = vld [vmem:[%s5 + $0x18] sm:$0xf]
    %v902 = vld [vmem:[%s5 + $0x1c] sm:$0xf]
    %v903 = vld [vmem:[%s5 + $0x20] sm:$0xf]
    %v904 = vld [vmem:[%s5 + $0x24] sm:$0xf]
    %v905 = vld [vmem:[%s5 + $0x28] sm:$0xf]
    %v906 = vld [vmem:[%s5 + $0x2c] sm:$0xf]
    %v907 = vld [vmem:[%s5 + $0x30] sm:$0xf]
    %v908 = vld [vmem:[%s5 + $0x34] sm:$0xf]
    %v909 = vld [vmem:[%s5 + $0x38] sm:$0xf]
    %v910 = vld [vmem:[%s5 + $0x3c] sm:$0xf]
    %v911 = vld [vmem:[%s6] sm:$0x1]
    %v913 = vlaneseq
    %v914 = vshrl.u32 %v913, 7
    %v915 = vsub.s32 0, %v914
    %v916 = vrot.slane %v911, %v915
    %v934 = vunpack.c.l.b16 %v895
    %v935 = vunpack.c.l.b16 %v896
    %v936 = vunpack.c.l.b16 %v897
    %v937 = vunpack.c.l.b16 %v898
    %v938 = vunpack.c.l.b16 %v899
    %v939 = vunpack.c.l.b16 %v900
    %v940 = vunpack.c.l.b16 %v901
    %v941 = vunpack.c.l.b16 %v902
    %v942 = vunpack.c.l.b16 %v903
    %v943 = vunpack.c.l.b16 %v904
    %v944 = vunpack.c.l.b16 %v905
    %v945 = vunpack.c.l.b16 %v906
    %v946 = vunpack.c.l.b16 %v907
    %v947 = vunpack.c.l.b16 %v908
    %v948 = vunpack.c.l.b16 %v909
    %v949 = vunpack.c.l.b16 %v910
    %v950 = vpack.c.b16 %v935, %v934
    %v951 = vpack.c.b16 %v937, %v936
    %v952 = vpack.c.b16 %v939, %v938
    %v953 = vpack.c.b16 %v941, %v940
    %v954 = vpack.c.b16 %v943, %v942
    %v955 = vpack.c.b16 %v945, %v944
    %v956 = vpack.c.b16 %v947, %v946
    %v957 = vpack.c.b16 %v949, %v948
    %966 = vmatprep.subr.bf16.mxu0 0
    %967 = vmatpush1.bf16.msra.mxu0 %v950
    %968 = vmatprep.subr.bf16.mxu0 0
    %969 = vmatpush1.bf16.msra.mxu0 %v951
    %970 = vmatprep.subr.bf16.mxu0 0
    %971 = vmatpush1.bf16.msra.mxu0 %v952
    %972 = vmatprep.subr.bf16.mxu0 0
    %973 = vmatpush1.bf16.msra.mxu0 %v953
    %974 = vmatprep.subr.bf16.mxu0 0
    %975 = vmatpush1.bf16.msra.mxu0 %v954
    %976 = vmatprep.subr.bf16.mxu0 0
    %977 = vmatpush1.bf16.msra.mxu0 %v955
    %978 = vmatprep.subr.bf16.mxu0 0
    %979 = vmatpush1.bf16.msra.mxu0 %v956
    %980 = vmatprep.subr.bf16.mxu0 0
    %981 = vmatpush1.bf16.msra.mxu0 %v957
    %982 = vmatprep.subr.bf16.mxu0 0
    %983 = vmatpush1.bf16.msra.mxu0 0
    %984 = vmatprep.subr.bf16.mxu0 0
    %985 = vmatpush1.bf16.msra.mxu0 0
    %986 = vmatprep.subr.bf16.mxu0 0
    %987 = vmatpush1.bf16.msra.mxu0 0
    %988 = vmatprep.subr.bf16.mxu0 0
    %989 = vmatpush1.bf16.msra.mxu0 0
    %990 = vmatprep.subr.bf16.mxu0 0
    %991 = vmatpush1.bf16.msra.mxu0 0
    %992 = vmatprep.subr.bf16.mxu0 0
    %993 = vmatpush1.bf16.msra.mxu0 0
    %994 = vmatprep.subr.bf16.mxu0 0
    %995 = vmatpush1.bf16.msra.mxu0 0
    %996 = vmatprep.subr.bf16.mxu0 0
    %997 = vmatpush1.bf16.msra.mxu0 0
    %998 = vmatprep.mubr.bf16.mxu0 0
    %999 = vmatmul.mubr.bf16.gmra.mrb[0].mxu0 %v894
    %v1000 = vpop.f32.mrb[0].mxu0
    %v1001 = vadd.f32 %v916, %v1000
    %v1002 = vpop.f32.mrb[0].mxu0
    %v1003 = vpop.f32.mrb[0].mxu0
    %v1004 = vpop.f32.mrb[0].mxu0
    %1005 = vdwg.mxu0
    %vm1006 = vcmask 74752
    %v1007 = vsel %vm1006, %v1001, -inf
    %1008 = vmax.xlane.f32.xlu0 %v1007
    %v1009 = vpop.xlane.xlu0 %1008
    %v1010 = vsub.f32 %v1001, %v1009
    %v1011 = vmul.f32 %v1010, 1.442695
    %v1012 = vpow.pop %v1011
    %v1013 = vsel %vm1006, %v1012, 0.0
    %1014 = vadd.xlane.f32.xlu0 %v1013
    %v1015 = vpop.xlane.xlu0 %1014
    %v1016 = vlog2.pop %v1015
    %v1017 = vmul.f32 %v1016, 0.6931472
    %v1018 = vsub.f32 %v1010, %v1017
    %1019 = vst.msk [vmem:[#allocation2] sm:$0x3] %vm1006, %v1018
    // Predicated region
    $region30: #{complex_cnn_forward.9} parent=1 // pred_check
      _
    $region31: #{complex_cnn_forward.9} parent=1 // pred_check_branch
      %1021 = sbr.rel (0) target = $region33
    $region32: #{complex_cnn_forward.9} parent=1 // pred_region
      %s1023 = ssub.s32 32, 32
      %1024 = vsyncadd [#allocation3], %s1023
      %s1026 = sshll.u32 [#allocation2], 4
      %s1027 = int_to_ptr.vmem [resolvable:$true] %s1026
      %1029 = dma.vmem_to_hbm [thread:$0]  %s1027, 32, %s7, [#allocation3]
    $region33: #{complex_cnn_forward.9} parent=1 // pred_fallthru
      _
    // Predicated region
    $region34: #{complex_cnn_forward.9} parent=1 // pred_check
      _
    $region35: #{complex_cnn_forward.9} parent=1 // pred_check_branch
      %1031 = sbr.rel (0) target = $region37
    $region36: #{complex_cnn_forward.9} parent=1 // pred_region
      %1032 = dma.done [#allocation3], 32
    $region37: #{complex_cnn_forward.9} parent=1 // pred_fallthru
      _
    %1033 = vsyncpa [#allocation3], 1

// kernel: complex_cnn_forward.8
$region0: #{complex_cnn_forward.8}
  #allocation0 [shape = 'u32[]', space=smem, size = 0x4, offset = 0x4, fixed_abs, tag = 'smem constant byte address 0x4 - core index']
  #allocation1 [shape = 'u32[144,128]{1,0:T(1,128)}', space=vmem, size = 0x12000, scoped, tag = 'internal scratch']
  %s0 = inlined_call_operand.vmem [shape: bf16[4,2,1152], index: 0, kind: input, shape index: {}]
  %s1 = inlined_call_operand.vmem [shape: bf16[1152,256], index: 1, kind: input, shape index: {}]
  %s2 = inlined_call_operand.vmem [shape: f32[1,256], index: 2, kind: input, shape index: {}]
  %s3 = inlined_call_operand.vmem [shape: bf16[2,256], index: 3, kind: output, shape index: {}]
  %s4 = sld [smem:[#allocation0]]
  $region22: #{complex_cnn_forward.8} parent=0
    _
  %s6 = ssub.s32 1, %s4
  %s7 = scalar_select 0, %s6, %s4
  // Predicated region
  $region2: #{complex_cnn_forward.8} parent=0 // pred_check
    _
  $region3: #{complex_cnn_forward.8} parent=0 // pred_check_branch
    %9 = sbr.rel (0) target = $region5
  $region4: #{complex_cnn_forward.8} parent=0 // pred_region
    _
  $region5: #{complex_cnn_forward.8} parent=0 // pred_fallthru
    _
  // Predicated region
  $region6: #{complex_cnn_forward.8} parent=0 // pred_check
    _
  $region7: #{complex_cnn_forward.8} parent=0 // pred_check_branch
    %11 = sbr.rel (0) target = $region9
  $region8: #{complex_cnn_forward.8} parent=0 // pred_region
    _
  $region9: #{complex_cnn_forward.8} parent=0 // pred_fallthru
    _
  // Predicated region
  $region10: #{complex_cnn_forward.8} parent=0 // pred_check
    _
  $region11: #{complex_cnn_forward.8} parent=0 // pred_check_branch
    %13 = sbr.rel (0) target = $region13
  $region12: #{complex_cnn_forward.8} parent=0 // pred_region
    _
  $region13: #{complex_cnn_forward.8} parent=0 // pred_fallthru
    _
  %v15 = vld [vmem:[%s1] sm:$0xff]
  %v16 = vld [vmem:[%s1 + $0x8] sm:$0xff]
  %v17 = vld [vmem:[%s1 + $0x10] sm:$0xff]
  %v18 = vld [vmem:[%s1 + $0x18] sm:$0xff]
  %v19 = vld [vmem:[%s1 + $0x20] sm:$0xff]
  %v20 = vld [vmem:[%s1 + $0x28] sm:$0xff]
  %v21 = vld [vmem:[%s1 + $0x30] sm:$0xff]
  %v22 = vld [vmem:[%s1 + $0x38] sm:$0xff]
  %v23 = vld [vmem:[%s1 + $0x40] sm:$0xff]
  %v24 = vld [vmem:[%s1 + $0x48] sm:$0xff]
  %v25 = vld [vmem:[%s1 + $0x50] sm:$0xff]
  %v26 = vld [vmem:[%s1 + $0x58] sm:$0xff]
  %v27 = vld [vmem:[%s1 + $0x60] sm:$0xff]
  %v28 = vld [vmem:[%s1 + $0x68] sm:$0xff]
  %v29 = vld [vmem:[%s1 + $0x70] sm:$0xff]
  %v30 = vld [vmem:[%s1 + $0x78] sm:$0xff]
  %v31 = vld [vmem:[%s1 + $0x80] sm:$0xff]
  %v32 = vld [vmem:[%s1 + $0x88] sm:$0xff]
  %v33 = vld [vmem:[%s1 + $0x90] sm:$0xff]
  %v34 = vld [vmem:[%s1 + $0x98] sm:$0xff]
  %v35 = vld [vmem:[%s1 + $0xa0] sm:$0xff]
  %v36 = vld [vmem:[%s1 + $0xa8] sm:$0xff]
  %v37 = vld [vmem:[%s1 + $0xb0] sm:$0xff]
  %v38 = vld [vmem:[%s1 + $0xb8] sm:$0xff]
  %v39 = vld [vmem:[%s1 + $0xc0] sm:$0xff]
  %v40 = vld [vmem:[%s1 + $0xc8] sm:$0xff]
  %v41 = vld [vmem:[%s1 + $0xd0] sm:$0xff]
  %v42 = vld [vmem:[%s1 + $0xd8] sm:$0xff]
  %v43 = vld [vmem:[%s1 + $0xe0] sm:$0xff]
  %v44 = vld [vmem:[%s1 + $0xe8] sm:$0xff]
  %v45 = vld [vmem:[%s1 + $0xf0] sm:$0xff]
  %v46 = vld [vmem:[%s1 + $0xf8] sm:$0xff]
  %v47 = vld [vmem:[%s1 + $0x100] sm:$0xff]
  %v48 = vld [vmem:[%s1 + $0x108] sm:$0xff]
  %v49 = vld [vmem:[%s1 + $0x110] sm:$0xff]
  %v50 = vld [vmem:[%s1 + $0x118] sm:$0xff]
  %v51 = vld [vmem:[%s1 + $0x120] sm:$0xff]
  %v52 = vld [vmem:[%s1 + $0x128] sm:$0xff]
  %v53 = vld [vmem:[%s1 + $0x130] sm:$0xff]
  %v54 = vld [vmem:[%s1 + $0x138] sm:$0xff]
  %v55 = vld [vmem:[%s1 + $0x140] sm:$0xff]
  %v56 = vld [vmem:[%s1 + $0x148] sm:$0xff]
  %v57 = vld [vmem:[%s1 + $0x150] sm:$0xff]
  %v58 = vld [vmem:[%s1 + $0x158] sm:$0xff]
  %v59 = vld [vmem:[%s1 + $0x160] sm:$0xff]
  %v60 = vld [vmem:[%s1 + $0x168] sm:$0xff]
  %v61 = vld [vmem:[%s1 + $0x170] sm:$0xff]
  %v62 = vld [vmem:[%s1 + $0x178] sm:$0xff]
  %v63 = vld [vmem:[%s1 + $0x180] sm:$0xff]
  %v64 = vld [vmem:[%s1 + $0x188] sm:$0xff]
  %v65 = vld [vmem:[%s1 + $0x190] sm:$0xff]
  %v66 = vld [vmem:[%s1 + $0x198] sm:$0xff]
  %v67 = vld [vmem:[%s1 + $0x1a0] sm:$0xff]
  %v68 = vld [vmem:[%s1 + $0x1a8] sm:$0xff]
  %v69 = vld [vmem:[%s1 + $0x1b0] sm:$0xff]
  %v70 = vld [vmem:[%s1 + $0x1b8] sm:$0xff]
  %v71 = vld [vmem:[%s1 + $0x1c0] sm:$0xff]
  %v72 = vld [vmem:[%s1 + $0x1c8] sm:$0xff]
  %v73 = vld [vmem:[%s1 + $0x1d0] sm:$0xff]
  %v74 = vld [vmem:[%s1 + $0x1d8] sm:$0xff]
  %v75 = vld [vmem:[%s1 + $0x1e0] sm:$0xff]
  %v76 = vld [vmem:[%s1 + $0x1e8] sm:$0xff]
  %v77 = vld [vmem:[%s1 + $0x1f0] sm:$0xff]
  %v78 = vld [vmem:[%s1 + $0x1f8] sm:$0xff]
  %v79 = vld [vmem:[%s1 + $0x200] sm:$0xff]
  %v80 = vld [vmem:[%s1 + $0x208] sm:$0xff]
  %v81 = vld [vmem:[%s1 + $0x210] sm:$0xff]
  %v82 = vld [vmem:[%s1 + $0x218] sm:$0xff]
  %v83 = vld [vmem:[%s1 + $0x220] sm:$0xff]
  %v84 = vld [vmem:[%s1 + $0x228] sm:$0xff]
  %v85 = vld [vmem:[%s1 + $0x230] sm:$0xff]
  %v86 = vld [vmem:[%s1 + $0x238] sm:$0xff]
  %v87 = vld [vmem:[%s1 + $0x240] sm:$0xff]
  %v88 = vld [vmem:[%s1 + $0x248] sm:$0xff]
  %v89 = vld [vmem:[%s1 + $0x250] sm:$0xff]
  %v90 = vld [vmem:[%s1 + $0x258] sm:$0xff]
  %v91 = vld [vmem:[%s1 + $0x260] sm:$0xff]
  %v92 = vld [vmem:[%s1 + $0x268] sm:$0xff]
  %v93 = vld [vmem:[%s1 + $0x270] sm:$0xff]
  %v94 = vld [vmem:[%s1 + $0x278] sm:$0xff]
  %v95 = vld [vmem:[%s1 + $0x280] sm:$0xff]
  %v96 = vld [vmem:[%s1 + $0x288] sm:$0xff]
  %v97 = vld [vmem:[%s1 + $0x290] sm:$0xff]
  %v98 = vld [vmem:[%s1 + $0x298] sm:$0xff]
  %v99 = vld [vmem:[%s1 + $0x2a0] sm:$0xff]
  %v100 = vld [vmem:[%s1 + $0x2a8] sm:$0xff]
  %v101 = vld [vmem:[%s1 + $0x2b0] sm:$0xff]
  %v102 = vld [vmem:[%s1 + $0x2b8] sm:$0xff]
  %v103 = vld [vmem:[%s1 + $0x2c0] sm:$0xff]
  %v104 = vld [vmem:[%s1 + $0x2c8] sm:$0xff]
  %v105 = vld [vmem:[%s1 + $0x2d0] sm:$0xff]
  %v106 = vld [vmem:[%s1 + $0x2d8] sm:$0xff]
  %v107 = vld [vmem:[%s1 + $0x2e0] sm:$0xff]
  %v108 = vld [vmem:[%s1 + $0x2e8] sm:$0xff]
  %v109 = vld [vmem:[%s1 + $0x2f0] sm:$0xff]
  %v110 = vld [vmem:[%s1 + $0x2f8] sm:$0xff]
  %v111 = vld [vmem:[%s1 + $0x300] sm:$0xff]
  %v112 = vld [vmem:[%s1 + $0x308] sm:$0xff]
  %v113 = vld [vmem:[%s1 + $0x310] sm:$0xff]
  %v114 = vld [vmem:[%s1 + $0x318] sm:$0xff]
  %v115 = vld [vmem:[%s1 + $0x320] sm:$0xff]
  %v116 = vld [vmem:[%s1 + $0x328] sm:$0xff]
  %v117 = vld [vmem:[%s1 + $0x330] sm:$0xff]
  %v118 = vld [vmem:[%s1 + $0x338] sm:$0xff]
  %v119 = vld [vmem:[%s1 + $0x340] sm:$0xff]
  %v120 = vld [vmem:[%s1 + $0x348] sm:$0xff]
  %v121 = vld [vmem:[%s1 + $0x350] sm:$0xff]
  %v122 = vld [vmem:[%s1 + $0x358] sm:$0xff]
  %v123 = vld [vmem:[%s1 + $0x360] sm:$0xff]
  %v124 = vld [vmem:[%s1 + $0x368] sm:$0xff]
  %v125 = vld [vmem:[%s1 + $0x370] sm:$0xff]
  %v126 = vld [vmem:[%s1 + $0x378] sm:$0xff]
  %v127 = vld [vmem:[%s1 + $0x380] sm:$0xff]
  %v128 = vld [vmem:[%s1 + $0x388] sm:$0xff]
  %v129 = vld [vmem:[%s1 + $0x390] sm:$0xff]
  %v130 = vld [vmem:[%s1 + $0x398] sm:$0xff]
  %v131 = vld [vmem:[%s1 + $0x3a0] sm:$0xff]
  %v132 = vld [vmem:[%s1 + $0x3a8] sm:$0xff]
  %v133 = vld [vmem:[%s1 + $0x3b0] sm:$0xff]
  %v134 = vld [vmem:[%s1 + $0x3b8] sm:$0xff]
  %v135 = vld [vmem:[%s1 + $0x3c0] sm:$0xff]
  %v136 = vld [vmem:[%s1 + $0x3c8] sm:$0xff]
  %v137 = vld [vmem:[%s1 + $0x3d0] sm:$0xff]
  %v138 = vld [vmem:[%s1 + $0x3d8] sm:$0xff]
  %v139 = vld [vmem:[%s1 + $0x3e0] sm:$0xff]
  %v140 = vld [vmem:[%s1 + $0x3e8] sm:$0xff]
  %v141 = vld [vmem:[%s1 + $0x3f0] sm:$0xff]
  %v142 = vld [vmem:[%s1 + $0x3f8] sm:$0xff]
  %v143 = vld [vmem:[%s1 + $0x400] sm:$0xff]
  %v144 = vld [vmem:[%s1 + $0x408] sm:$0xff]
  %v145 = vld [vmem:[%s1 + $0x410] sm:$0xff]
  %v146 = vld [vmem:[%s1 + $0x418] sm:$0xff]
  %v147 = vld [vmem:[%s1 + $0x420] sm:$0xff]
  %v148 = vld [vmem:[%s1 + $0x428] sm:$0xff]
  %v149 = vld [vmem:[%s1 + $0x430] sm:$0xff]
  %v150 = vld [vmem:[%s1 + $0x438] sm:$0xff]
  %v151 = vld [vmem:[%s1 + $0x440] sm:$0xff]
  %v152 = vld [vmem:[%s1 + $0x448] sm:$0xff]
  %v153 = vld [vmem:[%s1 + $0x450] sm:$0xff]
  %v154 = vld [vmem:[%s1 + $0x458] sm:$0xff]
  %v155 = vld [vmem:[%s1 + $0x460] sm:$0xff]
  %v156 = vld [vmem:[%s1 + $0x468] sm:$0xff]
  %v157 = vld [vmem:[%s1 + $0x470] sm:$0xff]
  %v158 = vld [vmem:[%s1 + $0x478] sm:$0xff]
  %v159 = vld [vmem:[%s0] sm:$0xff]
  %v160 = vld [vmem:[%s0 + $0x8] sm:$0x1]
  %v163 = vcombine.high %v159, %v159
  %v165 = vunpack.c.l.s4 1966171168
  %v166 = vunpack.c.0.s8 %v165
  %v167 = vlaneseq
  %v168 = vshrl.u32 %v167, 7
  %v169 = vsub.s32 %v166, %v168
  %v170 = vrot.slane %v159, %v169
  %v172 = vunpack.c.l.s4 1966171168
  %v173 = vunpack.c.0.s8 %v172
  %v174 = vlaneseq
  %v175 = vshrl.u32 %v174, 7
  %v176 = vsub.s32 %v173, %v175
  %v177 = vrot.slane %v163, %v176
  %v178 = vcombine.high %v170, %v170
  %v179 = vcombine.high %v177, %v177
  %v181 = vunpack.c.l.s4 1966171168
  %v182 = vunpack.c.0.s8 %v181
  %v183 = vlaneseq
  %v184 = vshrl.u32 %v183, 7
  %v185 = vsub.s32 %v182, %v184
  %v186 = vrot.slane %v170, %v185
  %v188 = vunpack.c.l.s4 1966171168
  %v189 = vunpack.c.0.s8 %v188
  %v190 = vlaneseq
  %v191 = vshrl.u32 %v190, 7
  %v192 = vsub.s32 %v189, %v191
  %v193 = vrot.slane %v177, %v192
  %v195 = vunpack.c.l.s4 1966171168
  %v196 = vunpack.c.0.s8 %v195
  %v197 = vlaneseq
  %v198 = vshrl.u32 %v197, 7
  %v199 = vsub.s32 %v196, %v198
  %v200 = vrot.slane %v178, %v199
  %v202 = vunpack.c.l.s4 1966171168
  %v203 = vunpack.c.0.s8 %v202
  %v204 = vlaneseq
  %v205 = vshrl.u32 %v204, 7
  %v206 = vsub.s32 %v203, %v205
  %v207 = vrot.slane %v179, %v206
  %v208 = vcombine.high %v186, %v186
  %v209 = vcombine.high %v193, %v193
  %v210 = vcombine.high %v200, %v200
  %v211 = vcombine.high %v207, %v207
  %v213 = vunpack.c.l.s4 1966171168
  %v214 = vunpack.c.0.s8 %v213
  %v215 = vlaneseq
  %v216 = vshrl.u32 %v215, 7
  %v217 = vsub.s32 %v214, %v216
  %v218 = vrot.slane %v160, %v217
  %v220 = vunpack.c.l.s4 1966171168
  %v221 = vunpack.c.0.s8 %v220
  %v222 = vlaneseq
  %v223 = vshrl.u32 %v222, 7
  %v224 = vsub.s32 %v221, %v223
  %v225 = vrot.slane %v218, %v224
  %v379 = vunpack.c.l.b16 %v15
  %v380 = vunpack.c.h.b16 %v15
  %v381 = vunpack.c.l.b16 %v16
  %v382 = vunpack.c.h.b16 %v16
  %v383 = vunpack.c.l.b16 %v17
  %v384 = vunpack.c.h.b16 %v17
  %v385 = vunpack.c.l.b16 %v18
  %v386 = vunpack.c.h.b16 %v18
  %v387 = vunpack.c.l.b16 %v19
  %v388 = vunpack.c.h.b16 %v19
  %v389 = vunpack.c.l.b16 %v20
  %v390 = vunpack.c.h.b16 %v20
  %v391 = vunpack.c.l.b16 %v21
  %v392 = vunpack.c.h.b16 %v21
  %v393 = vunpack.c.l.b16 %v22
  %v394 = vunpack.c.h.b16 %v22
  %v395 = vunpack.c.l.b16 %v23
  %v396 = vunpack.c.h.b16 %v23
  %v397 = vunpack.c.l.b16 %v24
  %v398 = vunpack.c.h.b16 %v24
  %v399 = vunpack.c.l.b16 %v25
  %v400 = vunpack.c.h.b16 %v25
  %v401 = vunpack.c.l.b16 %v26
  %v402 = vunpack.c.h.b16 %v26
  %v403 = vunpack.c.l.b16 %v27
  %v404 = vunpack.c.h.b16 %v27
  %v405 = vunpack.c.l.b16 %v28
  %v406 = vunpack.c.h.b16 %v28
  %v407 = vunpack.c.l.b16 %v29
  %v408 = vunpack.c.h.b16 %v29
  %v409 = vunpack.c.l.b16 %v30
  %v410 = vunpack.c.h.b16 %v30
  %v411 = vunpack.c.l.b16 %v31
  %v412 = vunpack.c.h.b16 %v31
  %v413 = vunpack.c.l.b16 %v32
  %v414 = vunpack.c.h.b16 %v32
  %v415 = vunpack.c.l.b16 %v33
  %v416 = vunpack.c.h.b16 %v33
  %v417 = vunpack.c.l.b16 %v34
  %v418 = vunpack.c.h.b16 %v34
  %v419 = vunpack.c.l.b16 %v35
  %v420 = vunpack.c.h.b16 %v35
  %v421 = vunpack.c.l.b16 %v36
  %v422 = vunpack.c.h.b16 %v36
  %v423 = vunpack.c.l.b16 %v37
  %v424 = vunpack.c.h.b16 %v37
  %v425 = vunpack.c.l.b16 %v38
  %v426 = vunpack.c.h.b16 %v38
  %v427 = vunpack.c.l.b16 %v39
  %v428 = vunpack.c.h.b16 %v39
  %v429 = vunpack.c.l.b16 %v40
  %v430 = vunpack.c.h.b16 %v40
  %v431 = vunpack.c.l.b16 %v41
  %v432 = vunpack.c.h.b16 %v41
  %v433 = vunpack.c.l.b16 %v42
  %v434 = vunpack.c.h.b16 %v42
  %v435 = vunpack.c.l.b16 %v43
  %v436 = vunpack.c.h.b16 %v43
  %v437 = vunpack.c.l.b16 %v44
  %v438 = vunpack.c.h.b16 %v44
  %v439 = vunpack.c.l.b16 %v45
  %v440 = vunpack.c.h.b16 %v45
  %v441 = vunpack.c.l.b16 %v46
  %v442 = vunpack.c.h.b16 %v46
  %v443 = vunpack.c.l.b16 %v47
  %v444 = vunpack.c.h.b16 %v47
  %v445 = vunpack.c.l.b16 %v48
  %v446 = vunpack.c.h.b16 %v48
  %v447 = vunpack.c.l.b16 %v49
  %v448 = vunpack.c.h.b16 %v49
  %v449 = vunpack.c.l.b16 %v50
  %v450 = vunpack.c.h.b16 %v50
  %v451 = vunpack.c.l.b16 %v51
  %v452 = vunpack.c.h.b16 %v51
  %v453 = vunpack.c.l.b16 %v52
  %v454 = vunpack.c.h.b16 %v52
  %v455 = vunpack.c.l.b16 %v53
  %v456 = vunpack.c.h.b16 %v53
  %v457 = vunpack.c.l.b16 %v54
  %v458 = vunpack.c.h.b16 %v54
  %v459 = vunpack.c.l.b16 %v55
  %v460 = vunpack.c.h.b16 %v55
  %v461 = vunpack.c.l.b16 %v56
  %v462 = vunpack.c.h.b16 %v56
  %v463 = vunpack.c.l.b16 %v57
  %v464 = vunpack.c.h.b16 %v57
  %v465 = vunpack.c.l.b16 %v58
  %v466 = vunpack.c.h.b16 %v58
  %v467 = vunpack.c.l.b16 %v59
  %v468 = vunpack.c.h.b16 %v59
  %v469 = vunpack.c.l.b16 %v60
  %v470 = vunpack.c.h.b16 %v60
  %v471 = vunpack.c.l.b16 %v61
  %v472 = vunpack.c.h.b16 %v61
  %v473 = vunpack.c.l.b16 %v62
  %v474 = vunpack.c.h.b16 %v62
  %v475 = vunpack.c.l.b16 %v63
  %v476 = vunpack.c.h.b16 %v63
  %v477 = vunpack.c.l.b16 %v64
  %v478 = vunpack.c.h.b16 %v64
  %v479 = vunpack.c.l.b16 %v65
  %v480 = vunpack.c.h.b16 %v65
  %v481 = vunpack.c.l.b16 %v66
  %v482 = vunpack.c.h.b16 %v66
  %v483 = vunpack.c.l.b16 %v67
  %v484 = vunpack.c.h.b16 %v67
  %v485 = vunpack.c.l.b16 %v68
  %v486 = vunpack.c.h.b16 %v68
  %v487 = vunpack.c.l.b16 %v69
  %v488 = vunpack.c.h.b16 %v69
  %v489 = vunpack.c.l.b16 %v70
  %v490 = vunpack.c.h.b16 %v70
  %v491 = vunpack.c.l.b16 %v71
  %v492 = vunpack.c.h.b16 %v71
  %v493 = vunpack.c.l.b16 %v72
  %v494 = vunpack.c.h.b16 %v72
  %v495 = vunpack.c.l.b16 %v73
  %v496 = vunpack.c.h.b16 %v73
  %v497 = vunpack.c.l.b16 %v74
  %v498 = vunpack.c.h.b16 %v74
  %v499 = vunpack.c.l.b16 %v75
  %v500 = vunpack.c.h.b16 %v75
  %v501 = vunpack.c.l.b16 %v76
  %v502 = vunpack.c.h.b16 %v76
  %v503 = vunpack.c.l.b16 %v77
  %v504 = vunpack.c.h.b16 %v77
  %v505 = vunpack.c.l.b16 %v78
  %v506 = vunpack.c.h.b16 %v78
  %v507 = vunpack.c.l.b16 %v79
  %v508 = vunpack.c.h.b16 %v79
  %v509 = vunpack.c.l.b16 %v80
  %v510 = vunpack.c.h.b16 %v80
  %v511 = vunpack.c.l.b16 %v81
  %v512 = vunpack.c.h.b16 %v81
  %v513 = vunpack.c.l.b16 %v82
  %v514 = vunpack.c.h.b16 %v82
  %v515 = vunpack.c.l.b16 %v83
  %v516 = vunpack.c.h.b16 %v83
  %v517 = vunpack.c.l.b16 %v84
  %v518 = vunpack.c.h.b16 %v84
  %v519 = vunpack.c.l.b16 %v85
  %v520 = vunpack.c.h.b16 %v85
  %v521 = vunpack.c.l.b16 %v86
  %v522 = vunpack.c.h.b16 %v86
  %v523 = vunpack.c.l.b16 %v87
  %v524 = vunpack.c.h.b16 %v87
  %v525 = vunpack.c.l.b16 %v88
  %v526 = vunpack.c.h.b16 %v88
  %v527 = vunpack.c.l.b16 %v89
  %v528 = vunpack.c.h.b16 %v89
  %v529 = vunpack.c.l.b16 %v90
  %v530 = vunpack.c.h.b16 %v90
  %v531 = vunpack.c.l.b16 %v91
  %v532 = vunpack.c.h.b16 %v91
  %v533 = vunpack.c.l.b16 %v92
  %v534 = vunpack.c.h.b16 %v92
  %v535 = vunpack.c.l.b16 %v93
  %v536 = vunpack.c.h.b16 %v93
  %v537 = vunpack.c.l.b16 %v94
  %v538 = vunpack.c.h.b16 %v94
  %v539 = vunpack.c.l.b16 %v95
  %v540 = vunpack.c.h.b16 %v95
  %v541 = vunpack.c.l.b16 %v96
  %v542 = vunpack.c.h.b16 %v96
  %v543 = vunpack.c.l.b16 %v97
  %v544 = vunpack.c.h.b16 %v97
  %v545 = vunpack.c.l.b16 %v98
  %v546 = vunpack.c.h.b16 %v98
  %v547 = vunpack.c.l.b16 %v99
  %v548 = vunpack.c.h.b16 %v99
  %v549 = vunpack.c.l.b16 %v100
  %v550 = vunpack.c.h.b16 %v100
  %v551 = vunpack.c.l.b16 %v101
  %v552 = vunpack.c.h.b16 %v101
  %v553 = vunpack.c.l.b16 %v102
  %v554 = vunpack.c.h.b16 %v102
  %v555 = vunpack.c.l.b16 %v103
  %v556 = vunpack.c.h.b16 %v103
  %v557 = vunpack.c.l.b16 %v104
  %v558 = vunpack.c.h.b16 %v104
  %v559 = vunpack.c.l.b16 %v105
  %v560 = vunpack.c.h.b16 %v105
  %v561 = vunpack.c.l.b16 %v106
  %v562 = vunpack.c.h.b16 %v106
  %v563 = vunpack.c.l.b16 %v107
  %v564 = vunpack.c.h.b16 %v107
  %v565 = vunpack.c.l.b16 %v108
  %v566 = vunpack.c.h.b16 %v108
  %v567 = vunpack.c.l.b16 %v109
  %v568 = vunpack.c.h.b16 %v109
  %v569 = vunpack.c.l.b16 %v110
  %v570 = vunpack.c.h.b16 %v110
  %v571 = vunpack.c.l.b16 %v111
  %v572 = vunpack.c.h.b16 %v111
  %v573 = vunpack.c.l.b16 %v112
  %v574 = vunpack.c.h.b16 %v112
  %v575 = vunpack.c.l.b16 %v113
  %v576 = vunpack.c.h.b16 %v113
  %v577 = vunpack.c.l.b16 %v114
  %v578 = vunpack.c.h.b16 %v114
  %v579 = vunpack.c.l.b16 %v115
  %v580 = vunpack.c.h.b16 %v115
  %v581 = vunpack.c.l.b16 %v116
  %v582 = vunpack.c.h.b16 %v116
  %v583 = vunpack.c.l.b16 %v117
  %v584 = vunpack.c.h.b16 %v117
  %v585 = vunpack.c.l.b16 %v118
  %v586 = vunpack.c.h.b16 %v118
  %v587 = vunpack.c.l.b16 %v119
  %v588 = vunpack.c.h.b16 %v119
  %v589 = vunpack.c.l.b16 %v120
  %v590 = vunpack.c.h.b16 %v120
  %v591 = vunpack.c.l.b16 %v121
  %v592 = vunpack.c.h.b16 %v121
  %v593 = vunpack.c.l.b16 %v122
  %v594 = vunpack.c.h.b16 %v122
  %v595 = vunpack.c.l.b16 %v123
  %v596 = vunpack.c.h.b16 %v123
  %v597 = vunpack.c.l.b16 %v124
  %v598 = vunpack.c.h.b16 %v124
  %v599 = vunpack.c.l.b16 %v125
  %v600 = vunpack.c.h.b16 %v125
  %v601 = vunpack.c.l.b16 %v126
  %v602 = vunpack.c.h.b16 %v126
  %v603 = vunpack.c.l.b16 %v127
  %v604 = vunpack.c.h.b16 %v127
  %v605 = vunpack.c.l.b16 %v128
  %v606 = vunpack.c.h.b16 %v128
  %v607 = vunpack.c.l.b16 %v129
  %v608 = vunpack.c.h.b16 %v129
  %v609 = vunpack.c.l.b16 %v130
  %v610 = vunpack.c.h.b16 %v130
  %v611 = vunpack.c.l.b16 %v131
  %v612 = vunpack.c.h.b16 %v131
  %v613 = vunpack.c.l.b16 %v132
  %v614 = vunpack.c.h.b16 %v132
  %v615 = vunpack.c.l.b16 %v133
  %v616 = vunpack.c.h.b16 %v133
  %v617 = vunpack.c.l.b16 %v134
  %v618 = vunpack.c.h.b16 %v134
  %v619 = vunpack.c.l.b16 %v135
  %v620 = vunpack.c.h.b16 %v135
  %v621 = vunpack.c.l.b16 %v136
  %v622 = vunpack.c.h.b16 %v136
  %v623 = vunpack.c.l.b16 %v137
  %v624 = vunpack.c.h.b16 %v137
  %v625 = vunpack.c.l.b16 %v138
  %v626 = vunpack.c.h.b16 %v138
  %v627 = vunpack.c.l.b16 %v139
  %v628 = vunpack.c.h.b16 %v139
  %v629 = vunpack.c.l.b16 %v140
  %v630 = vunpack.c.h.b16 %v140
  %v631 = vunpack.c.l.b16 %v141
  %v632 = vunpack.c.h.b16 %v141
  %v633 = vunpack.c.l.b16 %v142
  %v634 = vunpack.c.h.b16 %v142
  %v635 = vunpack.c.l.b16 %v143
  %v636 = vunpack.c.h.b16 %v143
  %v637 = vunpack.c.l.b16 %v144
  %v638 = vunpack.c.h.b16 %v144
  %v639 = vunpack.c.l.b16 %v145
  %v640 = vunpack.c.h.b16 %v145
  %v641 = vunpack.c.l.b16 %v146
  %v642 = vunpack.c.h.b16 %v146
  %v643 = vunpack.c.l.b16 %v147
  %v644 = vunpack.c.h.b16 %v147
  %v645 = vunpack.c.l.b16 %v148
  %v646 = vunpack.c.h.b16 %v148
  %v647 = vunpack.c.l.b16 %v149
  %v648 = vunpack.c.h.b16 %v149
  %v649 = vunpack.c.l.b16 %v150
  %v650 = vunpack.c.h.b16 %v150
  %v651 = vunpack.c.l.b16 %v151
  %v652 = vunpack.c.h.b16 %v151
  %v653 = vunpack.c.l.b16 %v152
  %v654 = vunpack.c.h.b16 %v152
  %v655 = vunpack.c.l.b16 %v153
  %v656 = vunpack.c.h.b16 %v153
  %v657 = vunpack.c.l.b16 %v154
  %v658 = vunpack.c.h.b16 %v154
  %v659 = vunpack.c.l.b16 %v155
  %v660 = vunpack.c.h.b16 %v155
  %v661 = vunpack.c.l.b16 %v156
  %v662 = vunpack.c.h.b16 %v156
  %v663 = vunpack.c.l.b16 %v157
  %v664 = vunpack.c.h.b16 %v157
  %v665 = vunpack.c.l.b16 %v158
  %v666 = vunpack.c.h.b16 %v158
  %v667 = vpack.c.b16 %v381, %v379
  %v668 = vpack.c.b16 %v382, %v380
  %v669 = vpack.c.b16 %v385, %v383
  %v670 = vpack.c.b16 %v386, %v384
  %v671 = vpack.c.b16 %v389, %v387
  %v672 = vpack.c.b16 %v390, %v388
  %v673 = vpack.c.b16 %v393, %v391
  %v674 = vpack.c.b16 %v394, %v392
  %v675 = vpack.c.b16 %v397, %v395
  %v676 = vpack.c.b16 %v398, %v396
  %v677 = vpack.c.b16 %v401, %v399
  %v678 = vpack.c.b16 %v402, %v400
  %v679 = vpack.c.b16 %v405, %v403
  %v680 = vpack.c.b16 %v406, %v404
  %v681 = vpack.c.b16 %v409, %v407
  %v682 = vpack.c.b16 %v410, %v408
  %v683 = vpack.c.b16 %v413, %v411
  %v684 = vpack.c.b16 %v414, %v412
  %v685 = vpack.c.b16 %v417, %v415
  %v686 = vpack.c.b16 %v418, %v416
  %v687 = vpack.c.b16 %v421, %v419
  %v688 = vpack.c.b16 %v422, %v420
  %v689 = vpack.c.b16 %v425, %v423
  %v690 = vpack.c.b16 %v426, %v424
  %v691 = vpack.c.b16 %v429, %v427
  %v692 = vpack.c.b16 %v430, %v428
  %v693 = vpack.c.b16 %v433, %v431
  %v694 = vpack.c.b16 %v434, %v432
  %v695 = vpack.c.b16 %v437, %v435
  %v696 = vpack.c.b16 %v438, %v436
  %v697 = vpack.c.b16 %v441, %v439
  %v698 = vpack.c.b16 %v442, %v440
  %v699 = vpack.c.b16 %v445, %v443
  %v700 = vpack.c.b16 %v446, %v444
  %v701 = vpack.c.b16 %v449, %v447
  %v702 = vpack.c.b16 %v450, %v448
  %v703 = vpack.c.b16 %v453, %v451
  %v704 = vpack.c.b16 %v454, %v452
  %v705 = vpack.c.b16 %v457, %v455
  %v706 = vpack.c.b16 %v458, %v456
  %v707 = vpack.c.b16 %v461, %v459
  %v708 = vpack.c.b16 %v462, %v460
  %v709 = vpack.c.b16 %v465, %v463
  %v710 = vpack.c.b16 %v466, %v464
  %v711 = vpack.c.b16 %v469, %v467
  %v712 = vpack.c.b16 %v470, %v468
  %v713 = vpack.c.b16 %v473, %v471
  %v714 = vpack.c.b16 %v474, %v472
  %v715 = vpack.c.b16 %v477, %v475
  %v716 = vpack.c.b16 %v478, %v476
  %v717 = vpack.c.b16 %v481, %v479
  %v718 = vpack.c.b16 %v482, %v480
  %v719 = vpack.c.b16 %v485, %v483
  %v720 = vpack.c.b16 %v486, %v484
  %v721 = vpack.c.b16 %v489, %v487
  %v722 = vpack.c.b16 %v490, %v488
  %v723 = vpack.c.b16 %v493, %v491
  %v724 = vpack.c.b16 %v494, %v492
  %v725 = vpack.c.b16 %v497, %v495
  %v726 = vpack.c.b16 %v498, %v496
  %v727 = vpack.c.b16 %v501, %v499
  %v728 = vpack.c.b16 %v502, %v500
  %v729 = vpack.c.b16 %v505, %v503
  %v730 = vpack.c.b16 %v506, %v504
  %v731 = vpack.c.b16 %v509, %v507
  %v732 = vpack.c.b16 %v510, %v508
  %v733 = vpack.c.b16 %v513, %v511
  %v734 = vpack.c.b16 %v514, %v512
  %v735 = vpack.c.b16 %v517, %v515
  %v736 = vpack.c.b16 %v518, %v516
  %v737 = vpack.c.b16 %v521, %v519
  %v738 = vpack.c.b16 %v522, %v520
  %v739 = vpack.c.b16 %v525, %v523
  %v740 = vpack.c.b16 %v526, %v524
  %v741 = vpack.c.b16 %v529, %v527
  %v742 = vpack.c.b16 %v530, %v528
  %v743 = vpack.c.b16 %v533, %v531
  %v744 = vpack.c.b16 %v534, %v532
  %v745 = vpack.c.b16 %v537, %v535
  %v746 = vpack.c.b16 %v538, %v536
  %v747 = vpack.c.b16 %v541, %v539
  %v748 = vpack.c.b16 %v542, %v540
  %v749 = vpack.c.b16 %v545, %v543
  %v750 = vpack.c.b16 %v546, %v544
  %v751 = vpack.c.b16 %v549, %v547
  %v752 = vpack.c.b16 %v550, %v548
  %v753 = vpack.c.b16 %v553, %v551
  %v754 = vpack.c.b16 %v554, %v552
  %v755 = vpack.c.b16 %v557, %v555
  %v756 = vpack.c.b16 %v558, %v556
  %v757 = vpack.c.b16 %v561, %v559
  %v758 = vpack.c.b16 %v562, %v560
  %v759 = vpack.c.b16 %v565, %v563
  %v760 = vpack.c.b16 %v566, %v564
  %v761 = vpack.c.b16 %v569, %v567
  %v762 = vpack.c.b16 %v570, %v568
  %v763 = vpack.c.b16 %v573, %v571
  %v764 = vpack.c.b16 %v574, %v572
  %v765 = vpack.c.b16 %v577, %v575
  %v766 = vpack.c.b16 %v578, %v576
  %v767 = vpack.c.b16 %v581, %v579
  %v768 = vpack.c.b16 %v582, %v580
  %v769 = vpack.c.b16 %v585, %v583
  %v770 = vpack.c.b16 %v586, %v584
  %v771 = vpack.c.b16 %v589, %v587
  %v772 = vpack.c.b16 %v590, %v588
  %v773 = vpack.c.b16 %v593, %v591
  %v774 = vpack.c.b16 %v594, %v592
  %v775 = vpack.c.b16 %v597, %v595
  %v776 = vpack.c.b16 %v598, %v596
  %v777 = vpack.c.b16 %v601, %v599
  %v778 = vpack.c.b16 %v602, %v600
  %v779 = vpack.c.b16 %v605, %v603
  %v780 = vpack.c.b16 %v606, %v604
  %v781 = vpack.c.b16 %v609, %v607
  %v782 = vpack.c.b16 %v610, %v608
  %v783 = vpack.c.b16 %v613, %v611
  %v784 = vpack.c.b16 %v614, %v612
  %v785 = vpack.c.b16 %v617, %v615
  %v786 = vpack.c.b16 %v618, %v616
  %v787 = vpack.c.b16 %v621, %v619
  %v788 = vpack.c.b16 %v622, %v620
  %v789 = vpack.c.b16 %v625, %v623
  %v790 = vpack.c.b16 %v626, %v624
  %v791 = vpack.c.b16 %v629, %v627
  %v792 = vpack.c.b16 %v630, %v628
  %v793 = vpack.c.b16 %v633, %v631
  %v794 = vpack.c.b16 %v634, %v632
  %v795 = vpack.c.b16 %v637, %v635
  %v796 = vpack.c.b16 %v638, %v636
  %v797 = vpack.c.b16 %v641, %v639
  %v798 = vpack.c.b16 %v642, %v640
  %v799 = vpack.c.b16 %v645, %v643
  %v800 = vpack.c.b16 %v646, %v644
  %v801 = vpack.c.b16 %v649, %v647
  %v802 = vpack.c.b16 %v650, %v648
  %v803 = vpack.c.b16 %v653, %v651
  %v804 = vpack.c.b16 %v654, %v652
  %v805 = vpack.c.b16 %v657, %v655
  %v806 = vpack.c.b16 %v658, %v656
  %v807 = vpack.c.b16 %v661, %v659
  %v808 = vpack.c.b16 %v662, %v660
  %v809 = vpack.c.b16 %v665, %v663
  %v810 = vpack.c.b16 %v666, %v664
  %955 = vmatprep.subr.bf16.mxu0 %v668
  %956 = vmatpush1.bf16.msra.mxu0 %v667
  %957 = vmatprep.subr.bf16.mxu0 %v670
  %958 = vmatpush1.bf16.msra.mxu0 %v669
  %959 = vmatprep.subr.bf16.mxu0 %v672
  %960 = vmatpush1.bf16.msra.mxu0 %v671
  %961 = vmatprep.subr.bf16.mxu0 %v674
  %962 = vmatpush1.bf16.msra.mxu0 %v673
  %963 = vmatprep.subr.bf16.mxu0 %v676
  %964 = vmatpush1.bf16.msra.mxu0 %v675
  %965 = vmatprep.subr.bf16.mxu0 %v678
  %966 = vmatpush1.bf16.msra.mxu0 %v677
  %967 = vmatprep.subr.bf16.mxu0 %v680
  %968 = vmatpush1.bf16.msra.mxu0 %v679
  %969 = vmatprep.subr.bf16.mxu0 %v682
  %970 = vmatpush1.bf16.msra.mxu0 %v681
  %971 = vmatprep.subr.bf16.mxu0 %v684
  %972 = vmatpush1.bf16.msra.mxu0 %v683
  %973 = vmatprep.subr.bf16.mxu0 %v686
  %974 = vmatpush1.bf16.msra.mxu0 %v685
  %975 = vmatprep.subr.bf16.mxu0 %v688
  %976 = vmatpush1.bf16.msra.mxu0 %v687
  %977 = vmatprep.subr.bf16.mxu0 %v690
  %978 = vmatpush1.bf16.msra.mxu0 %v689
  %979 = vmatprep.subr.bf16.mxu0 %v692
  %980 = vmatpush1.bf16.msra.mxu0 %v691
  %981 = vmatprep.subr.bf16.mxu0 %v694
  %982 = vmatpush1.bf16.msra.mxu0 %v693
  %983 = vmatprep.subr.bf16.mxu0 %v696
  %984 = vmatpush1.bf16.msra.mxu0 %v695
  %985 = vmatprep.subr.bf16.mxu0 %v698
  %986 = vmatpush1.bf16.msra.mxu0 %v697
  %987 = vmatprep.mubr.bf16.mxu0 %v200
  %988 = vmatmul.mubr.bf16.gmra.mrb[0].mxu0 %v186
  %v989 = vpop.f32.mrb[0].mxu0
  %v990 = vadd.f32 0.0, %v989
  %v991 = vpop.f32.mrb[0].mxu0
  %v992 = vadd.f32 0.0, %v991
  %v993 = vpop.f32.mrb[0].mxu0
  %v994 = vpop.f32.mrb[0].mxu0
  %995 = vdwg.mxu0
  %996 = vmatprep.subr.bf16.mxu0 %v700
  %997 = vmatpush1.bf16.msra.mxu0 %v699
  %998 = vmatprep.subr.bf16.mxu0 %v702
  %999 = vmatpush1.bf16.msra.mxu0 %v701
  %1000 = vmatprep.subr.bf16.mxu0 %v704
  %1001 = vmatpush1.bf16.msra.mxu0 %v703
  %1002 = vmatprep.subr.bf16.mxu0 %v706
  %1003 = vmatpush1.bf16.msra.mxu0 %v705
  %1004 = vmatprep.subr.bf16.mxu0 %v708
  %1005 = vmatpush1.bf16.msra.mxu0 %v707
  %1006 = vmatprep.subr.bf16.mxu0 %v710
  %1007 = vmatpush1.bf16.msra.mxu0 %v709
  %1008 = vmatprep.subr.bf16.mxu0 %v712
  %1009 = vmatpush1.bf16.msra.mxu0 %v711
  %1010 = vmatprep.subr.bf16.mxu0 %v714
  %1011 = vmatpush1.bf16.msra.mxu0 %v713
  %1012 = vmatprep.subr.bf16.mxu0 %v716
  %1013 = vmatpush1.bf16.msra.mxu0 %v715
  %1014 = vmatprep.subr.bf16.mxu0 %v718
  %1015 = vmatpush1.bf16.msra.mxu0 %v717
  %1016 = vmatprep.subr.bf16.mxu0 %v720
  %1017 = vmatpush1.bf16.msra.mxu0 %v719
  %1018 = vmatprep.subr.bf16.mxu0 %v722
  %1019 = vmatpush1.bf16.msra.mxu0 %v721
  %1020 = vmatprep.subr.bf16.mxu0 %v724
  %1021 = vmatpush1.bf16.msra.mxu0 %v723
  %1022 = vmatprep.subr.bf16.mxu0 %v726
  %1023 = vmatpush1.bf16.msra.mxu0 %v725
  %1024 = vmatprep.subr.bf16.mxu0 %v728
  %1025 = vmatpush1.bf16.msra.mxu0 %v727
  %1026 = vmatprep.subr.bf16.mxu0 %v730
  %1027 = vmatpush1.bf16.msra.mxu0 %v729
  %1028 = vmatprep.mubr.bf16.mxu0 %v210
  %1029 = vmatmul.mubr.bf16.gmra.mrb[0].mxu0 %v208
  %v1030 = vpop.f32.mrb[0].mxu0
  %v1031 = vadd.f32 %v990, %v1030
  %v1032 = vpop.f32.mrb[0].mxu0
  %v1033 = vadd.f32 %v992, %v1032
  %v1034 = vpop.f32.mrb[0].mxu0
  %v1035 = vpop.f32.mrb[0].mxu0
  %1036 = vdwg.mxu0
  %1037 = vmatprep.subr.bf16.mxu0 %v732
  %1038 = vmatpush1.bf16.msra.mxu0 %v731
  %1039 = vmatprep.subr.bf16.mxu0 %v734
  %1040 = vmatpush1.bf16.msra.mxu0 %v733
  %1041 = vmatprep.subr.bf16.mxu0 %v736
  %1042 = vmatpush1.bf16.msra.mxu0 %v735
  %1043 = vmatprep.subr.bf16.mxu0 %v738
  %1044 = vmatpush1.bf16.msra.mxu0 %v737
  %1045 = vmatprep.subr.bf16.mxu0 %v740
  %1046 = vmatpush1.bf16.msra.mxu0 %v739
  %1047 = vmatprep.subr.bf16.mxu0 %v742
  %1048 = vmatpush1.bf16.msra.mxu0 %v741
  %1049 = vmatprep.subr.bf16.mxu0 %v744
  %1050 = vmatpush1.bf16.msra.mxu0 %v743
  %1051 = vmatprep.subr.bf16.mxu0 %v746
  %1052 = vmatpush1.bf16.msra.mxu0 %v745
  %1053 = vmatprep.subr.bf16.mxu0 %v748
  %1054 = vmatpush1.bf16.msra.mxu0 %v747
  %1055 = vmatprep.subr.bf16.mxu0 %v750
  %1056 = vmatpush1.bf16.msra.mxu0 %v749
  %1057 = vmatprep.subr.bf16.mxu0 %v752
  %1058 = vmatpush1.bf16.msra.mxu0 %v751
  %1059 = vmatprep.subr.bf16.mxu0 %v754
  %1060 = vmatpush1.bf16.msra.mxu0 %v753
  %1061 = vmatprep.subr.bf16.mxu0 %v756
  %1062 = vmatpush1.bf16.msra.mxu0 %v755
  %1063 = vmatprep.subr.bf16.mxu0 %v758
  %1064 = vmatpush1.bf16.msra.mxu0 %v757
  %1065 = vmatprep.subr.bf16.mxu0 %v760
  %1066 = vmatpush1.bf16.msra.mxu0 %v759
  %1067 = vmatprep.subr.bf16.mxu0 %v762
  %1068 = vmatpush1.bf16.msra.mxu0 %v761
  %1069 = vmatprep.mubr.bf16.mxu0 %v207
  %1070 = vmatmul.mubr.bf16.gmra.mrb[0].mxu0 %v193
  %v1071 = vpop.f32.mrb[0].mxu0
  %v1072 = vadd.f32 %v1031, %v1071
  %v1073 = vpop.f32.mrb[0].mxu0
  %v1074 = vadd.f32 %v1033, %v1073
  %v1075 = vpop.f32.mrb[0].mxu0
  %v1076 = vpop.f32.mrb[0].mxu0
  %1077 = vdwg.mxu0
  %1078 = vmatprep.subr.bf16.mxu0 %v764
  %1079 = vmatpush1.bf16.msra.mxu0 %v763
  %1080 = vmatprep.subr.bf16.mxu0 %v766
  %1081 = vmatpush1.bf16.msra.mxu0 %v765
  %1082 = vmatprep.subr.bf16.mxu0 %v768
  %1083 = vmatpush1.bf16.msra.mxu0 %v767
  %1084 = vmatprep.subr.bf16.mxu0 %v770
  %1085 = vmatpush1.bf16.msra.mxu0 %v769
  %1086 = vmatprep.subr.bf16.mxu0 %v772
  %1087 = vmatpush1.bf16.msra.mxu0 %v771
  %1088 = vmatprep.subr.bf16.mxu0 %v774
  %1089 = vmatpush1.bf16.msra.mxu0 %v773
  %1090 = vmatprep.subr.bf16.mxu0 %v776
  %1091 = vmatpush1.bf16.msra.mxu0 %v775
  %1092 = vmatprep.subr.bf16.mxu0 %v778
  %1093 = vmatpush1.bf16.msra.mxu0 %v777
  %1094 = vmatprep.subr.bf16.mxu0 %v780
  %1095 = vmatpush1.bf16.msra.mxu0 %v779
  %1096 = vmatprep.subr.bf16.mxu0 %v782
  %1097 = vmatpush1.bf16.msra.mxu0 %v781
  %1098 = vmatprep.subr.bf16.mxu0 %v784
  %1099 = vmatpush1.bf16.msra.mxu0 %v783
  %1100 = vmatprep.subr.bf16.mxu0 %v786
  %1101 = vmatpush1.bf16.msra.mxu0 %v785
  %1102 = vmatprep.subr.bf16.mxu0 %v788
  %1103 = vmatpush1.bf16.msra.mxu0 %v787
  %1104 = vmatprep.subr.bf16.mxu0 %v790
  %1105 = vmatpush1.bf16.msra.mxu0 %v789
  %1106 = vmatprep.subr.bf16.mxu0 %v792
  %1107 = vmatpush1.bf16.msra.mxu0 %v791
  %1108 = vmatprep.subr.bf16.mxu0 %v794
  %1109 = vmatpush1.bf16.msra.mxu0 %v793
  %1110 = vmatprep.mubr.bf16.mxu0 %v211
  %1111 = vmatmul.mubr.bf16.gmra.mrb[0].mxu0 %v209
  %v1112 = vpop.f32.mrb[0].mxu0
  %v1113 = vadd.f32 %v1072, %v1112
  %v1114 = vpop.f32.mrb[0].mxu0
  %v1115 = vadd.f32 %v1074, %v1114
  %v1116 = vpop.f32.mrb[0].mxu0
  %v1117 = vpop.f32.mrb[0].mxu0
  %1118 = vdwg.mxu0
  %1119 = vmatprep.subr.bf16.mxu0 %v796
  %1120 = vmatpush1.bf16.msra.mxu0 %v795
  %1121 = vmatprep.subr.bf16.mxu0 %v798
  %1122 = vmatpush1.bf16.msra.mxu0 %v797
  %1123 = vmatprep.subr.bf16.mxu0 %v800
  %1124 = vmatpush1.bf16.msra.mxu0 %v799
  %1125 = vmatprep.subr.bf16.mxu0 %v802
  %1126 = vmatpush1.bf16.msra.mxu0 %v801
  %1127 = vmatprep.subr.bf16.mxu0 %v804
  %1128 = vmatpush1.bf16.msra.mxu0 %v803
  %1129 = vmatprep.subr.bf16.mxu0 %v806
  %1130 = vmatpush1.bf16.msra.mxu0 %v805
  %1131 = vmatprep.subr.bf16.mxu0 %v808
  %1132 = vmatpush1.bf16.msra.mxu0 %v807
  %1133 = vmatprep.subr.bf16.mxu0 %v810
  %1134 = vmatpush1.bf16.msra.mxu0 %v809
  %1135 = vmatprep.subr.bf16.mxu0 0
  %1136 = vmatpush1.bf16.msra.mxu0 0
  %1137 = vmatprep.subr.bf16.mxu0 0
  %1138 = vmatpush1.bf16.msra.mxu0 0
  %1139 = vmatprep.subr.bf16.mxu0 0
  %1140 = vmatpush1.bf16.msra.mxu0 0
  %1141 = vmatprep.subr.bf16.mxu0 0
  %1142 = vmatpush1.bf16.msra.mxu0 0
  %1143 = vmatprep.subr.bf16.mxu0 0
  %1144 = vmatpush1.bf16.msra.mxu0 0
  %1145 = vmatprep.subr.bf16.mxu0 0
  %1146 = vmatpush1.bf16.msra.mxu0 0
  %1147 = vmatprep.subr.bf16.mxu0 0
  %1148 = vmatpush1.bf16.msra.mxu0 0
  %1149 = vmatprep.subr.bf16.mxu0 0
  %1150 = vmatpush1.bf16.msra.mxu0 0
  %1151 = vmatprep.mubr.bf16.mxu0 0
  %1152 = vmatmul.mubr.bf16.gmra.mrb[0].mxu0 %v225
  %v1153 = vpop.f32.mrb[0].mxu0
  %v1154 = vadd.f32 %v1113, %v1153
  %v1155 = vpop.f32.mrb[0].mxu0
  %v1156 = vadd.f32 %v1115, %v1155
  %v1157 = vpop.f32.mrb[0].mxu0
  %v1158 = vpop.f32.mrb[0].mxu0
  %1159 = vdwg.mxu0
  %s1160 = scalar_lea.vmem %s0, 9
  %v1161 = vld [vmem:[%s1160] sm:$0xff]
  %v1162 = vld [vmem:[%s1160 + $0x8] sm:$0x1]
  %v1165 = vcombine.high %v1161, %v1161
  %v1167 = vunpack.c.l.s4 1966171168
  %v1168 = vunpack.c.0.s8 %v1167
  %v1169 = vlaneseq
  %v1170 = vshrl.u32 %v1169, 7
  %v1171 = vsub.s32 %v1168, %v1170
  %v1172 = vrot.slane %v1161, %v1171
  %v1174 = vunpack.c.l.s4 1966171168
  %v1175 = vunpack.c.0.s8 %v1174
  %v1176 = vlaneseq
  %v1177 = vshrl.u32 %v1176, 7
  %v1178 = vsub.s32 %v1175, %v1177
  %v1179 = vrot.slane %v1165, %v1178
  %v1180 = vcombine.high %v1172, %v1172
  %v1181 = vcombine.high %v1179, %v1179
  %v1183 = vunpack.c.l.s4 1966171168
  %v1184 = vunpack.c.0.s8 %v1183
  %v1185 = vlaneseq
  %v1186 = vshrl.u32 %v1185, 7
  %v1187 = vsub.s32 %v1184, %v1186
  %v1188 = vrot.slane %v1172, %v1187
  %v1190 = vunpack.c.l.s4 1966171168
  %v1191 = vunpack.c.0.s8 %v1190
  %v1192 = vlaneseq
  %v1193 = vshrl.u32 %v1192, 7
  %v1194 = vsub.s32 %v1191, %v1193
  %v1195 = vrot.slane %v1179, %v1194
  %v1197 = vunpack.c.l.s4 1966171168
  %v1198 = vunpack.c.0.s8 %v1197
  %v1199 = vlaneseq
  %v1200 = vshrl.u32 %v1199, 7
  %v1201 = vsub.s32 %v1198, %v1200
  %v1202 = vrot.slane %v1180, %v1201
  %v1204 = vunpack.c.l.s4 1966171168
  %v1205 = vunpack.c.0.s8 %v1204
  %v1206 = vlaneseq
  %v1207 = vshrl.u32 %v1206, 7
  %v1208 = vsub.s32 %v1205, %v1207
  %v1209 = vrot.slane %v1181, %v1208
  %v1210 = vcombine.high %v1188, %v1188
  %v1211 = vcombine.high %v1195, %v1195
  %v1212 = vcombine.high %v1202, %v1202
  %v1213 = vcombine.high %v1209, %v1209
  %v1215 = vunpack.c.l.s4 1966171168
  %v1216 = vunpack.c.0.s8 %v1215
  %v1217 = vlaneseq
  %v1218 = vshrl.u32 %v1217, 7
  %v1219 = vsub.s32 %v1216, %v1218
  %v1220 = vrot.slane %v1162, %v1219
  %v1222 = vunpack.c.l.s4 1966171168
  %v1223 = vunpack.c.0.s8 %v1222
  %v1224 = vlaneseq
  %v1225 = vshrl.u32 %v1224, 7
  %v1226 = vsub.s32 %v1223, %v1225
  %v1227 = vrot.slane %v1220, %v1226
  %1237 = vmatprep.subr.bf16.mxu0 %v668
  %1238 = vmatpush1.bf16.msra.mxu0 %v667
  %1239 = vmatprep.subr.bf16.mxu0 %v670
  %1240 = vmatpush1.bf16.msra.mxu0 %v669
  %1241 = vmatprep.subr.bf16.mxu0 %v672
  %1242 = vmatpush1.bf16.msra.mxu0 %v671
  %1243 = vmatprep.subr.bf16.mxu0 %v674
  %1244 = vmatpush1.bf16.msra.mxu0 %v673
  %1245 = vmatprep.subr.bf16.mxu0 %v676
  %1246 = vmatpush1.bf16.msra.mxu0 %v675
  %1247 = vmatprep.subr.bf16.mxu0 %v678
  %1248 = vmatpush1.bf16.msra.mxu0 %v677
  %1249 = vmatprep.subr.bf16.mxu0 %v680
  %1250 = vmatpush1.bf16.msra.mxu0 %v679
  %1251 = vmatprep.subr.bf16.mxu0 %v682
  %1252 = vmatpush1.bf16.msra.mxu0 %v681
  %1253 = vmatprep.subr.bf16.mxu0 %v684
  %1254 = vmatpush1.bf16.msra.mxu0 %v683
  %1255 = vmatprep.subr.bf16.mxu0 %v686
  %1256 = vmatpush1.bf16.msra.mxu0 %v685
  %1257 = vmatprep.subr.bf16.mxu0 %v688
  %1258 = vmatpush1.bf16.msra.mxu0 %v687
  %1259 = vmatprep.subr.bf16.mxu0 %v690
  %1260 = vmatpush1.bf16.msra.mxu0 %v689
  %1261 = vmatprep.subr.bf16.mxu0 %v692
  %1262 = vmatpush1.bf16.msra.mxu0 %v691
  %1263 = vmatprep.subr.bf16.mxu0 %v694
  %1264 = vmatpush1.bf16.msra.mxu0 %v693
  %1265 = vmatprep.subr.bf16.mxu0 %v696
  %1266 = vmatpush1.bf16.msra.mxu0 %v695
  %1267 = vmatprep.subr.bf16.mxu0 %v698
  %1268 = vmatpush1.bf16.msra.mxu0 %v697
  %1269 = vmatprep.mubr.bf16.mxu0 %v1202
  %1270 = vmatmul.mubr.bf16.gmra.mrb[0].mxu0 %v1188
  %v1271 = vpop.f32.mrb[0].mxu0
  %v1272 = vadd.f32 0.0, %v1271
  %v1273 = vpop.f32.mrb[0].mxu0
  %v1274 = vadd.f32 0.0, %v1273
  %v1275 = vpop.f32.mrb[0].mxu0
  %v1276 = vpop.f32.mrb[0].mxu0
  %1277 = vdwg.mxu0
  %1278 = vmatprep.subr.bf16.mxu0 %v700
  %1279 = vmatpush1.bf16.msra.mxu0 %v699
  %1280 = vmatprep.subr.bf16.mxu0 %v702
  %1281 = vmatpush1.bf16.msra.mxu0 %v701
  %1282 = vmatprep.subr.bf16.mxu0 %v704
  %1283 = vmatpush1.bf16.msra.mxu0 %v703
  %1284 = vmatprep.subr.bf16.mxu0 %v706
  %1285 = vmatpush1.bf16.msra.mxu0 %v705
  %1286 = vmatprep.subr.bf16.mxu0 %v708
  %1287 = vmatpush1.bf16.msra.mxu0 %v707
  %1288 = vmatprep.subr.bf16.mxu0 %v710
  %1289 = vmatpush1.bf16.msra.mxu0 %v709
  %1290 = vmatprep.subr.bf16.mxu0 %v712
  %1291 = vmatpush1.bf16.msra.mxu0 %v711
  %1292 = vmatprep.subr.bf16.mxu0 %v714
  %1293 = vmatpush1.bf16.msra.mxu0 %v713
  %1294 = vmatprep.subr.bf16.mxu0 %v716
  %1295 = vmatpush1.bf16.msra.mxu0 %v715
  %1296 = vmatprep.subr.bf16.mxu0 %v718
  %1297 = vmatpush1.bf16.msra.mxu0 %v717
  %1298 = vmatprep.subr.bf16.mxu0 %v720
  %1299 = vmatpush1.bf16.msra.mxu0 %v719
  %1300 = vmatprep.subr.bf16.mxu0 %v722
  %1301 = vmatpush1.bf16.msra.mxu0 %v721
  %1302 = vmatprep.subr.bf16.mxu0 %v724
  %1303 = vmatpush1.bf16.msra.mxu0 %v723
  %1304 = vmatprep.subr.bf16.mxu0 %v726
  %1305 = vmatpush1.bf16.msra.mxu0 %v725
  %1306 = vmatprep.subr.bf16.mxu0 %v728
  %1307 = vmatpush1.bf16.msra.mxu0 %v727
  %1308 = vmatprep.subr.bf16.mxu0 %v730
  %1309 = vmatpush1.bf16.msra.mxu0 %v729
  %1310 = vmatprep.mubr.bf16.mxu0 %v1212
  %1311 = vmatmul.mubr.bf16.gmra.mrb[0].mxu0 %v1210
  %v1312 = vpop.f32.mrb[0].mxu0
  %v1313 = vadd.f32 %v1272, %v1312
  %v1314 = vpop.f32.mrb[0].mxu0
  %v1315 = vadd.f32 %v1274, %v1314
  %v1316 = vpop.f32.mrb[0].mxu0
  %v1317 = vpop.f32.mrb[0].mxu0
  %1318 = vdwg.mxu0
  %1319 = vmatprep.subr.bf16.mxu0 %v732
  %1320 = vmatpush1.bf16.msra.mxu0 %v731
  %1321 = vmatprep.subr.bf16.mxu0 %v734
  %1322 = vmatpush1.bf16.msra.mxu0 %v733
  %1323 = vmatprep.subr.bf16.mxu0 %v736
  %1324 = vmatpush1.bf16.msra.mxu0 %v735
  %1325 = vmatprep.subr.bf16.mxu0 %v738
  %1326 = vmatpush1.bf16.msra.mxu0 %v737
  %1327 = vmatprep.subr.bf16.mxu0 %v740
  %1328 = vmatpush1.bf16.msra.mxu0 %v739
  %1329 = vmatprep.subr.bf16.mxu0 %v742
  %1330 = vmatpush1.bf16.msra.mxu0 %v741
  %1331 = vmatprep.subr.bf16.mxu0 %v744
  %1332 = vmatpush1.bf16.msra.mxu0 %v743
  %1333 = vmatprep.subr.bf16.mxu0 %v746
  %1334 = vmatpush1.bf16.msra.mxu0 %v745
  %1335 = vmatprep.subr.bf16.mxu0 %v748
  %1336 = vmatpush1.bf16.msra.mxu0 %v747
  %1337 = vmatprep.subr.bf16.mxu0 %v750
  %1338 = vmatpush1.bf16.msra.mxu0 %v749
  %1339 = vmatprep.subr.bf16.mxu0 %v752
  %1340 = vmatpush1.bf16.msra.mxu0 %v751
  %1341 = vmatprep.subr.bf16.mxu0 %v754
  %1342 = vmatpush1.bf16.msra.mxu0 %v753
  %1343 = vmatprep.subr.bf16.mxu0 %v756
  %1344 = vmatpush1.bf16.msra.mxu0 %v755
  %1345 = vmatprep.subr.bf16.mxu0 %v758
  %1346 = vmatpush1.bf16.msra.mxu0 %v757
  %1347 = vmatprep.subr.bf16.mxu0 %v760
  %1348 = vmatpush1.bf16.msra.mxu0 %v759
  %1349 = vmatprep.subr.bf16.mxu0 %v762
  %1350 = vmatpush1.bf16.msra.mxu0 %v761
  %1351 = vmatprep.mubr.bf16.mxu0 %v1209
  %1352 = vmatmul.mubr.bf16.gmra.mrb[0].mxu0 %v1195
  %v1353 = vpop.f32.mrb[0].mxu0
  %v1354 = vadd.f32 %v1313, %v1353
  %v1355 = vpop.f32.mrb[0].mxu0
  %v1356 = vadd.f32 %v1315, %v1355
  %v1357 = vpop.f32.mrb[0].mxu0
  %v1358 = vpop.f32.mrb[0].mxu0
  %1359 = vdwg.mxu0
  %1360 = vmatprep.subr.bf16.mxu0 %v764
  %1361 = vmatpush1.bf16.msra.mxu0 %v763
  %1362 = vmatprep.subr.bf16.mxu0 %v766
  %1363 = vmatpush1.bf16.msra.mxu0 %v765
  %1364 = vmatprep.subr.bf16.mxu0 %v768
  %1365 = vmatpush1.bf16.msra.mxu0 %v767
  %1366 = vmatprep.subr.bf16.mxu0 %v770
  %1367 = vmatpush1.bf16.msra.mxu0 %v769
  %1368 = vmatprep.subr.bf16.mxu0 %v772
  %1369 = vmatpush1.bf16.msra.mxu0 %v771
  %1370 = vmatprep.subr.bf16.mxu0 %v774
  %1371 = vmatpush1.bf16.msra.mxu0 %v773
  %1372 = vmatprep.subr.bf16.mxu0 %v776
  %1373 = vmatpush1.bf16.msra.mxu0 %v775
  %1374 = vmatprep.subr.bf16.mxu0 %v778
  %1375 = vmatpush1.bf16.msra.mxu0 %v777
  %1376 = vmatprep.subr.bf16.mxu0 %v780
  %1377 = vmatpush1.bf16.msra.mxu0 %v779
  %1378 = vmatprep.subr.bf16.mxu0 %v782
  %1379 = vmatpush1.bf16.msra.mxu0 %v781
  %1380 = vmatprep.subr.bf16.mxu0 %v784
  %1381 = vmatpush1.bf16.msra.mxu0 %v783
  %1382 = vmatprep.subr.bf16.mxu0 %v786
  %1383 = vmatpush1.bf16.msra.mxu0 %v785
  %1384 = vmatprep.subr.bf16.mxu0 %v788
  %1385 = vmatpush1.bf16.msra.mxu0 %v787
  %1386 = vmatprep.subr.bf16.mxu0 %v790
  %1387 = vmatpush1.bf16.msra.mxu0 %v789
  %1388 = vmatprep.subr.bf16.mxu0 %v792
  %1389 = vmatpush1.bf16.msra.mxu0 %v791
  %1390 = vmatprep.subr.bf16.mxu0 %v794
  %1391 = vmatpush1.bf16.msra.mxu0 %v793
  %1392 = vmatprep.mubr.bf16.mxu0 %v1213
  %1393 = vmatmul.mubr.bf16.gmra.mrb[0].mxu0 %v1211
  %v1394 = vpop.f32.mrb[0].mxu0
  %v1395 = vadd.f32 %v1354, %v1394
  %v1396 = vpop.f32.mrb[0].mxu0
  %v1397 = vadd.f32 %v1356, %v1396
  %v1398 = vpop.f32.mrb[0].mxu0
  %v1399 = vpop.f32.mrb[0].mxu0
  %1400 = vdwg.mxu0
  %1401 = vmatprep.subr.bf16.mxu0 %v796
  %1402 = vmatpush1.bf16.msra.mxu0 %v795
  %1403 = vmatprep.subr.bf16.mxu0 %v798
  %1404 = vmatpush1.bf16.msra.mxu0 %v797
  %1405 = vmatprep.subr.bf16.mxu0 %v800
  %1406 = vmatpush1.bf16.msra.mxu0 %v799
  %1407 = vmatprep.subr.bf16.mxu0 %v802
  %1408 = vmatpush1.bf16.msra.mxu0 %v801
  %1409 = vmatprep.subr.bf16.mxu0 %v804
  %1410 = vmatpush1.bf16.msra.mxu0 %v803
  %1411 = vmatprep.subr.bf16.mxu0 %v806
  %1412 = vmatpush1.bf16.msra.mxu0 %v805
  %1413 = vmatprep.subr.bf16.mxu0 %v808
  %1414 = vmatpush1.bf16.msra.mxu0 %v807
  %1415 = vmatprep.subr.bf16.mxu0 %v810
  %1416 = vmatpush1.bf16.msra.mxu0 %v809
  %1417 = vmatprep.subr.bf16.mxu0 0
  %1418 = vmatpush1.bf16.msra.mxu0 0
  %1419 = vmatprep.subr.bf16.mxu0 0
  %1420 = vmatpush1.bf16.msra.mxu0 0
  %1421 = vmatprep.subr.bf16.mxu0 0
  %1422 = vmatpush1.bf16.msra.mxu0 0
  %1423 = vmatprep.subr.bf16.mxu0 0
  %1424 = vmatpush1.bf16.msra.mxu0 0
  %1425 = vmatprep.subr.bf16.mxu0 0
  %1426 = vmatpush1.bf16.msra.mxu0 0
  %1427 = vmatprep.subr.bf16.mxu0 0
  %1428 = vmatpush1.bf16.msra.mxu0 0
  %1429 = vmatprep.subr.bf16.mxu0 0
  %1430 = vmatpush1.bf16.msra.mxu0 0
  %1431 = vmatprep.subr.bf16.mxu0 0
  %1432 = vmatpush1.bf16.msra.mxu0 0
  %1433 = vmatprep.mubr.bf16.mxu0 0
  %1434 = vmatmul.mubr.bf16.gmra.mrb[0].mxu0 %v1227
  %v1435 = vpop.f32.mrb[0].mxu0
  %v1436 = vadd.f32 %v1395, %v1435
  %v1437 = vpop.f32.mrb[0].mxu0
  %v1438 = vadd.f32 %v1397, %v1437
  %v1439 = vpop.f32.mrb[0].mxu0
  %v1440 = vpop.f32.mrb[0].mxu0
  %1441 = vdwg.mxu0
  %v1442 = vmax.f32 %v1154, %v1436
  %v1443 = vmax.f32 %v1156, %v1438
  %s1444 = scalar_lea.vmem %s0, 18
  %v1445 = vld [vmem:[%s1444] sm:$0xff]
  %v1446 = vld [vmem:[%s1444 + $0x8] sm:$0x1]
  %v1449 = vcombine.high %v1445, %v1445
  %v1451 = vunpack.c.l.s4 1966171168
  %v1452 = vunpack.c.0.s8 %v1451
  %v1453 = vlaneseq
  %v1454 = vshrl.u32 %v1453, 7
  %v1455 = vsub.s32 %v1452, %v1454
  %v1456 = vrot.slane %v1445, %v1455
  %v1458 = vunpack.c.l.s4 1966171168
  %v1459 = vunpack.c.0.s8 %v1458
  %v1460 = vlaneseq
  %v1461 = vshrl.u32 %v1460, 7
  %v1462 = vsub.s32 %v1459, %v1461
  %v1463 = vrot.slane %v1449, %v1462
  %v1464 = vcombine.high %v1456, %v1456
  %v1465 = vcombine.high %v1463, %v1463
  %v1467 = vunpack.c.l.s4 1966171168
  %v1468 = vunpack.c.0.s8 %v1467
  %v1469 = vlaneseq
  %v1470 = vshrl.u32 %v1469, 7
  %v1471 = vsub.s32 %v1468, %v1470
  %v1472 = vrot.slane %v1456, %v1471
  %v1474 = vunpack.c.l.s4 1966171168
  %v1475 = vunpack.c.0.s8 %v1474
  %v1476 = vlaneseq
  %v1477 = vshrl.u32 %v1476, 7
  %v1478 = vsub.s32 %v1475, %v1477
  %v1479 = vrot.slane %v1463, %v1478
  %v1481 = vunpack.c.l.s4 1966171168
  %v1482 = vunpack.c.0.s8 %v1481
  %v1483 = vlaneseq
  %v1484 = vshrl.u32 %v1483, 7
  %v1485 = vsub.s32 %v1482, %v1484
  %v1486 = vrot.slane %v1464, %v1485
  %v1488 = vunpack.c.l.s4 1966171168
  %v1489 = vunpack.c.0.s8 %v1488
  %v1490 = vlaneseq
  %v1491 = vshrl.u32 %v1490, 7
  %v1492 = vsub.s32 %v1489, %v1491
  %v1493 = vrot.slane %v1465, %v1492
  %v1494 = vcombine.high %v1472, %v1472
  %v1495 = vcombine.high %v1479, %v1479
  %v1496 = vcombine.high %v1486, %v1486
  %v1497 = vcombine.high %v1493, %v1493
  %v1499 = vunpack.c.l.s4 1966171168
  %v1500 = vunpack.c.0.s8 %v1499
  %v1501 = vlaneseq
  %v1502 = vshrl.u32 %v1501, 7
  %v1503 = vsub.s32 %v1500, %v1502
  %v1504 = vrot.slane %v1446, %v1503
  %v1506 = vunpack.c.l.s4 1966171168
  %v1507 = vunpack.c.0.s8 %v1506
  %v1508 = vlaneseq
  %v1509 = vshrl.u32 %v1508, 7
  %v1510 = vsub.s32 %v1507, %v1509
  %v1511 = vrot.slane %v1504, %v1510
  %1521 = vmatprep.subr.bf16.mxu0 %v668
  %1522 = vmatpush1.bf16.msra.mxu0 %v667
  %1523 = vmatprep.subr.bf16.mxu0 %v670
  %1524 = vmatpush1.bf16.msra.mxu0 %v669
  %1525 = vmatprep.subr.bf16.mxu0 %v672
  %1526 = vmatpush1.bf16.msra.mxu0 %v671
  %1527 = vmatprep.subr.bf16.mxu0 %v674
  %1528 = vmatpush1.bf16.msra.mxu0 %v673
  %1529 = vmatprep.subr.bf16.mxu0 %v676
  %1530 = vmatpush1.bf16.msra.mxu0 %v675
  %1531 = vmatprep.subr.bf16.mxu0 %v678
  %1532 = vmatpush1.bf16.msra.mxu0 %v677
  %1533 = vmatprep.subr.bf16.mxu0 %v680
  %1534 = vmatpush1.bf16.msra.mxu0 %v679
  %1535 = vmatprep.subr.bf16.mxu0 %v682
  %1536 = vmatpush1.bf16.msra.mxu0 %v681
  %1537 = vmatprep.subr.bf16.mxu0 %v684
  %1538 = vmatpush1.bf16.msra.mxu0 %v683
  %1539 = vmatprep.subr.bf16.mxu0 %v686
  %1540 = vmatpush1.bf16.msra.mxu0 %v685
  %1541 = vmatprep.subr.bf16.mxu0 %v688
  %1542 = vmatpush1.bf16.msra.mxu0 %v687
  %1543 = vmatprep.subr.bf16.mxu0 %v690
  %1544 = vmatpush1.bf16.msra.mxu0 %v689
  %1545 = vmatprep.subr.bf16.mxu0 %v692
  %1546 = vmatpush1.bf16.msra.mxu0 %v691
  %1547 = vmatprep.subr.bf16.mxu0 %v694
  %1548 = vmatpush1.bf16.msra.mxu0 %v693
  %1549 = vmatprep.subr.bf16.mxu0 %v696
  %1550 = vmatpush1.bf16.msra.mxu0 %v695
  %1551 = vmatprep.subr.bf16.mxu0 %v698
  %1552 = vmatpush1.bf16.msra.mxu0 %v697
  %1553 = vmatprep.mubr.bf16.mxu0 %v1486
  %1554 = vmatmul.mubr.bf16.gmra.mrb[0].mxu0 %v1472
  %v1555 = vpop.f32.mrb[0].mxu0
  %v1556 = vadd.f32 0.0, %v1555
  %v1557 = vpop.f32.mrb[0].mxu0
  %v1558 = vadd.f32 0.0, %v1557
  %v1559 = vpop.f32.mrb[0].mxu0
  %v1560 = vpop.f32.mrb[0].mxu0
  %1561 = vdwg.mxu0
  %1562 = vmatprep.subr.bf16.mxu0 %v700
  %1563 = vmatpush1.bf16.msra.mxu0 %v699
  %1564 = vmatprep.subr.bf16.mxu0 %v702
  %1565 = vmatpush1.bf16.msra.mxu0 %v701
  %1566 = vmatprep.subr.bf16.mxu0 %v704
  %1567 = vmatpush1.bf16.msra.mxu0 %v703
  %1568 = vmatprep.subr.bf16.mxu0 %v706
  %1569 = vmatpush1.bf16.msra.mxu0 %v705
  %1570 = vmatprep.subr.bf16.mxu0 %v708
  %1571 = vmatpush1.bf16.msra.mxu0 %v707
  %1572 = vmatprep.subr.bf16.mxu0 %v710
  %1573 = vmatpush1.bf16.msra.mxu0 %v709
  %1574 = vmatprep.subr.bf16.mxu0 %v712
  %1575 = vmatpush1.bf16.msra.mxu0 %v711
  %1576 = vmatprep.subr.bf16.mxu0 %v714
  %1577 = vmatpush1.bf16.msra.mxu0 %v713
  %1578 = vmatprep.subr.bf16.mxu0 %v716
  %1579 = vmatpush1.bf16.msra.mxu0 %v715
  %1580 = vmatprep.subr.bf16.mxu0 %v718
  %1581 = vmatpush1.bf16.msra.mxu0 %v717
  %1582 = vmatprep.subr.bf16.mxu0 %v720
  %1583 = vmatpush1.bf16.msra.mxu0 %v719
  %1584 = vmatprep.subr.bf16.mxu0 %v722
  %1585 = vmatpush1.bf16.msra.mxu0 %v721
  %1586 = vmatprep.subr.bf16.mxu0 %v724
  %1587 = vmatpush1.bf16.msra.mxu0 %v723
  %1588 = vmatprep.subr.bf16.mxu0 %v726
  %1589 = vmatpush1.bf16.msra.mxu0 %v725
  %1590 = vmatprep.subr.bf16.mxu0 %v728
  %1591 = vmatpush1.bf16.msra.mxu0 %v727
  %1592 = vmatprep.subr.bf16.mxu0 %v730
  %1593 = vmatpush1.bf16.msra.mxu0 %v729
  %1594 = vmatprep.mubr.bf16.mxu0 %v1496
  %1595 = vmatmul.mubr.bf16.gmra.mrb[0].mxu0 %v1494
  %v1596 = vpop.f32.mrb[0].mxu0
  %v1597 = vadd.f32 %v1556, %v1596
  %v1598 = vpop.f32.mrb[0].mxu0
  %v1599 = vadd.f32 %v1558, %v1598
  %v1600 = vpop.f32.mrb[0].mxu0
  %v1601 = vpop.f32.mrb[0].mxu0
  %1602 = vdwg.mxu0
  %1603 = vmatprep.subr.bf16.mxu0 %v732
  %1604 = vmatpush1.bf16.msra.mxu0 %v731
  %1605 = vmatprep.subr.bf16.mxu0 %v734
  %1606 = vmatpush1.bf16.msra.mxu0 %v733
  %1607 = vmatprep.subr.bf16.mxu0 %v736
  %1608 = vmatpush1.bf16.msra.mxu0 %v735
  %1609 = vmatprep.subr.bf16.mxu0 %v738
  %1610 = vmatpush1.bf16.msra.mxu0 %v737
  %1611 = vmatprep.subr.bf16.mxu0 %v740
  %1612 = vmatpush1.bf16.msra.mxu0 %v739
  %1613 = vmatprep.subr.bf16.mxu0 %v742
  %1614 = vmatpush1.bf16.msra.mxu0 %v741
  %1615 = vmatprep.subr.bf16.mxu0 %v744
  %1616 = vmatpush1.bf16.msra.mxu0 %v743
  %1617 = vmatprep.subr.bf16.mxu0 %v746
  %1618 = vmatpush1.bf16.msra.mxu0 %v745
  %1619 = vmatprep.subr.bf16.mxu0 %v748
  %1620 = vmatpush1.bf16.msra.mxu0 %v747
  %1621 = vmatprep.subr.bf16.mxu0 %v750
  %1622 = vmatpush1.bf16.msra.mxu0 %v749
  %1623 = vmatprep.subr.bf16.mxu0 %v752
  %1624 = vmatpush1.bf16.msra.mxu0 %v751
  %1625 = vmatprep.subr.bf16.mxu0 %v754
  %1626 = vmatpush1.bf16.msra.mxu0 %v753
  %1627 = vmatprep.subr.bf16.mxu0 %v756
  %1628 = vmatpush1.bf16.msra.mxu0 %v755
  %1629 = vmatprep.subr.bf16.mxu0 %v758
  %1630 = vmatpush1.bf16.msra.mxu0 %v757
  %1631 = vmatprep.subr.bf16.mxu0 %v760
  %1632 = vmatpush1.bf16.msra.mxu0 %v759
  %1633 = vmatprep.subr.bf16.mxu0 %v762
  %1634 = vmatpush1.bf16.msra.mxu0 %v761
  %1635 = vmatprep.mubr.bf16.mxu0 %v1493
  %1636 = vmatmul.mubr.bf16.gmra.mrb[0].mxu0 %v1479
  %v1637 = vpop.f32.mrb[0].mxu0
  %v1638 = vadd.f32 %v1597, %v1637
  %v1639 = vpop.f32.mrb[0].mxu0
  %v1640 = vadd.f32 %v1599, %v1639
  %v1641 = vpop.f32.mrb[0].mxu0
  %v1642 = vpop.f32.mrb[0].mxu0
  %1643 = vdwg.mxu0
  %1644 = vmatprep.subr.bf16.mxu0 %v764
  %1645 = vmatpush1.bf16.msra.mxu0 %v763
  %1646 = vmatprep.subr.bf16.mxu0 %v766
  %1647 = vmatpush1.bf16.msra.mxu0 %v765
  %1648 = vmatprep.subr.bf16.mxu0 %v768
  %1649 = vmatpush1.bf16.msra.mxu0 %v767
  %1650 = vmatprep.subr.bf16.mxu0 %v770
  %1651 = vmatpush1.bf16.msra.mxu0 %v769
  %1652 = vmatprep.subr.bf16.mxu0 %v772
  %1653 = vmatpush1.bf16.msra.mxu0 %v771
  %1654 = vmatprep.subr.bf16.mxu0 %v774
  %1655 = vmatpush1.bf16.msra.mxu0 %v773
  %1656 = vmatprep.subr.bf16.mxu0 %v776
  %1657 = vmatpush1.bf16.msra.mxu0 %v775
  %1658 = vmatprep.subr.bf16.mxu0 %v778
  %1659 = vmatpush1.bf16.msra.mxu0 %v777
  %1660 = vmatprep.subr.bf16.mxu0 %v780
  %1661 = vmatpush1.bf16.msra.mxu0 %v779
  %1662 = vmatprep.subr.bf16.mxu0 %v782
  %1663 = vmatpush1.bf16.msra.mxu0 %v781
  %1664 = vmatprep.subr.bf16.mxu0 %v784
  %1665 = vmatpush1.bf16.msra.mxu0 %v783
  %1666 = vmatprep.subr.bf16.mxu0 %v786
  %1667 = vmatpush1.bf16.msra.mxu0 %v785
  %1668 = vmatprep.subr.bf16.mxu0 %v788
  %1669 = vmatpush1.bf16.msra.mxu0 %v787
  %1670 = vmatprep.subr.bf16.mxu0 %v790
  %1671 = vmatpush1.bf16.msra.mxu0 %v789
  %1672 = vmatprep.subr.bf16.mxu0 %v792
  %1673 = vmatpush1.bf16.msra.mxu0 %v791
  %1674 = vmatprep.subr.bf16.mxu0 %v794
  %1675 = vmatpush1.bf16.msra.mxu0 %v793
  %1676 = vmatprep.mubr.bf16.mxu0 %v1497
  %1677 = vmatmul.mubr.bf16.gmra.mrb[0].mxu0 %v1495
  %v1678 = vpop.f32.mrb[0].mxu0
  %v1679 = vadd.f32 %v1638, %v1678
  %v1680 = vpop.f32.mrb[0].mxu0
  %v1681 = vadd.f32 %v1640, %v1680
  %v1682 = vpop.f32.mrb[0].mxu0
  %v1683 = vpop.f32.mrb[0].mxu0
  %1684 = vdwg.mxu0
  %1685 = vmatprep.subr.bf16.mxu0 %v796
  %1686 = vmatpush1.bf16.msra.mxu0 %v795
  %1687 = vmatprep.subr.bf16.mxu0 %v798
  %1688 = vmatpush1.bf16.msra.mxu0 %v797
  %1689 = vmatprep.subr.bf16.mxu0 %v800
  %1690 = vmatpush1.bf16.msra.mxu0 %v799
  %1691 = vmatprep.subr.bf16.mxu0 %v802
  %1692 = vmatpush1.bf16.msra.mxu0 %v801
  %1693 = vmatprep.subr.bf16.mxu0 %v804
  %1694 = vmatpush1.bf16.msra.mxu0 %v803
  %1695 = vmatprep.subr.bf16.mxu0 %v806
  %1696 = vmatpush1.bf16.msra.mxu0 %v805
  %1697 = vmatprep.subr.bf16.mxu0 %v808
  %1698 = vmatpush1.bf16.msra.mxu0 %v807
  %1699 = vmatprep.subr.bf16.mxu0 %v810
  %1700 = vmatpush1.bf16.msra.mxu0 %v809
  %1701 = vmatprep.subr.bf16.mxu0 0
  %1702 = vmatpush1.bf16.msra.mxu0 0
  %1703 = vmatprep.subr.bf16.mxu0 0
  %1704 = vmatpush1.bf16.msra.mxu0 0
  %1705 = vmatprep.subr.bf16.mxu0 0
  %1706 = vmatpush1.bf16.msra.mxu0 0
  %1707 = vmatprep.subr.bf16.mxu0 0
  %1708 = vmatpush1.bf16.msra.mxu0 0
  %1709 = vmatprep.subr.bf16.mxu0 0
  %1710 = vmatpush1.bf16.msra.mxu0 0
  %1711 = vmatprep.subr.bf16.mxu0 0
  %1712 = vmatpush1.bf16.msra.mxu0 0
  %1713 = vmatprep.subr.bf16.mxu0 0
  %1714 = vmatpush1.bf16.msra.mxu0 0
  %1715 = vmatprep.subr.bf16.mxu0 0
  %1716 = vmatpush1.bf16.msra.mxu0 0
  %1717 = vmatprep.mubr.bf16.mxu0 0
  %1718 = vmatmul.mubr.bf16.gmra.mrb[0].mxu0 %v1511
  %v1719 = vpop.f32.mrb[0].mxu0
  %v1720 = vadd.f32 %v1679, %v1719
  %v1721 = vpop.f32.mrb[0].mxu0
  %v1722 = vadd.f32 %v1681, %v1721
  %v1723 = vpop.f32.mrb[0].mxu0
  %v1724 = vpop.f32.mrb[0].mxu0
  %1725 = vdwg.mxu0
  %v1726 = vmax.f32 %v1442, %v1720
  %v1727 = vmax.f32 %v1443, %v1722
  %s1728 = scalar_lea.vmem %s0, 27
  %v1729 = vld [vmem:[%s1728] sm:$0xff]
  %v1730 = vld [vmem:[%s1728 + $0x8] sm:$0x1]
  %v1733 = vcombine.high %v1729, %v1729
  %v1735 = vunpack.c.l.s4 1966171168
  %v1736 = vunpack.c.0.s8 %v1735
  %v1737 = vlaneseq
  %v1738 = vshrl.u32 %v1737, 7
  %v1739 = vsub.s32 %v1736, %v1738
  %v1740 = vrot.slane %v1729, %v1739
  %v1742 = vunpack.c.l.s4 1966171168
  %v1743 = vunpack.c.0.s8 %v1742
  %v1744 = vlaneseq
  %v1745 = vshrl.u32 %v1744, 7
  %v1746 = vsub.s32 %v1743, %v1745
  %v1747 = vrot.slane %v1733, %v1746
  %v1748 = vcombine.high %v1740, %v1740
  %v1749 = vcombine.high %v1747, %v1747
  %v1751 = vunpack.c.l.s4 1966171168
  %v1752 = vunpack.c.0.s8 %v1751
  %v1753 = vlaneseq
  %v1754 = vshrl.u32 %v1753, 7
  %v1755 = vsub.s32 %v1752, %v1754
  %v1756 = vrot.slane %v1740, %v1755
  %v1758 = vunpack.c.l.s4 1966171168
  %v1759 = vunpack.c.0.s8 %v1758
  %v1760 = vlaneseq
  %v1761 = vshrl.u32 %v1760, 7
  %v1762 = vsub.s32 %v1759, %v1761
  %v1763 = vrot.slane %v1747, %v1762
  %v1765 = vunpack.c.l.s4 1966171168
  %v1766 = vunpack.c.0.s8 %v1765
  %v1767 = vlaneseq
  %v1768 = vshrl.u32 %v1767, 7
  %v1769 = vsub.s32 %v1766, %v1768
  %v1770 = vrot.slane %v1748, %v1769
  %v1772 = vunpack.c.l.s4 1966171168
  %v1773 = vunpack.c.0.s8 %v1772
  %v1774 = vlaneseq
  %v1775 = vshrl.u32 %v1774, 7
  %v1776 = vsub.s32 %v1773, %v1775
  %v1777 = vrot.slane %v1749, %v1776
  %v1778 = vcombine.high %v1756, %v1756
  %v1779 = vcombine.high %v1763, %v1763
  %v1780 = vcombine.high %v1770, %v1770
  %v1781 = vcombine.high %v1777, %v1777
  %v1783 = vunpack.c.l.s4 1966171168
  %v1784 = vunpack.c.0.s8 %v1783
  %v1785 = vlaneseq
  %v1786 = vshrl.u32 %v1785, 7
  %v1787 = vsub.s32 %v1784, %v1786
  %v1788 = vrot.slane %v1730, %v1787
  %v1790 = vunpack.c.l.s4 1966171168
  %v1791 = vunpack.c.0.s8 %v1790
  %v1792 = vlaneseq
  %v1793 = vshrl.u32 %v1792, 7
  %v1794 = vsub.s32 %v1791, %v1793
  %v1795 = vrot.slane %v1788, %v1794
  %1805 = vmatprep.subr.bf16.mxu0 %v668
  %1806 = vmatpush1.bf16.msra.mxu0 %v667
  %1807 = vmatprep.subr.bf16.mxu0 %v670
  %1808 = vmatpush1.bf16.msra.mxu0 %v669
  %1809 = vmatprep.subr.bf16.mxu0 %v672
  %1810 = vmatpush1.bf16.msra.mxu0 %v671
  %1811 = vmatprep.subr.bf16.mxu0 %v674
  %1812 = vmatpush1.bf16.msra.mxu0 %v673
  %1813 = vmatprep.subr.bf16.mxu0 %v676
  %1814 = vmatpush1.bf16.msra.mxu0 %v675
  %1815 = vmatprep.subr.bf16.mxu0 %v678
  %1816 = vmatpush1.bf16.msra.mxu0 %v677
  %1817 = vmatprep.subr.bf16.mxu0 %v680
  %1818 = vmatpush1.bf16.msra.mxu0 %v679
  %1819 = vmatprep.subr.bf16.mxu0 %v682
  %1820 = vmatpush1.bf16.msra.mxu0 %v681
  %1821 = vmatprep.subr.bf16.mxu0 %v684
  %1822 = vmatpush1.bf16.msra.mxu0 %v683
  %1823 = vmatprep.subr.bf16.mxu0 %v686
  %1824 = vmatpush1.bf16.msra.mxu0 %v685
  %1825 = vmatprep.subr.bf16.mxu0 %v688
  %1826 = vmatpush1.bf16.msra.mxu0 %v687
  %1827 = vmatprep.subr.bf16.mxu0 %v690
  %1828 = vmatpush1.bf16.msra.mxu0 %v689
  %1829 = vmatprep.subr.bf16.mxu0 %v692
  %1830 = vmatpush1.bf16.msra.mxu0 %v691
  %1831 = vmatprep.subr.bf16.mxu0 %v694
  %1832 = vmatpush1.bf16.msra.mxu0 %v693
  %1833 = vmatprep.subr.bf16.mxu0 %v696
  %1834 = vmatpush1.bf16.msra.mxu0 %v695
  %1835 = vmatprep.subr.bf16.mxu0 %v698
  %1836 = vmatpush1.bf16.msra.mxu0 %v697
  %1837 = vmatprep.mubr.bf16.mxu0 %v1770
  %1838 = vmatmul.mubr.bf16.gmra.mrb[0].mxu0 %v1756
  %v1839 = vpop.f32.mrb[0].mxu0
  %v1840 = vadd.f32 0.0, %v1839
  %v1841 = vpop.f32.mrb[0].mxu0
  %v1842 = vadd.f32 0.0, %v1841
  %v1843 = vpop.f32.mrb[0].mxu0
  %v1844 = vpop.f32.mrb[0].mxu0
  %1845 = vdwg.mxu0
  %1846 = vmatprep.subr.bf16.mxu0 %v700
  %1847 = vmatpush1.bf16.msra.mxu0 %v699
  %1848 = vmatprep.subr.bf16.mxu0 %v702
  %1849 = vmatpush1.bf16.msra.mxu0 %v701
  %1850 = vmatprep.subr.bf16.mxu0 %v704
  %1851 = vmatpush1.bf16.msra.mxu0 %v703
  %1852 = vmatprep.subr.bf16.mxu0 %v706
  %1853 = vmatpush1.bf16.msra.mxu0 %v705
  %1854 = vmatprep.subr.bf16.mxu0 %v708
  %1855 = vmatpush1.bf16.msra.mxu0 %v707
  %1856 = vmatprep.subr.bf16.mxu0 %v710
  %1857 = vmatpush1.bf16.msra.mxu0 %v709
  %1858 = vmatprep.subr.bf16.mxu0 %v712
  %1859 = vmatpush1.bf16.msra.mxu0 %v711
  %1860 = vmatprep.subr.bf16.mxu0 %v714
  %1861 = vmatpush1.bf16.msra.mxu0 %v713
  %1862 = vmatprep.subr.bf16.mxu0 %v716
  %1863 = vmatpush1.bf16.msra.mxu0 %v715
  %1864 = vmatprep.subr.bf16.mxu0 %v718
  %1865 = vmatpush1.bf16.msra.mxu0 %v717
  %1866 = vmatprep.subr.bf16.mxu0 %v720
  %1867 = vmatpush1.bf16.msra.mxu0 %v719
  %1868 = vmatprep.subr.bf16.mxu0 %v722
  %1869 = vmatpush1.bf16.msra.mxu0 %v721
  %1870 = vmatprep.subr.bf16.mxu0 %v724
  %1871 = vmatpush1.bf16.msra.mxu0 %v723
  %1872 = vmatprep.subr.bf16.mxu0 %v726
  %1873 = vmatpush1.bf16.msra.mxu0 %v725
  %1874 = vmatprep.subr.bf16.mxu0 %v728
  %1875 = vmatpush1.bf16.msra.mxu0 %v727
  %1876 = vmatprep.subr.bf16.mxu0 %v730
  %1877 = vmatpush1.bf16.msra.mxu0 %v729
  %1878 = vmatprep.mubr.bf16.mxu0 %v1780
  %1879 = vmatmul.mubr.bf16.gmra.mrb[0].mxu0 %v1778
  %v1880 = vpop.f32.mrb[0].mxu0
  %v1881 = vadd.f32 %v1840, %v1880
  %v1882 = vpop.f32.mrb[0].mxu0
  %v1883 = vadd.f32 %v1842, %v1882
  %v1884 = vpop.f32.mrb[0].mxu0
  %v1885 = vpop.f32.mrb[0].mxu0
  %1886 = vdwg.mxu0
  %1887 = vmatprep.subr.bf16.mxu0 %v732
  %1888 = vmatpush1.bf16.msra.mxu0 %v731
  %1889 = vmatprep.subr.bf16.mxu0 %v734
  %1890 = vmatpush1.bf16.msra.mxu0 %v733
  %1891 = vmatprep.subr.bf16.mxu0 %v736
  %1892 = vmatpush1.bf16.msra.mxu0 %v735
  %1893 = vmatprep.subr.bf16.mxu0 %v738
  %1894 = vmatpush1.bf16.msra.mxu0 %v737
  %1895 = vmatprep.subr.bf16.mxu0 %v740
  %1896 = vmatpush1.bf16.msra.mxu0 %v739
  %1897 = vmatprep.subr.bf16.mxu0 %v742
  %1898 = vmatpush1.bf16.msra.mxu0 %v741
  %1899 = vmatprep.subr.bf16.mxu0 %v744
  %1900 = vmatpush1.bf16.msra.mxu0 %v743
  %1901 = vmatprep.subr.bf16.mxu0 %v746
  %1902 = vmatpush1.bf16.msra.mxu0 %v745
  %1903 = vmatprep.subr.bf16.mxu0 %v748
  %1904 = vmatpush1.bf16.msra.mxu0 %v747
  %1905 = vmatprep.subr.bf16.mxu0 %v750
  %1906 = vmatpush1.bf16.msra.mxu0 %v749
  %1907 = vmatprep.subr.bf16.mxu0 %v752
  %1908 = vmatpush1.bf16.msra.mxu0 %v751
  %1909 = vmatprep.subr.bf16.mxu0 %v754
  %1910 = vmatpush1.bf16.msra.mxu0 %v753
  %1911 = vmatprep.subr.bf16.mxu0 %v756
  %1912 = vmatpush1.bf16.msra.mxu0 %v755
  %1913 = vmatprep.subr.bf16.mxu0 %v758
  %1914 = vmatpush1.bf16.msra.mxu0 %v757
  %1915 = vmatprep.subr.bf16.mxu0 %v760
  %1916 = vmatpush1.bf16.msra.mxu0 %v759
  %1917 = vmatprep.subr.bf16.mxu0 %v762
  %1918 = vmatpush1.bf16.msra.mxu0 %v761
  %1919 = vmatprep.mubr.bf16.mxu0 %v1777
  %1920 = vmatmul.mubr.bf16.gmra.mrb[0].mxu0 %v1763
  %v1921 = vpop.f32.mrb[0].mxu0
  %v1922 = vadd.f32 %v1881, %v1921
  %v1923 = vpop.f32.mrb[0].mxu0
  %v1924 = vadd.f32 %v1883, %v1923
  %v1925 = vpop.f32.mrb[0].mxu0
  %v1926 = vpop.f32.mrb[0].mxu0
  %1927 = vdwg.mxu0
  %1928 = vmatprep.subr.bf16.mxu0 %v764
  %1929 = vmatpush1.bf16.msra.mxu0 %v763
  %1930 = vmatprep.subr.bf16.mxu0 %v766
  %1931 = vmatpush1.bf16.msra.mxu0 %v765
  %1932 = vmatprep.subr.bf16.mxu0 %v768
  %1933 = vmatpush1.bf16.msra.mxu0 %v767
  %1934 = vmatprep.subr.bf16.mxu0 %v770
  %1935 = vmatpush1.bf16.msra.mxu0 %v769
  %1936 = vmatprep.subr.bf16.mxu0 %v772
  %1937 = vmatpush1.bf16.msra.mxu0 %v771
  %1938 = vmatprep.subr.bf16.mxu0 %v774
  %1939 = vmatpush1.bf16.msra.mxu0 %v773
  %1940 = vmatprep.subr.bf16.mxu0 %v776
  %1941 = vmatpush1.bf16.msra.mxu0 %v775
  %1942 = vmatprep.subr.bf16.mxu0 %v778
  %1943 = vmatpush1.bf16.msra.mxu0 %v777
  %1944 = vmatprep.subr.bf16.mxu0 %v780
  %1945 = vmatpush1.bf16.msra.mxu0 %v779
  %1946 = vmatprep.subr.bf16.mxu0 %v782
  %1947 = vmatpush1.bf16.msra.mxu0 %v781
  %1948 = vmatprep.subr.bf16.mxu0 %v784
  %1949 = vmatpush1.bf16.msra.mxu0 %v783
  %1950 = vmatprep.subr.bf16.mxu0 %v786
  %1951 = vmatpush1.bf16.msra.mxu0 %v785
  %1952 = vmatprep.subr.bf16.mxu0 %v788
  %1953 = vmatpush1.bf16.msra.mxu0 %v787
  %1954 = vmatprep.subr.bf16.mxu0 %v790
  %1955 = vmatpush1.bf16.msra.mxu0 %v789
  %1956 = vmatprep.subr.bf16.mxu0 %v792
  %1957 = vmatpush1.bf16.msra.mxu0 %v791
  %1958 = vmatprep.subr.bf16.mxu0 %v794
  %1959 = vmatpush1.bf16.msra.mxu0 %v793
  %1960 = vmatprep.mubr.bf16.mxu0 %v1781
  %1961 = vmatmul.mubr.bf16.gmra.mrb[0].mxu0 %v1779
  %v1962 = vpop.f32.mrb[0].mxu0
  %v1963 = vadd.f32 %v1922, %v1962
  %v1964 = vpop.f32.mrb[0].mxu0
  %v1965 = vadd.f32 %v1924, %v1964
  %v1966 = vpop.f32.mrb[0].mxu0
  %v1967 = vpop.f32.mrb[0].mxu0
  %1968 = vdwg.mxu0
  %1969 = vmatprep.subr.bf16.mxu0 %v796
  %1970 = vmatpush1.bf16.msra.mxu0 %v795
  %1971 = vmatprep.subr.bf16.mxu0 %v798
  %1972 = vmatpush1.bf16.msra.mxu0 %v797
  %1973 = vmatprep.subr.bf16.mxu0 %v800
  %1974 = vmatpush1.bf16.msra.mxu0 %v799
  %1975 = vmatprep.subr.bf16.mxu0 %v802
  %1976 = vmatpush1.bf16.msra.mxu0 %v801
  %1977 = vmatprep.subr.bf16.mxu0 %v804
  %1978 = vmatpush1.bf16.msra.mxu0 %v803
  %1979 = vmatprep.subr.bf16.mxu0 %v806
  %1980 = vmatpush1.bf16.msra.mxu0 %v805
  %1981 = vmatprep.subr.bf16.mxu0 %v808
  %1982 = vmatpush1.bf16.msra.mxu0 %v807
  %1983 = vmatprep.subr.bf16.mxu0 %v810
  %1984 = vmatpush1.bf16.msra.mxu0 %v809
  %1985 = vmatprep.subr.bf16.mxu0 0
  %1986 = vmatpush1.bf16.msra.mxu0 0
  %1987 = vmatprep.subr.bf16.mxu0 0
  %1988 = vmatpush1.bf16.msra.mxu0 0
  %1989 = vmatprep.subr.bf16.mxu0 0
  %1990 = vmatpush1.bf16.msra.mxu0 0
  %1991 = vmatprep.subr.bf16.mxu0 0
  %1992 = vmatpush1.bf16.msra.mxu0 0
  %1993 = vmatprep.subr.bf16.mxu0 0
  %1994 = vmatpush1.bf16.msra.mxu0 0
  %1995 = vmatprep.subr.bf16.mxu0 0
  %1996 = vmatpush1.bf16.msra.mxu0 0
  %1997 = vmatprep.subr.bf16.mxu0 0
  %1998 = vmatpush1.bf16.msra.mxu0 0
  %1999 = vmatprep.subr.bf16.mxu0 0
  %2000 = vmatpush1.bf16.msra.mxu0 0
  %2001 = vmatprep.mubr.bf16.mxu0 0
  %2002 = vmatmul.mubr.bf16.gmra.mrb[0].mxu0 %v1795
  %v2003 = vpop.f32.mrb[0].mxu0
  %v2004 = vadd.f32 %v1963, %v2003
  %v2005 = vpop.f32.mrb[0].mxu0
  %v2006 = vadd.f32 %v1965, %v2005
  %v2007 = vpop.f32.mrb[0].mxu0
  %v2008 = vpop.f32.mrb[0].mxu0
  %2009 = vdwg.mxu0
  %v2010 = vmax.f32 %v1726, %v2004
  %v2011 = vmax.f32 %v1727, %v2006
  %v2012 = vld [vmem:[%s2] sm:$0x3]
  %v2014 = vlaneseq
  %v2015 = vshrl.u32 %v2014, 7
  %v2016 = vsub.s32 0, %v2015
  %v2017 = vrot.slane %v2012, %v2016
  %v2018 = vlaneseq
  %v2019 = vshrl.u32 %v2018, 7
  %v2020 = vsub.s32 1, %v2019
  %v2021 = vrot.slane %v2012, %v2020
  %v2024 = vadd.f32 %v2010, %v2017
  %v2025 = vadd.f32 %v2011, %v2021
  %v2026 = vmax.f32 %v2024, 0.0
  %v2027 = vmax.f32 %v2025, 0.0
  %v2028 = vpack.c.bf16 %v2026, %v2026
  %v2029 = vpack.c.bf16 %v2027, %v2027
  %v2032 = vcombine.low %v2028, %v2029
  %v2034 = vunpack.c.l.s4 1966171168
  %v2035 = vunpack.c.0.s8 %v2034
  %v2036 = vlaneseq
  %v2037 = vshrl.u32 %v2036, 7
  %v2038 = vsub.s32 %v2035, %v2037
  %v2039 = vrot.slane %v2032, %v2038
  %v2041 = vunpack.c.l.s4 1966171168
  %v2042 = vunpack.c.0.s8 %v2041
  %v2043 = vlaneseq
  %v2044 = vshrl.u32 %v2043, 7
  %v2045 = vsub.s32 %v2042, %v2044
  %v2046 = vrot.slane %v2039, %v2045
  %2048 = vst [vmem:[%s3] sm:$0x3] %v2046
  // Predicated region
  $region14: #{complex_cnn_forward.8} parent=0 // pred_check
    _
  $region15: #{complex_cnn_forward.8} parent=0 // pred_check_branch
    %2050 = sbr.rel (0) target = $region17
  $region16: #{complex_cnn_forward.8} parent=0 // pred_region
    _
  $region17: #{complex_cnn_forward.8} parent=0 // pred_fallthru
    _
  // Predicated region
  $region18: #{complex_cnn_forward.8} parent=0 // pred_check
    _
  $region19: #{complex_cnn_forward.8} parent=0 // pred_check_branch
    %2052 = sbr.rel (0) target = $region21
  $region20: #{complex_cnn_forward.8} parent=0 // pred_region
    _
  $region21: #{complex_cnn_forward.8} parent=0 // pred_fallthru
    _

</llo_original>
